<compile_context>
chip_gen: v6e
topology: v6e:2x2x1
jax: 0.10.0
libtpu: 0.0.40
codegen_flags: <defaults>
</compile_context>

<pallas_src>
import functools

import jax
import jax.numpy as jnp
from jax.experimental import pallas as pl
from jax.experimental.pallas import tpu as pltpu

IN_FEATURES = 2048
HIDDEN = 512
DROP_P = 0.3


def _round_up(x, m):
    return ((x + m - 1) // m) * m


def _classifier_kernel_eval(x_ref, w1_ref, b1_ref, w2_ref, b2_ref, o_ref):
    # x_ref: (TB, 2048) bf16, w1_ref: (2048, 512) bf16, b1_ref: (1, 512) f32
    # w2_ref: (512, Cp) bf16, b2_ref: (1, Cp) f32, o_ref: (TB, Cp) f32
    h = jnp.dot(x_ref[...], w1_ref[...], preferred_element_type=jnp.float32)
    h = jnp.maximum(h + b1_ref[...], 0.0)  # ReLU (Dropout is identity in eval)
    out = jnp.dot(h.astype(jnp.bfloat16), w2_ref[...], preferred_element_type=jnp.float32)
    o_ref[...] = (out + b2_ref[...]).astype(o_ref.dtype)


def _classifier_kernel_train(x_ref, w1_ref, b1_ref, w2_ref, b2_ref, mask_ref, o_ref):
    # Same as eval, plus a pre-scaled dropout multiplier mask (values 0 or 1/(1-p)).
    h = jnp.dot(x_ref[...], w1_ref[...], preferred_element_type=jnp.float32)
    h = jnp.maximum(h + b1_ref[...], 0.0)
    h = h * mask_ref[...]  # single fused VPU multiply per vreg
    out = jnp.dot(h.astype(jnp.bfloat16), w2_ref[...], preferred_element_type=jnp.float32)
    o_ref[...] = (out + b2_ref[...]).astype(o_ref.dtype)


def prepare_classifier_params(w1, b1, w2, b2):
    """One-time weight prep (hoisted out of the per-call path): bf16 cast + class padding."""
    assert w1.shape == (IN_FEATURES, HIDDEN)
    num_classes = w2.shape[1]
    # Pad classes to a multiple of 256: lane-dense output store, full MXU width on v6e/v7x.
    cp = _round_up(max(num_classes, 1), 256)
    w1_bf = w1.astype(jnp.bfloat16)
    w2_p = jnp.zeros((HIDDEN, cp), jnp.bfloat16).at[:, :num_classes].set(w2.astype(jnp.bfloat16))
    b1_p = b1.reshape(1, HIDDEN).astype(jnp.float32)
    b2_p = jnp.zeros((1, cp), jnp.float32).at[:, :num_classes].set(b2.reshape(1, -1).astype(jnp.float32))
    return {"w1": w1_bf, "b1": b1_p, "w2": w2_p, "b2": b2_p,
            "num_classes": num_classes, "cp": cp}


def classifier_head(feats, params, *, training=False, rng=None, tb=None):
    """Pallas: Linear(2048,512) -> ReLU -> Dropout(0.3) -> Linear(512,C), fused per batch tile."""
    B, F = feats.shape
    assert F == IN_FEATURES
    num_classes, cp = params["num_classes"], params["cp"]

    # Batch tile: 128 for real batches (good MXU M-dim, >=2 grid steps for megacore once
    # B > 128); auto-shrink (multiple of 8) for tiny batches to avoid padded compute.
    if tb is None:
        tb = min(128, _round_up(B, 8))
    assert tb % 8 == 0
    Bp = _round_up(B, tb)

    x = feats.astype(jnp.bfloat16)
    if Bp != B:  # only materialize a padded copy when actually needed
        x = jnp.zeros((Bp, F), jnp.bfloat16).at[:B].set(x)

    in_specs = [
        pl.BlockSpec((tb, F), lambda i: (i, 0)),        # x tile
        pl.BlockSpec((F, HIDDEN), lambda i: (0, 0)),    # W1 resident (constant index_map)
        pl.BlockSpec((1, HIDDEN), lambda i: (0, 0)),    # b1
        pl.BlockSpec((HIDDEN, cp), lambda i: (0, 0)),   # W2 resident
        pl.BlockSpec((1, cp), lambda i: (0, 0)),        # b2
    ]
    args = [x, params["w1"], params["b1"], params["w2"], params["b2"]]

    if training:
        if rng is None:
            rng = jax.random.PRNGKey(0)
        # Dropout mask generated with a proper jax.random key (no correlated per-tile seeds),
        # pre-scaled so the kernel does a single multiply: keep -> 1/(1-p), drop -> 0.
        keep = jax.random.bernoulli(rng, 1.0 - DROP_P, (B, HIDDEN))
        mask = keep.astype(jnp.float32) * (1.0 / (1.0 - DROP_P))
        if Bp != B:
            mask = jnp.zeros((Bp, HIDDEN), jnp.float32).at[:B].set(mask)
        in_specs.append(pl.BlockSpec((tb, HIDDEN), lambda i: (i, 0)))
        args.append(mask)
        kernel = _classifier_kernel_train
    else:
        kernel = _classifier_kernel_eval

    flops = 2 * Bp * F * HIDDEN + 2 * Bp * HIDDEN * cp
    bytes_accessed = (Bp * F * 2                 # x (bf16)
                      + F * HIDDEN * 2           # W1 (bf16)
                      + HIDDEN * cp * 2          # W2 (bf16)
                      + (HIDDEN + cp) * 4        # biases (f32)
                      + Bp * cp * 4)             # output (f32)
    if training:
        bytes_accessed += Bp * HIDDEN * 4        # dropout mask (f32)

    call_kwargs = dict(
        out_shape=jax.ShapeDtypeStruct((Bp, cp), jnp.float32),
        grid=(Bp // tb,),
        in_specs=in_specs,
        out_specs=pl.BlockSpec((tb, cp), lambda i: (i, 0)),
        compiler_params=pltpu.CompilerParams(
            dimension_semantics=("parallel",),
            # bf16 weights + tb<=128 stay well under this on every generation
            # (covers v5e's 16 MiB default scoped-VMEM and v7x's 64 MiB physical VMEM).
            vmem_limit_bytes=32 * 1024 * 1024,
        ),
    )
    try:
        fn = pl.pallas_call(
            kernel,
            cost_estimate=pl.CostEstimate(
                flops=flops, transcendentals=0, bytes_accessed=bytes_accessed),
            **call_kwargs,
        )
    except TypeError:  # older jax without cost_estimate kwarg
        fn = pl.pallas_call(kernel, **call_kwargs)

    out_p = fn(*args)
    return out_p[:B, :num_classes]


# TODO(synk): `base_model` is an externally injected backbone (e.g. ResNet-50 with
# fc=Identity) and is not defined by this module; stand-in below just produces a
# deterministic (B, 2048) feature map from NCHW images (global avg pool + fixed proj).
def backbone_stub(x_nchw, proj):
    pooled = jnp.mean(x_nchw, axis=(2, 3))  # (B, C)
    return pooled @ proj                    # (B, 2048)


def init_params(num_classes):
    """Deterministic init mimicking PyTorch nn.Linear default (uniform +/- 1/sqrt(fan_in))."""
    k = jax.random.PRNGKey(0)
    k1, k2, k3, k4, k5 = jax.random.split(k, 5)
    lim1 = 1.0 / jnp.sqrt(IN_FEATURES)
    lim2 = 1.0 / jnp.sqrt(HIDDEN)
    w1 = jax.random.uniform(k1, (IN_FEATURES, HIDDEN), jnp.float32, -lim1, lim1)
    b1 = jax.random.uniform(k2, (HIDDEN,), jnp.float32, -lim1, lim1)
    w2 = jax.random.uniform(k3, (HIDDEN, num_classes), jnp.float32, -lim2, lim2)
    b2 = jax.random.uniform(k4, (num_classes,), jnp.float32, -lim2, lim2)
    proj = jax.random.normal(k5, (3, IN_FEATURES), jnp.float32) * 0.1
    return w1, b1, w2, b2, proj


if __name__ == "__main__":
    num_classes = 10
    B, C, H, W = 2, 3, 16, 16

    key = jax.random.PRNGKey(0)
    x = jax.random.normal(key, (B, C, H, W), jnp.float32)  # NCHW, like PyTorch

    w1, b1, w2, b2, proj = init_params(num_classes)
    params = prepare_classifier_params(w1, b1, w2, b2)  # one-time padded/bf16 weights

    # Forward: base_model(x) -> classifier(features)
    feats = backbone_stub(x, proj)  # (B, 2048) glue
    out_eval = jax.block_until_ready(classifier_head(feats, params, training=False))

    # Training (dropout) path.
    drop_rng = jax.random.PRNGKey(123)
    out_train = jax.block_until_ready(
        classifier_head(feats, params, training=True, rng=drop_rng))

    assert out_eval.shape == (B, num_classes)
    assert out_train.shape == (B, num_classes)

    # Reference with matching bf16-matmul / f32-accumulate semantics.
    bf = jnp.bfloat16
    h_ref = jnp.maximum(
        jnp.dot(feats.astype(bf), w1.astype(bf), preferred_element_type=jnp.float32) + b1, 0.0)
    ref_eval = jnp.dot(h_ref.astype(bf), w2.astype(bf),
                       preferred_element_type=jnp.float32) + b2
    assert jnp.allclose(out_eval, ref_eval, atol=5e-3, rtol=5e-3), "eval mismatch vs reference"

    keep_ref = jax.random.bernoulli(drop_rng, 1.0 - DROP_P, (B, HIDDEN)).astype(jnp.float32)
    h_train_ref = h_ref * (keep_ref * (1.0 / (1.0 - DROP_P)))
    ref_train = jnp.dot(h_train_ref.astype(bf), w2.astype(bf),
                        preferred_element_type=jnp.float32) + b2
    assert jnp.allclose(out_train, ref_train, atol=5e-3, rtol=5e-3), "train mismatch vs reference"

    print("KERNEL_OK")
</pallas_src>

<mosaic_0001>
module attributes {stable_mosaic.version = 11 : i64} {
  func.func @_classifier_kernel_eval(%arg0: i32, %arg1: memref<8x2048xbf16, #tpu.memory_space<vmem>>, %arg2: memref<2048x512xbf16, #tpu.memory_space<vmem>>, %arg3: memref<1x512xf32, #tpu.memory_space<vmem>>, %arg4: memref<512x256xbf16, #tpu.memory_space<vmem>>, %arg5: memref<1x256xf32, #tpu.memory_space<vmem>>, %arg6: memref<8x256xf32, #tpu.memory_space<vmem>>) attributes {dimension_semantics = [#tpu.dimension_semantics<parallel>], iteration_bounds = array<i64: 1>, scalar_prefetch = 0 : i64, scratch_operands = 0 : i64, tpu.core_type = #tpu.core_type<tc>, window_params = [{transform_indices = @transform_0, window_bounds = array<i64: 8, 2048>}, {pipeline_mode = #tpu.pipeline_mode<synchronous>, transform_indices = @transform_1, window_bounds = array<i64: 2048, 512>}, {pipeline_mode = #tpu.pipeline_mode<synchronous>, transform_indices = @transform_2, window_bounds = array<i64: 1, 512>}, {pipeline_mode = #tpu.pipeline_mode<synchronous>, transform_indices = @transform_3, window_bounds = array<i64: 512, 256>}, {pipeline_mode = #tpu.pipeline_mode<synchronous>, transform_indices = @transform_4, window_bounds = array<i64: 1, 256>}, {transform_indices = @transform_5, window_bounds = array<i64: 8, 256>}]} {
    %c0 = arith.constant 0 : index
    %c0_0 = arith.constant 0 : index
    %0 = vector.load %arg1[%c0, %c0_0] : memref<8x2048xbf16, #tpu.memory_space<vmem>>, vector<8x2048xbf16>
    %c0_1 = arith.constant 0 : index
    %c0_2 = arith.constant 0 : index
    %1 = vector.load %arg2[%c0_1, %c0_2] : memref<2048x512xbf16, #tpu.memory_space<vmem>>, vector<2048x512xbf16>
    %cst = arith.constant dense<0.000000e+00> : vector<8x512xf32>
    %2 = tpu.matmul %0, %1, %cst {dimension_numbers = #tpu.dot_dimension_numbers<[1], [0], [0], [1], [0, 0, 1, 1], [], []>} : vector<8x2048xbf16>, vector<2048x512xbf16>, vector<8x512xf32> -> vector<8x512xf32>
    %c0_3 = arith.constant 0 : index
    %c0_4 = arith.constant 0 : index
    %3 = vector.load %arg3[%c0_3, %c0_4] : memref<1x512xf32, #tpu.memory_space<vmem>>, vector<1x512xf32>
    %4 = vector.broadcast %3 : vector<1x512xf32> to vector<8x512xf32>
    %5 = arith.addf %2, %4 : vector<8x512xf32>
    %cst_5 = arith.constant 0.000000e+00 : f32
    %6 = vector.broadcast %cst_5 : f32 to vector<8x512xf32>
    %7 = arith.maximumf %5, %6 : vector<8x512xf32>
    %8 = arith.truncf %7 : vector<8x512xf32> to vector<8x512xbf16>
    %c0_6 = arith.constant 0 : index
    %c0_7 = arith.constant 0 : index
    %9 = vector.load %arg4[%c0_6, %c0_7] : memref<512x256xbf16, #tpu.memory_space<vmem>>, vector<512x256xbf16>
    %cst_8 = arith.constant dense<0.000000e+00> : vector<8x256xf32>
    %10 = tpu.matmul %8, %9, %cst_8 {dimension_numbers = #tpu.dot_dimension_numbers<[1], [0], [0], [1], [0, 0, 1, 1], [], []>} : vector<8x512xbf16>, vector<512x256xbf16>, vector<8x256xf32> -> vector<8x256xf32>
    %c0_9 = arith.constant 0 : index
    %c0_10 = arith.constant 0 : index
    %11 = vector.load %arg5[%c0_9, %c0_10] : memref<1x256xf32, #tpu.memory_space<vmem>>, vector<1x256xf32>
    %12 = vector.broadcast %11 : vector<1x256xf32> to vector<8x256xf32>
    %13 = arith.addf %10, %12 : vector<8x256xf32>
    %c0_11 = arith.constant 0 : index
    %c0_12 = arith.constant 0 : index
    %14 = vector.load %arg6[%c0_11, %c0_12] : memref<8x256xf32, #tpu.memory_space<vmem>>, vector<8x256xf32>
    tpu.vector_store %arg6[%c0_11, %c0_12], %13 {strides = array<i32>} : memref<8x256xf32, #tpu.memory_space<vmem>>, vector<8x256xf32>,
    return
  }
  func.func @transform_0(%arg0: i32) -> (i32, i32) {
    %c0_i32 = arith.constant 0 : i32
    %c0_i32_0 = arith.constant 0 : i32
    return %arg0, %c0_i32 : i32, i32
  }
  func.func @transform_1(%arg0: i32) -> (i32, i32) {
    %c0_i32 = arith.constant 0 : i32
    %c0_i32_0 = arith.constant 0 : i32
    %c0_i32_1 = arith.constant 0 : i32
    return %c0_i32, %c0_i32_0 : i32, i32
  }
  func.func @transform_2(%arg0: i32) -> (i32, i32) {
    %c0_i32 = arith.constant 0 : i32
    %c0_i32_0 = arith.constant 0 : i32
    %c0_i32_1 = arith.constant 0 : i32
    return %c0_i32, %c0_i32_0 : i32, i32
  }
  func.func @transform_3(%arg0: i32) -> (i32, i32) {
    %c0_i32 = arith.constant 0 : i32
    %c0_i32_0 = arith.constant 0 : i32
    %c0_i32_1 = arith.constant 0 : i32
    return %c0_i32, %c0_i32_0 : i32, i32
  }
  func.func @transform_4(%arg0: i32) -> (i32, i32) {
    %c0_i32 = arith.constant 0 : i32
    %c0_i32_0 = arith.constant 0 : i32
    %c0_i32_1 = arith.constant 0 : i32
    return %c0_i32, %c0_i32_0 : i32, i32
  }
  func.func @transform_5(%arg0: i32) -> (i32, i32) {
    %c0_i32 = arith.constant 0 : i32
    %c0_i32_0 = arith.constant 0 : i32
    return %arg0, %c0_i32 : i32, i32
  }
}

</mosaic_0001>

<llo_original>
// kernel: tpu_custom_call.1
$region0: #{tpu_custom_call.1}
  #allocation0 [shape = 'u32[]', space=smem, size = 0x4, offset = 0x4, fixed_abs, tag = 'smem constant byte address 0x4 - core index']
  #allocation1 [shape = 'u32[144,128]{1,0:T(1,128)}', space=vmem, size = 0x12000, scoped, tag = 'internal scratch']
  %s0 = inlined_call_operand.hbm [shape: bf16[8,2048], index: 0, kind: input, shape index: {}]
  %s1 = inlined_call_operand.hbm [shape: bf16[2048,512], index: 1, kind: input, shape index: {}]
  %s2 = inlined_call_operand.hbm [shape: f32[1,512], index: 2, kind: input, shape index: {}]
  %s3 = inlined_call_operand.hbm [shape: bf16[512,256], index: 3, kind: input, shape index: {}]
  %s4 = inlined_call_operand.hbm [shape: f32[1,256], index: 4, kind: input, shape index: {}]
  %s5 = inlined_call_operand.hbm [shape: f32[8,256], index: 5, kind: output, shape index: {}]
  %s6 = sld [smem:[#allocation0]]
  $region50: #{tpu_custom_call.1} parent=0
    _
  %s8 = ssub.s32 1, %s6
  %s9 = scalar_select 0, %s8, %s6
  $region1: #{tpu_custom_call.1} parent=0
    #allocation2 [shape = 'u8[32768]{0}', space=vmem, size = 0x8000, scoped, tag = 'input window, operand 0, single buffered']
    #allocation3 [shape = 's32[1]{0}', space=sflag, size = 0x4, scoped, tag = 'scoped memory for tpu_custom_call.1']
    #allocation4 [shape = 's32[1]{0}', space=sflag, size = 0x4, scoped, tag = 'scoped memory for tpu_custom_call.1']
    #allocation5 [shape = 'u8[2097152]{0}', space=vmem, size = 0x200000, scoped, tag = 'input window, operand 1, single buffered']
    #allocation6 [shape = 's32[1]{0}', space=sflag, size = 0x4, scoped, tag = 'scoped memory for tpu_custom_call.1']
    #allocation7 [shape = 'u8[2048]{0}', space=vmem, size = 0x800, scoped, tag = 'input window, operand 2, single buffered']
    #allocation8 [shape = 'u8[262144]{0}', space=vmem, size = 0x40000, scoped, tag = 'input window, operand 3, single buffered']
    #allocation9 [shape = 's32[1]{0}', space=sflag, size = 0x4, scoped, tag = 'scoped memory for tpu_custom_call.1']
    #allocation10 [shape = 'u8[1024]{0}', space=vmem, size = 0x400, scoped, tag = 'input window, operand 4, single buffered']
    #allocation11 [shape = 'u8[8192]{0}', space=vmem, size = 0x2000, scoped, tag = 'output window, operand 0, single buffered']
    %10 = vsyncpa [#allocation3], 0
    %11 = vsyncpa [#allocation6], 0
    %12 = vsyncpa [#allocation9], 0
    %13 = vsyncpa [#allocation4], 0
    // Predicated region
    $region2: #{tpu_custom_call.1} parent=1 // pred_check
      _
    $region3: #{tpu_custom_call.1} parent=1 // pred_check_branch
      %15 = sbr.rel (0) target = $region5
    $region4: #{tpu_custom_call.1} parent=1 // pred_region
      %s17 = ssub.s32 1024, 1024
      %18 = vsyncadd [#allocation3], %s17
      %s20 = sshll.u32 [#allocation2], 4
      %s21 = int_to_ptr.vmem [resolvable:$true] %s20
      %23 = dma.hbm_to_vmem [thread:$0]  %s0, 1024, %s21, [#allocation3]
    $region5: #{tpu_custom_call.1} parent=1 // pred_fallthru
      _
    // Predicated region
    $region6: #{tpu_custom_call.1} parent=1 // pred_check
      _
    $region7: #{tpu_custom_call.1} parent=1 // pred_check_branch
      %25 = sbr.rel (0) target = $region9
    $region8: #{tpu_custom_call.1} parent=1 // pred_region
      %s27 = ssub.s32 65536, 65536
      %28 = vsyncadd [#allocation6], %s27
      %s29 = sshll.u32 [#allocation5], 4
      %s30 = int_to_ptr.vmem [resolvable:$true] %s29
      %35 = dma.hbm_to_vmem [thread:$0]  %s1, 65536, %s30, [#allocation6], 256, 256, 16
    $region9: #{tpu_custom_call.1} parent=1 // pred_fallthru
      _
    // Predicated region
    $region10: #{tpu_custom_call.1} parent=1 // pred_check
      _
    $region11: #{tpu_custom_call.1} parent=1 // pred_check_branch
      %37 = sbr.rel (0) target = $region13
    $region12: #{tpu_custom_call.1} parent=1 // pred_region
      %s39 = ssub.s32 64, 64
      %40 = vsyncadd [#allocation6], %s39
      %s42 = sshll.u32 [#allocation7], 4
      %s43 = int_to_ptr.vmem [resolvable:$true] %s42
      %45 = dma.hbm_to_vmem [thread:$0]  %s2, 64, %s43, [#allocation6]
    $region13: #{tpu_custom_call.1} parent=1 // pred_fallthru
      _
    // Predicated region
    $region14: #{tpu_custom_call.1} parent=1 // pred_check
      _
    $region15: #{tpu_custom_call.1} parent=1 // pred_check_branch
      %47 = sbr.rel (0) target = $region17
    $region16: #{tpu_custom_call.1} parent=1 // pred_region
      %s49 = ssub.s32 8192, 8192
      %50 = vsyncadd [#allocation9], %s49
      %s51 = sshll.u32 [#allocation8], 4
      %s52 = int_to_ptr.vmem [resolvable:$true] %s51
      %57 = dma.hbm_to_vmem [thread:$0]  %s3, 8192, %s52, [#allocation9], 128, 128, 8
    $region17: #{tpu_custom_call.1} parent=1 // pred_fallthru
      _
    // Predicated region
    $region18: #{tpu_custom_call.1} parent=1 // pred_check
      _
    $region19: #{tpu_custom_call.1} parent=1 // pred_check_branch
      %59 = sbr.rel (0) target = $region21
    $region20: #{tpu_custom_call.1} parent=1 // pred_region
      %s61 = ssub.s32 32, 32
      %62 = vsyncadd [#allocation9], %s61
      %s64 = sshll.u32 [#allocation10], 4
      %s65 = int_to_ptr.vmem [resolvable:$true] %s64
      %67 = dma.hbm_to_vmem [thread:$0]  %s4, 32, %s65, [#allocation9]
    $region21: #{tpu_custom_call.1} parent=1 // pred_fallthru
      _
    // Predicated region
    $region22: #{tpu_custom_call.1} parent=1 // pred_check
      _
    $region23: #{tpu_custom_call.1} parent=1 // pred_check_branch
      %69 = sbr.rel (0) target = $region25
    $region24: #{tpu_custom_call.1} parent=1 // pred_region
      %70 = dma.done [#allocation3], 1024
    $region25: #{tpu_custom_call.1} parent=1 // pred_fallthru
      _
    // Predicated region
    $region26: #{tpu_custom_call.1} parent=1 // pred_check
      _
    $region27: #{tpu_custom_call.1} parent=1 // pred_check_branch
      %72 = sbr.rel (0) target = $region29
    $region28: #{tpu_custom_call.1} parent=1 // pred_region
      %73 = dma.done [#allocation6], 65536
    $region29: #{tpu_custom_call.1} parent=1 // pred_fallthru
      _
    // Predicated region
    $region30: #{tpu_custom_call.1} parent=1 // pred_check
      _
    $region31: #{tpu_custom_call.1} parent=1 // pred_check_branch
      %75 = sbr.rel (0) target = $region33
    $region32: #{tpu_custom_call.1} parent=1 // pred_region
      %76 = dma.done [#allocation6], 64
    $region33: #{tpu_custom_call.1} parent=1 // pred_fallthru
      _
    // Predicated region
    $region34: #{tpu_custom_call.1} parent=1 // pred_check
      _
    $region35: #{tpu_custom_call.1} parent=1 // pred_check_branch
      %78 = sbr.rel (0) target = $region37
    $region36: #{tpu_custom_call.1} parent=1 // pred_region
      %79 = dma.done [#allocation9], 8192
    $region37: #{tpu_custom_call.1} parent=1 // pred_fallthru
      _
    // Predicated region
    $region38: #{tpu_custom_call.1} parent=1 // pred_check
      _
    $region39: #{tpu_custom_call.1} parent=1 // pred_check_branch
      %81 = sbr.rel (0) target = $region41
    $region40: #{tpu_custom_call.1} parent=1 // pred_region
      %82 = dma.done [#allocation9], 32
    $region41: #{tpu_custom_call.1} parent=1 // pred_fallthru
      _
    %v83 = vld [vmem:[#allocation2] sm:$0xff]
    %v84 = vld [vmem:[#allocation2 + $0x8] sm:$0xff]
    %v85 = vld [vmem:[#allocation2 + $0x10] sm:$0xff]
    %v86 = vld [vmem:[#allocation2 + $0x18] sm:$0xff]
    %v87 = vld [vmem:[#allocation2 + $0x20] sm:$0xff]
    %v88 = vld [vmem:[#allocation2 + $0x28] sm:$0xff]
    %v89 = vld [vmem:[#allocation2 + $0x30] sm:$0xff]
    %v90 = vld [vmem:[#allocation2 + $0x38] sm:$0xff]
    %v91 = vld [vmem:[#allocation5] sm:$0xff]
    %v92 = vld [vmem:[#allocation5 + $0x8] sm:$0xff]
    %v93 = vld [vmem:[#allocation5 + $0x10] sm:$0xff]
    %v94 = vld [vmem:[#allocation5 + $0x18] sm:$0xff]
    %v95 = vld [vmem:[#allocation5 + $0x20] sm:$0xff]
    %v96 = vld [vmem:[#allocation5 + $0x28] sm:$0xff]
    %v97 = vld [vmem:[#allocation5 + $0x30] sm:$0xff]
    %v98 = vld [vmem:[#allocation5 + $0x38] sm:$0xff]
    %v99 = vld [vmem:[#allocation5 + $0x40] sm:$0xff]
    %v100 = vld [vmem:[#allocation5 + $0x48] sm:$0xff]
    %v101 = vld [vmem:[#allocation5 + $0x50] sm:$0xff]
    %v102 = vld [vmem:[#allocation5 + $0x58] sm:$0xff]
    %v103 = vld [vmem:[#allocation5 + $0x60] sm:$0xff]
    %v104 = vld [vmem:[#allocation5 + $0x68] sm:$0xff]
    %v105 = vld [vmem:[#allocation5 + $0x70] sm:$0xff]
    %v106 = vld [vmem:[#allocation5 + $0x78] sm:$0xff]
    %v107 = vld [vmem:[#allocation5 + $0x80] sm:$0xff]
    %v108 = vld [vmem:[#allocation5 + $0x88] sm:$0xff]
    %v109 = vld [vmem:[#allocation5 + $0x90] sm:$0xff]
    %v110 = vld [vmem:[#allocation5 + $0x98] sm:$0xff]
    %v111 = vld [vmem:[#allocation5 + $0xa0] sm:$0xff]
    %v112 = vld [vmem:[#allocation5 + $0xa8] sm:$0xff]
    %v113 = vld [vmem:[#allocation5 + $0xb0] sm:$0xff]
    %v114 = vld [vmem:[#allocation5 + $0xb8] sm:$0xff]
    %v115 = vld [vmem:[#allocation5 + $0xc0] sm:$0xff]
    %v116 = vld [vmem:[#allocation5 + $0xc8] sm:$0xff]
    %v117 = vld [vmem:[#allocation5 + $0xd0] sm:$0xff]
    %v118 = vld [vmem:[#allocation5 + $0xd8] sm:$0xff]
    %v119 = vld [vmem:[#allocation5 + $0xe0] sm:$0xff]
    %v120 = vld [vmem:[#allocation5 + $0xe8] sm:$0xff]
    %v121 = vld [vmem:[#allocation5 + $0xf0] sm:$0xff]
    %v122 = vld [vmem:[#allocation5 + $0xf8] sm:$0xff]
    %v123 = vld [vmem:[#allocation5 + $0x100] sm:$0xff]
    %v124 = vld [vmem:[#allocation5 + $0x108] sm:$0xff]
    %v125 = vld [vmem:[#allocation5 + $0x110] sm:$0xff]
    %v126 = vld [vmem:[#allocation5 + $0x118] sm:$0xff]
    %v127 = vld [vmem:[#allocation5 + $0x120] sm:$0xff]
    %v128 = vld [vmem:[#allocation5 + $0x128] sm:$0xff]
    %v129 = vld [vmem:[#allocation5 + $0x130] sm:$0xff]
    %v130 = vld [vmem:[#allocation5 + $0x138] sm:$0xff]
    %v131 = vld [vmem:[#allocation5 + $0x140] sm:$0xff]
    %v132 = vld [vmem:[#allocation5 + $0x148] sm:$0xff]
    %v133 = vld [vmem:[#allocation5 + $0x150] sm:$0xff]
    %v134 = vld [vmem:[#allocation5 + $0x158] sm:$0xff]
    %v135 = vld [vmem:[#allocation5 + $0x160] sm:$0xff]
    %v136 = vld [vmem:[#allocation5 + $0x168] sm:$0xff]
    %v137 = vld [vmem:[#allocation5 + $0x170] sm:$0xff]
    %v138 = vld [vmem:[#allocation5 + $0x178] sm:$0xff]
    %v139 = vld [vmem:[#allocation5 + $0x180] sm:$0xff]
    %v140 = vld [vmem:[#allocation5 + $0x188] sm:$0xff]
    %v141 = vld [vmem:[#allocation5 + $0x190] sm:$0xff]
    %v142 = vld [vmem:[#allocation5 + $0x198] sm:$0xff]
    %v143 = vld [vmem:[#allocation5 + $0x1a0] sm:$0xff]
    %v144 = vld [vmem:[#allocation5 + $0x1a8] sm:$0xff]
    %v145 = vld [vmem:[#allocation5 + $0x1b0] sm:$0xff]
    %v146 = vld [vmem:[#allocation5 + $0x1b8] sm:$0xff]
    %v147 = vld [vmem:[#allocation5 + $0x1c0] sm:$0xff]
    %v148 = vld [vmem:[#allocation5 + $0x1c8] sm:$0xff]
    %v149 = vld [vmem:[#allocation5 + $0x1d0] sm:$0xff]
    %v150 = vld [vmem:[#allocation5 + $0x1d8] sm:$0xff]
    %v151 = vld [vmem:[#allocation5 + $0x1e0] sm:$0xff]
    %v152 = vld [vmem:[#allocation5 + $0x1e8] sm:$0xff]
    %v153 = vld [vmem:[#allocation5 + $0x1f0] sm:$0xff]
    %v154 = vld [vmem:[#allocation5 + $0x1f8] sm:$0xff]
    %v155 = vld [vmem:[#allocation5 + $0x200] sm:$0xff]
    %v156 = vld [vmem:[#allocation5 + $0x208] sm:$0xff]
    %v157 = vld [vmem:[#allocation5 + $0x210] sm:$0xff]
    %v158 = vld [vmem:[#allocation5 + $0x218] sm:$0xff]
    %v159 = vld [vmem:[#allocation5 + $0x220] sm:$0xff]
    %v160 = vld [vmem:[#allocation5 + $0x228] sm:$0xff]
    %v161 = vld [vmem:[#allocation5 + $0x230] sm:$0xff]
    %v162 = vld [vmem:[#allocation5 + $0x238] sm:$0xff]
    %v163 = vld [vmem:[#allocation5 + $0x240] sm:$0xff]
    %v164 = vld [vmem:[#allocation5 + $0x248] sm:$0xff]
    %v165 = vld [vmem:[#allocation5 + $0x250] sm:$0xff]
    %v166 = vld [vmem:[#allocation5 + $0x258] sm:$0xff]
    %v167 = vld [vmem:[#allocation5 + $0x260] sm:$0xff]
    %v168 = vld [vmem:[#allocation5 + $0x268] sm:$0xff]
    %v169 = vld [vmem:[#allocation5 + $0x270] sm:$0xff]
    %v170 = vld [vmem:[#allocation5 + $0x278] sm:$0xff]
    %v171 = vld [vmem:[#allocation5 + $0x280] sm:$0xff]
    %v172 = vld [vmem:[#allocation5 + $0x288] sm:$0xff]
    %v173 = vld [vmem:[#allocation5 + $0x290] sm:$0xff]
    %v174 = vld [vmem:[#allocation5 + $0x298] sm:$0xff]
    %v175 = vld [vmem:[#allocation5 + $0x2a0] sm:$0xff]
    %v176 = vld [vmem:[#allocation5 + $0x2a8] sm:$0xff]
    %v177 = vld [vmem:[#allocation5 + $0x2b0] sm:$0xff]
    %v178 = vld [vmem:[#allocation5 + $0x2b8] sm:$0xff]
    %v179 = vld [vmem:[#allocation5 + $0x2c0] sm:$0xff]
    %v180 = vld [vmem:[#allocation5 + $0x2c8] sm:$0xff]
    %v181 = vld [vmem:[#allocation5 + $0x2d0] sm:$0xff]
    %v182 = vld [vmem:[#allocation5 + $0x2d8] sm:$0xff]
    %v183 = vld [vmem:[#allocation5 + $0x2e0] sm:$0xff]
    %v184 = vld [vmem:[#allocation5 + $0x2e8] sm:$0xff]
    %v185 = vld [vmem:[#allocation5 + $0x2f0] sm:$0xff]
    %v186 = vld [vmem:[#allocation5 + $0x2f8] sm:$0xff]
    %v187 = vld [vmem:[#allocation5 + $0x300] sm:$0xff]
    %v188 = vld [vmem:[#allocation5 + $0x308] sm:$0xff]
    %v189 = vld [vmem:[#allocation5 + $0x310] sm:$0xff]
    %v190 = vld [vmem:[#allocation5 + $0x318] sm:$0xff]
    %v191 = vld [vmem:[#allocation5 + $0x320] sm:$0xff]
    %v192 = vld [vmem:[#allocation5 + $0x328] sm:$0xff]
    %v193 = vld [vmem:[#allocation5 + $0x330] sm:$0xff]
    %v194 = vld [vmem:[#allocation5 + $0x338] sm:$0xff]
    %v195 = vld [vmem:[#allocation5 + $0x340] sm:$0xff]
    %v196 = vld [vmem:[#allocation5 + $0x348] sm:$0xff]
    %v197 = vld [vmem:[#allocation5 + $0x350] sm:$0xff]
    %v198 = vld [vmem:[#allocation5 + $0x358] sm:$0xff]
    %v199 = vld [vmem:[#allocation5 + $0x360] sm:$0xff]
    %v200 = vld [vmem:[#allocation5 + $0x368] sm:$0xff]
    %v201 = vld [vmem:[#allocation5 + $0x370] sm:$0xff]
    %v202 = vld [vmem:[#allocation5 + $0x378] sm:$0xff]
    %v203 = vld [vmem:[#allocation5 + $0x380] sm:$0xff]
    %v204 = vld [vmem:[#allocation5 + $0x388] sm:$0xff]
    %v205 = vld [vmem:[#allocation5 + $0x390] sm:$0xff]
    %v206 = vld [vmem:[#allocation5 + $0x398] sm:$0xff]
    %v207 = vld [vmem:[#allocation5 + $0x3a0] sm:$0xff]
    %v208 = vld [vmem:[#allocation5 + $0x3a8] sm:$0xff]
    %v209 = vld [vmem:[#allocation5 + $0x3b0] sm:$0xff]
    %v210 = vld [vmem:[#allocation5 + $0x3b8] sm:$0xff]
    %v211 = vld [vmem:[#allocation5 + $0x3c0] sm:$0xff]
    %v212 = vld [vmem:[#allocation5 + $0x3c8] sm:$0xff]
    %v213 = vld [vmem:[#allocation5 + $0x3d0] sm:$0xff]
    %v214 = vld [vmem:[#allocation5 + $0x3d8] sm:$0xff]
    %v215 = vld [vmem:[#allocation5 + $0x3e0] sm:$0xff]
    %v216 = vld [vmem:[#allocation5 + $0x3e8] sm:$0xff]
    %v217 = vld [vmem:[#allocation5 + $0x3f0] sm:$0xff]
    %v218 = vld [vmem:[#allocation5 + $0x3f8] sm:$0xff]
    %v219 = vld [vmem:[#allocation5 + $0x400] sm:$0xff]
    %v220 = vld [vmem:[#allocation5 + $0x408] sm:$0xff]
    %v221 = vld [vmem:[#allocation5 + $0x410] sm:$0xff]
    %v222 = vld [vmem:[#allocation5 + $0x418] sm:$0xff]
    %v223 = vld [vmem:[#allocation5 + $0x420] sm:$0xff]
    %v224 = vld [vmem:[#allocation5 + $0x428] sm:$0xff]
    %v225 = vld [vmem:[#allocation5 + $0x430] sm:$0xff]
    %v226 = vld [vmem:[#allocation5 + $0x438] sm:$0xff]
    %v227 = vld [vmem:[#allocation5 + $0x440] sm:$0xff]
    %v228 = vld [vmem:[#allocation5 + $0x448] sm:$0xff]
    %v229 = vld [vmem:[#allocation5 + $0x450] sm:$0xff]
    %v230 = vld [vmem:[#allocation5 + $0x458] sm:$0xff]
    %v231 = vld [vmem:[#allocation5 + $0x460] sm:$0xff]
    %v232 = vld [vmem:[#allocation5 + $0x468] sm:$0xff]
    %v233 = vld [vmem:[#allocation5 + $0x470] sm:$0xff]
    %v234 = vld [vmem:[#allocation5 + $0x478] sm:$0xff]
    %v235 = vld [vmem:[#allocation5 + $0x480] sm:$0xff]
    %v236 = vld [vmem:[#allocation5 + $0x488] sm:$0xff]
    %v237 = vld [vmem:[#allocation5 + $0x490] sm:$0xff]
    %v238 = vld [vmem:[#allocation5 + $0x498] sm:$0xff]
    %v239 = vld [vmem:[#allocation5 + $0x4a0] sm:$0xff]
    %v240 = vld [vmem:[#allocation5 + $0x4a8] sm:$0xff]
    %v241 = vld [vmem:[#allocation5 + $0x4b0] sm:$0xff]
    %v242 = vld [vmem:[#allocation5 + $0x4b8] sm:$0xff]
    %v243 = vld [vmem:[#allocation5 + $0x4c0] sm:$0xff]
    %v244 = vld [vmem:[#allocation5 + $0x4c8] sm:$0xff]
    %v245 = vld [vmem:[#allocation5 + $0x4d0] sm:$0xff]
    %v246 = vld [vmem:[#allocation5 + $0x4d8] sm:$0xff]
    %v247 = vld [vmem:[#allocation5 + $0x4e0] sm:$0xff]
    %v248 = vld [vmem:[#allocation5 + $0x4e8] sm:$0xff]
    %v249 = vld [vmem:[#allocation5 + $0x4f0] sm:$0xff]
    %v250 = vld [vmem:[#allocation5 + $0x4f8] sm:$0xff]
    %v251 = vld [vmem:[#allocation5 + $0x500] sm:$0xff]
    %v252 = vld [vmem:[#allocation5 + $0x508] sm:$0xff]
    %v253 = vld [vmem:[#allocation5 + $0x510] sm:$0xff]
    %v254 = vld [vmem:[#allocation5 + $0x518] sm:$0xff]
    %v255 = vld [vmem:[#allocation5 + $0x520] sm:$0xff]
    %v256 = vld [vmem:[#allocation5 + $0x528] sm:$0xff]
    %v257 = vld [vmem:[#allocation5 + $0x530] sm:$0xff]
    %v258 = vld [vmem:[#allocation5 + $0x538] sm:$0xff]
    %v259 = vld [vmem:[#allocation5 + $0x540] sm:$0xff]
    %v260 = vld [vmem:[#allocation5 + $0x548] sm:$0xff]
    %v261 = vld [vmem:[#allocation5 + $0x550] sm:$0xff]
    %v262 = vld [vmem:[#allocation5 + $0x558] sm:$0xff]
    %v263 = vld [vmem:[#allocation5 + $0x560] sm:$0xff]
    %v264 = vld [vmem:[#allocation5 + $0x568] sm:$0xff]
    %v265 = vld [vmem:[#allocation5 + $0x570] sm:$0xff]
    %v266 = vld [vmem:[#allocation5 + $0x578] sm:$0xff]
    %v267 = vld [vmem:[#allocation5 + $0x580] sm:$0xff]
    %v268 = vld [vmem:[#allocation5 + $0x588] sm:$0xff]
    %v269 = vld [vmem:[#allocation5 + $0x590] sm:$0xff]
    %v270 = vld [vmem:[#allocation5 + $0x598] sm:$0xff]
    %v271 = vld [vmem:[#allocation5 + $0x5a0] sm:$0xff]
    %v272 = vld [vmem:[#allocation5 + $0x5a8] sm:$0xff]
    %v273 = vld [vmem:[#allocation5 + $0x5b0] sm:$0xff]
    %v274 = vld [vmem:[#allocation5 + $0x5b8] sm:$0xff]
    %v275 = vld [vmem:[#allocation5 + $0x5c0] sm:$0xff]
    %v276 = vld [vmem:[#allocation5 + $0x5c8] sm:$0xff]
    %v277 = vld [vmem:[#allocation5 + $0x5d0] sm:$0xff]
    %v278 = vld [vmem:[#allocation5 + $0x5d8] sm:$0xff]
    %v279 = vld [vmem:[#allocation5 + $0x5e0] sm:$0xff]
    %v280 = vld [vmem:[#allocation5 + $0x5e8] sm:$0xff]
    %v281 = vld [vmem:[#allocation5 + $0x5f0] sm:$0xff]
    %v282 = vld [vmem:[#allocation5 + $0x5f8] sm:$0xff]
    %v283 = vld [vmem:[#allocation5 + $0x600] sm:$0xff]
    %v284 = vld [vmem:[#allocation5 + $0x608] sm:$0xff]
    %v285 = vld [vmem:[#allocation5 + $0x610] sm:$0xff]
    %v286 = vld [vmem:[#allocation5 + $0x618] sm:$0xff]
    %v287 = vld [vmem:[#allocation5 + $0x620] sm:$0xff]
    %v288 = vld [vmem:[#allocation5 + $0x628] sm:$0xff]
    %v289 = vld [vmem:[#allocation5 + $0x630] sm:$0xff]
    %v290 = vld [vmem:[#allocation5 + $0x638] sm:$0xff]
    %v291 = vld [vmem:[#allocation5 + $0x640] sm:$0xff]
    %v292 = vld [vmem:[#allocation5 + $0x648] sm:$0xff]
    %v293 = vld [vmem:[#allocation5 + $0x650] sm:$0xff]
    %v294 = vld [vmem:[#allocation5 + $0x658] sm:$0xff]
    %v295 = vld [vmem:[#allocation5 + $0x660] sm:$0xff]
    %v296 = vld [vmem:[#allocation5 + $0x668] sm:$0xff]
    %v297 = vld [vmem:[#allocation5 + $0x670] sm:$0xff]
    %v298 = vld [vmem:[#allocation5 + $0x678] sm:$0xff]
    %v299 = vld [vmem:[#allocation5 + $0x680] sm:$0xff]
    %v300 = vld [vmem:[#allocation5 + $0x688] sm:$0xff]
    %v301 = vld [vmem:[#allocation5 + $0x690] sm:$0xff]
    %v302 = vld [vmem:[#allocation5 + $0x698] sm:$0xff]
    %v303 = vld [vmem:[#allocation5 + $0x6a0] sm:$0xff]
    %v304 = vld [vmem:[#allocation5 + $0x6a8] sm:$0xff]
    %v305 = vld [vmem:[#allocation5 + $0x6b0] sm:$0xff]
    %v306 = vld [vmem:[#allocation5 + $0x6b8] sm:$0xff]
    %v307 = vld [vmem:[#allocation5 + $0x6c0] sm:$0xff]
    %v308 = vld [vmem:[#allocation5 + $0x6c8] sm:$0xff]
    %v309 = vld [vmem:[#allocation5 + $0x6d0] sm:$0xff]
    %v310 = vld [vmem:[#allocation5 + $0x6d8] sm:$0xff]
    %v311 = vld [vmem:[#allocation5 + $0x6e0] sm:$0xff]
    %v312 = vld [vmem:[#allocation5 + $0x6e8] sm:$0xff]
    %v313 = vld [vmem:[#allocation5 + $0x6f0] sm:$0xff]
    %v314 = vld [vmem:[#allocation5 + $0x6f8] sm:$0xff]
    %v315 = vld [vmem:[#allocation5 + $0x700] sm:$0xff]
    %v316 = vld [vmem:[#allocation5 + $0x708] sm:$0xff]
    %v317 = vld [vmem:[#allocation5 + $0x710] sm:$0xff]
    %v318 = vld [vmem:[#allocation5 + $0x718] sm:$0xff]
    %v319 = vld [vmem:[#allocation5 + $0x720] sm:$0xff]
    %v320 = vld [vmem:[#allocation5 + $0x728] sm:$0xff]
    %v321 = vld [vmem:[#allocation5 + $0x730] sm:$0xff]
    %v322 = vld [vmem:[#allocation5 + $0x738] sm:$0xff]
    %v323 = vld [vmem:[#allocation5 + $0x740] sm:$0xff]
    %v324 = vld [vmem:[#allocation5 + $0x748] sm:$0xff]
    %v325 = vld [vmem:[#allocation5 + $0x750] sm:$0xff]
    %v326 = vld [vmem:[#allocation5 + $0x758] sm:$0xff]
    %v327 = vld [vmem:[#allocation5 + $0x760] sm:$0xff]
    %v328 = vld [vmem:[#allocation5 + $0x768] sm:$0xff]
    %v329 = vld [vmem:[#allocation5 + $0x770] sm:$0xff]
    %v330 = vld [vmem:[#allocation5 + $0x778] sm:$0xff]
    %v331 = vld [vmem:[#allocation5 + $0x780] sm:$0xff]
    %v332 = vld [vmem:[#allocation5 + $0x788] sm:$0xff]
    %v333 = vld [vmem:[#allocation5 + $0x790] sm:$0xff]
    %v334 = vld [vmem:[#allocation5 + $0x798] sm:$0xff]
    %v335 = vld [vmem:[#allocation5 + $0x7a0] sm:$0xff]
    %v336 = vld [vmem:[#allocation5 + $0x7a8] sm:$0xff]
    %v337 = vld [vmem:[#allocation5 + $0x7b0] sm:$0xff]
    %v338 = vld [vmem:[#allocation5 + $0x7b8] sm:$0xff]
    %v339 = vld [vmem:[#allocation5 + $0x7c0] sm:$0xff]
    %v340 = vld [vmem:[#allocation5 + $0x7c8] sm:$0xff]
    %v341 = vld [vmem:[#allocation5 + $0x7d0] sm:$0xff]
    %v342 = vld [vmem:[#allocation5 + $0x7d8] sm:$0xff]
    %v343 = vld [vmem:[#allocation5 + $0x7e0] sm:$0xff]
    %v344 = vld [vmem:[#allocation5 + $0x7e8] sm:$0xff]
    %v345 = vld [vmem:[#allocation5 + $0x7f0] sm:$0xff]
    %v346 = vld [vmem:[#allocation5 + $0x7f8] sm:$0xff]
    %v347 = vld [vmem:[#allocation5 + $0x800] sm:$0xff]
    %v348 = vld [vmem:[#allocation5 + $0x808] sm:$0xff]
    %v349 = vld [vmem:[#allocation5 + $0x810] sm:$0xff]
    %v350 = vld [vmem:[#allocation5 + $0x818] sm:$0xff]
    %v351 = vld [vmem:[#allocation5 + $0x820] sm:$0xff]
    %v352 = vld [vmem:[#allocation5 + $0x828] sm:$0xff]
    %v353 = vld [vmem:[#allocation5 + $0x830] sm:$0xff]
    %v354 = vld [vmem:[#allocation5 + $0x838] sm:$0xff]
    %v355 = vld [vmem:[#allocation5 + $0x840] sm:$0xff]
    %v356 = vld [vmem:[#allocation5 + $0x848] sm:$0xff]
    %v357 = vld [vmem:[#allocation5 + $0x850] sm:$0xff]
    %v358 = vld [vmem:[#allocation5 + $0x858] sm:$0xff]
    %v359 = vld [vmem:[#allocation5 + $0x860] sm:$0xff]
    %v360 = vld [vmem:[#allocation5 + $0x868] sm:$0xff]
    %v361 = vld [vmem:[#allocation5 + $0x870] sm:$0xff]
    %v362 = vld [vmem:[#allocation5 + $0x878] sm:$0xff]
    %v363 = vld [vmem:[#allocation5 + $0x880] sm:$0xff]
    %v364 = vld [vmem:[#allocation5 + $0x888] sm:$0xff]
    %v365 = vld [vmem:[#allocation5 + $0x890] sm:$0xff]
    %v366 = vld [vmem:[#allocation5 + $0x898] sm:$0xff]
    %v367 = vld [vmem:[#allocation5 + $0x8a0] sm:$0xff]
    %v368 = vld [vmem:[#allocation5 + $0x8a8] sm:$0xff]
    %v369 = vld [vmem:[#allocation5 + $0x8b0] sm:$0xff]
    %v370 = vld [vmem:[#allocation5 + $0x8b8] sm:$0xff]
    %v371 = vld [vmem:[#allocation5 + $0x8c0] sm:$0xff]
    %v372 = vld [vmem:[#allocation5 + $0x8c8] sm:$0xff]
    %v373 = vld [vmem:[#allocation5 + $0x8d0] sm:$0xff]
    %v374 = vld [vmem:[#allocation5 + $0x8d8] sm:$0xff]
    %v375 = vld [vmem:[#allocation5 + $0x8e0] sm:$0xff]
    %v376 = vld [vmem:[#allocation5 + $0x8e8] sm:$0xff]
    %v377 = vld [vmem:[#allocation5 + $0x8f0] sm:$0xff]
    %v378 = vld [vmem:[#allocation5 + $0x8f8] sm:$0xff]
    %v379 = vld [vmem:[#allocation5 + $0x900] sm:$0xff]
    %v380 = vld [vmem:[#allocation5 + $0x908] sm:$0xff]
    %v381 = vld [vmem:[#allocation5 + $0x910] sm:$0xff]
    %v382 = vld [vmem:[#allocation5 + $0x918] sm:$0xff]
    %v383 = vld [vmem:[#allocation5 + $0x920] sm:$0xff]
    %v384 = vld [vmem:[#allocation5 + $0x928] sm:$0xff]
    %v385 = vld [vmem:[#allocation5 + $0x930] sm:$0xff]
    %v386 = vld [vmem:[#allocation5 + $0x938] sm:$0xff]
    %v387 = vld [vmem:[#allocation5 + $0x940] sm:$0xff]
    %v388 = vld [vmem:[#allocation5 + $0x948] sm:$0xff]
    %v389 = vld [vmem:[#allocation5 + $0x950] sm:$0xff]
    %v390 = vld [vmem:[#allocation5 + $0x958] sm:$0xff]
    %v391 = vld [vmem:[#allocation5 + $0x960] sm:$0xff]
    %v392 = vld [vmem:[#allocation5 + $0x968] sm:$0xff]
    %v393 = vld [vmem:[#allocation5 + $0x970] sm:$0xff]
    %v394 = vld [vmem:[#allocation5 + $0x978] sm:$0xff]
    %v395 = vld [vmem:[#allocation5 + $0x980] sm:$0xff]
    %v396 = vld [vmem:[#allocation5 + $0x988] sm:$0xff]
    %v397 = vld [vmem:[#allocation5 + $0x990] sm:$0xff]
    %v398 = vld [vmem:[#allocation5 + $0x998] sm:$0xff]
    %v399 = vld [vmem:[#allocation5 + $0x9a0] sm:$0xff]
    %v400 = vld [vmem:[#allocation5 + $0x9a8] sm:$0xff]
    %v401 = vld [vmem:[#allocation5 + $0x9b0] sm:$0xff]
    %v402 = vld [vmem:[#allocation5 + $0x9b8] sm:$0xff]
    %v403 = vld [vmem:[#allocation5 + $0x9c0] sm:$0xff]
    %v404 = vld [vmem:[#allocation5 + $0x9c8] sm:$0xff]
    %v405 = vld [vmem:[#allocation5 + $0x9d0] sm:$0xff]
    %v406 = vld [vmem:[#allocation5 + $0x9d8] sm:$0xff]
    %v407 = vld [vmem:[#allocation5 + $0x9e0] sm:$0xff]
    %v408 = vld [vmem:[#allocation5 + $0x9e8] sm:$0xff]
    %v409 = vld [vmem:[#allocation5 + $0x9f0] sm:$0xff]
    %v410 = vld [vmem:[#allocation5 + $0x9f8] sm:$0xff]
    %v411 = vld [vmem:[#allocation5 + $0xa00] sm:$0xff]
    %v412 = vld [vmem:[#allocation5 + $0xa08] sm:$0xff]
    %v413 = vld [vmem:[#allocation5 + $0xa10] sm:$0xff]
    %v414 = vld [vmem:[#allocation5 + $0xa18] sm:$0xff]
    %v415 = vld [vmem:[#allocation5 + $0xa20] sm:$0xff]
    %v416 = vld [vmem:[#allocation5 + $0xa28] sm:$0xff]
    %v417 = vld [vmem:[#allocation5 + $0xa30] sm:$0xff]
    %v418 = vld [vmem:[#allocation5 + $0xa38] sm:$0xff]
    %v419 = vld [vmem:[#allocation5 + $0xa40] sm:$0xff]
    %v420 = vld [vmem:[#allocation5 + $0xa48] sm:$0xff]
    %v421 = vld [vmem:[#allocation5 + $0xa50] sm:$0xff]
    %v422 = vld [vmem:[#allocation5 + $0xa58] sm:$0xff]
    %v423 = vld [vmem:[#allocation5 + $0xa60] sm:$0xff]
    %v424 = vld [vmem:[#allocation5 + $0xa68] sm:$0xff]
    %v425 = vld [vmem:[#allocation5 + $0xa70] sm:$0xff]
    %v426 = vld [vmem:[#allocation5 + $0xa78] sm:$0xff]
    %v427 = vld [vmem:[#allocation5 + $0xa80] sm:$0xff]
    %v428 = vld [vmem:[#allocation5 + $0xa88] sm:$0xff]
    %v429 = vld [vmem:[#allocation5 + $0xa90] sm:$0xff]
    %v430 = vld [vmem:[#allocation5 + $0xa98] sm:$0xff]
    %v431 = vld [vmem:[#allocation5 + $0xaa0] sm:$0xff]
    %v432 = vld [vmem:[#allocation5 + $0xaa8] sm:$0xff]
    %v433 = vld [vmem:[#allocation5 + $0xab0] sm:$0xff]
    %v434 = vld [vmem:[#allocation5 + $0xab8] sm:$0xff]
    %v435 = vld [vmem:[#allocation5 + $0xac0] sm:$0xff]
    %v436 = vld [vmem:[#allocation5 + $0xac8] sm:$0xff]
    %v437 = vld [vmem:[#allocation5 + $0xad0] sm:$0xff]
    %v438 = vld [vmem:[#allocation5 + $0xad8] sm:$0xff]
    %v439 = vld [vmem:[#allocation5 + $0xae0] sm:$0xff]
    %v440 = vld [vmem:[#allocation5 + $0xae8] sm:$0xff]
    %v441 = vld [vmem:[#allocation5 + $0xaf0] sm:$0xff]
    %v442 = vld [vmem:[#allocation5 + $0xaf8] sm:$0xff]
    %v443 = vld [vmem:[#allocation5 + $0xb00] sm:$0xff]
    %v444 = vld [vmem:[#allocation5 + $0xb08] sm:$0xff]
    %v445 = vld [vmem:[#allocation5 + $0xb10] sm:$0xff]
    %v446 = vld [vmem:[#allocation5 + $0xb18] sm:$0xff]
    %v447 = vld [vmem:[#allocation5 + $0xb20] sm:$0xff]
    %v448 = vld [vmem:[#allocation5 + $0xb28] sm:$0xff]
    %v449 = vld [vmem:[#allocation5 + $0xb30] sm:$0xff]
    %v450 = vld [vmem:[#allocation5 + $0xb38] sm:$0xff]
    %v451 = vld [vmem:[#allocation5 + $0xb40] sm:$0xff]
    %v452 = vld [vmem:[#allocation5 + $0xb48] sm:$0xff]
    %v453 = vld [vmem:[#allocation5 + $0xb50] sm:$0xff]
    %v454 = vld [vmem:[#allocation5 + $0xb58] sm:$0xff]
    %v455 = vld [vmem:[#allocation5 + $0xb60] sm:$0xff]
    %v456 = vld [vmem:[#allocation5 + $0xb68] sm:$0xff]
    %v457 = vld [vmem:[#allocation5 + $0xb70] sm:$0xff]
    %v458 = vld [vmem:[#allocation5 + $0xb78] sm:$0xff]
    %v459 = vld [vmem:[#allocation5 + $0xb80] sm:$0xff]
    %v460 = vld [vmem:[#allocation5 + $0xb88] sm:$0xff]
    %v461 = vld [vmem:[#allocation5 + $0xb90] sm:$0xff]
    %v462 = vld [vmem:[#allocation5 + $0xb98] sm:$0xff]
    %v463 = vld [vmem:[#allocation5 + $0xba0] sm:$0xff]
    %v464 = vld [vmem:[#allocation5 + $0xba8] sm:$0xff]
    %v465 = vld [vmem:[#allocation5 + $0xbb0] sm:$0xff]
    %v466 = vld [vmem:[#allocation5 + $0xbb8] sm:$0xff]
    %v467 = vld [vmem:[#allocation5 + $0xbc0] sm:$0xff]
    %v468 = vld [vmem:[#allocation5 + $0xbc8] sm:$0xff]
    %v469 = vld [vmem:[#allocation5 + $0xbd0] sm:$0xff]
    %v470 = vld [vmem:[#allocation5 + $0xbd8] sm:$0xff]
    %v471 = vld [vmem:[#allocation5 + $0xbe0] sm:$0xff]
    %v472 = vld [vmem:[#allocation5 + $0xbe8] sm:$0xff]
    %v473 = vld [vmem:[#allocation5 + $0xbf0] sm:$0xff]
    %v474 = vld [vmem:[#allocation5 + $0xbf8] sm:$0xff]
    %v475 = vld [vmem:[#allocation5 + $0xc00] sm:$0xff]
    %v476 = vld [vmem:[#allocation5 + $0xc08] sm:$0xff]
    %v477 = vld [vmem:[#allocation5 + $0xc10] sm:$0xff]
    %v478 = vld [vmem:[#allocation5 + $0xc18] sm:$0xff]
    %v479 = vld [vmem:[#allocation5 + $0xc20] sm:$0xff]
    %v480 = vld [vmem:[#allocation5 + $0xc28] sm:$0xff]
    %v481 = vld [vmem:[#allocation5 + $0xc30] sm:$0xff]
    %v482 = vld [vmem:[#allocation5 + $0xc38] sm:$0xff]
    %v483 = vld [vmem:[#allocation5 + $0xc40] sm:$0xff]
    %v484 = vld [vmem:[#allocation5 + $0xc48] sm:$0xff]
    %v485 = vld [vmem:[#allocation5 + $0xc50] sm:$0xff]
    %v486 = vld [vmem:[#allocation5 + $0xc58] sm:$0xff]
    %v487 = vld [vmem:[#allocation5 + $0xc60] sm:$0xff]
    %v488 = vld [vmem:[#allocation5 + $0xc68] sm:$0xff]
    %v489 = vld [vmem:[#allocation5 + $0xc70] sm:$0xff]
    %v490 = vld [vmem:[#allocation5 + $0xc78] sm:$0xff]
    %v491 = vld [vmem:[#allocation5 + $0xc80] sm:$0xff]
    %v492 = vld [vmem:[#allocation5 + $0xc88] sm:$0xff]
    %v493 = vld [vmem:[#allocation5 + $0xc90] sm:$0xff]
    %v494 = vld [vmem:[#allocation5 + $0xc98] sm:$0xff]
    %v495 = vld [vmem:[#allocation5 + $0xca0] sm:$0xff]
    %v496 = vld [vmem:[#allocation5 + $0xca8] sm:$0xff]
    %v497 = vld [vmem:[#allocation5 + $0xcb0] sm:$0xff]
    %v498 = vld [vmem:[#allocation5 + $0xcb8] sm:$0xff]
    %v499 = vld [vmem:[#allocation5 + $0xcc0] sm:$0xff]
    %v500 = vld [vmem:[#allocation5 + $0xcc8] sm:$0xff]
    %v501 = vld [vmem:[#allocation5 + $0xcd0] sm:$0xff]
    %v502 = vld [vmem:[#allocation5 + $0xcd8] sm:$0xff]
    %v503 = vld [vmem:[#allocation5 + $0xce0] sm:$0xff]
    %v504 = vld [vmem:[#allocation5 + $0xce8] sm:$0xff]
    %v505 = vld [vmem:[#allocation5 + $0xcf0] sm:$0xff]
    %v506 = vld [vmem:[#allocation5 + $0xcf8] sm:$0xff]
    %v507 = vld [vmem:[#allocation5 + $0xd00] sm:$0xff]
    %v508 = vld [vmem:[#allocation5 + $0xd08] sm:$0xff]
    %v509 = vld [vmem:[#allocation5 + $0xd10] sm:$0xff]
    %v510 = vld [vmem:[#allocation5 + $0xd18] sm:$0xff]
    %v511 = vld [vmem:[#allocation5 + $0xd20] sm:$0xff]
    %v512 = vld [vmem:[#allocation5 + $0xd28] sm:$0xff]
    %v513 = vld [vmem:[#allocation5 + $0xd30] sm:$0xff]
    %v514 = vld [vmem:[#allocation5 + $0xd38] sm:$0xff]
    %v515 = vld [vmem:[#allocation5 + $0xd40] sm:$0xff]
    %v516 = vld [vmem:[#allocation5 + $0xd48] sm:$0xff]
    %v517 = vld [vmem:[#allocation5 + $0xd50] sm:$0xff]
    %v518 = vld [vmem:[#allocation5 + $0xd58] sm:$0xff]
    %v519 = vld [vmem:[#allocation5 + $0xd60] sm:$0xff]
    %v520 = vld [vmem:[#allocation5 + $0xd68] sm:$0xff]
    %v521 = vld [vmem:[#allocation5 + $0xd70] sm:$0xff]
    %v522 = vld [vmem:[#allocation5 + $0xd78] sm:$0xff]
    %v523 = vld [vmem:[#allocation5 + $0xd80] sm:$0xff]
    %v524 = vld [vmem:[#allocation5 + $0xd88] sm:$0xff]
    %v525 = vld [vmem:[#allocation5 + $0xd90] sm:$0xff]
    %v526 = vld [vmem:[#allocation5 + $0xd98] sm:$0xff]
    %v527 = vld [vmem:[#allocation5 + $0xda0] sm:$0xff]
    %v528 = vld [vmem:[#allocation5 + $0xda8] sm:$0xff]
    %v529 = vld [vmem:[#allocation5 + $0xdb0] sm:$0xff]
    %v530 = vld [vmem:[#allocation5 + $0xdb8] sm:$0xff]
    %v531 = vld [vmem:[#allocation5 + $0xdc0] sm:$0xff]
    %v532 = vld [vmem:[#allocation5 + $0xdc8] sm:$0xff]
    %v533 = vld [vmem:[#allocation5 + $0xdd0] sm:$0xff]
    %v534 = vld [vmem:[#allocation5 + $0xdd8] sm:$0xff]
    %v535 = vld [vmem:[#allocation5 + $0xde0] sm:$0xff]
    %v536 = vld [vmem:[#allocation5 + $0xde8] sm:$0xff]
    %v537 = vld [vmem:[#allocation5 + $0xdf0] sm:$0xff]
    %v538 = vld [vmem:[#allocation5 + $0xdf8] sm:$0xff]
    %v539 = vld [vmem:[#allocation5 + $0xe00] sm:$0xff]
    %v540 = vld [vmem:[#allocation5 + $0xe08] sm:$0xff]
    %v541 = vld [vmem:[#allocation5 + $0xe10] sm:$0xff]
    %v542 = vld [vmem:[#allocation5 + $0xe18] sm:$0xff]
    %v543 = vld [vmem:[#allocation5 + $0xe20] sm:$0xff]
    %v544 = vld [vmem:[#allocation5 + $0xe28] sm:$0xff]
    %v545 = vld [vmem:[#allocation5 + $0xe30] sm:$0xff]
    %v546 = vld [vmem:[#allocation5 + $0xe38] sm:$0xff]
    %v547 = vld [vmem:[#allocation5 + $0xe40] sm:$0xff]
    %v548 = vld [vmem:[#allocation5 + $0xe48] sm:$0xff]
    %v549 = vld [vmem:[#allocation5 + $0xe50] sm:$0xff]
    %v550 = vld [vmem:[#allocation5 + $0xe58] sm:$0xff]
    %v551 = vld [vmem:[#allocation5 + $0xe60] sm:$0xff]
    %v552 = vld [vmem:[#allocation5 + $0xe68] sm:$0xff]
    %v553 = vld [vmem:[#allocation5 + $0xe70] sm:$0xff]
    %v554 = vld [vmem:[#allocation5 + $0xe78] sm:$0xff]
    %v555 = vld [vmem:[#allocation5 + $0xe80] sm:$0xff]
    %v556 = vld [vmem:[#allocation5 + $0xe88] sm:$0xff]
    %v557 = vld [vmem:[#allocation5 + $0xe90] sm:$0xff]
    %v558 = vld [vmem:[#allocation5 + $0xe98] sm:$0xff]
    %v559 = vld [vmem:[#allocation5 + $0xea0] sm:$0xff]
    %v560 = vld [vmem:[#allocation5 + $0xea8] sm:$0xff]
    %v561 = vld [vmem:[#allocation5 + $0xeb0] sm:$0xff]
    %v562 = vld [vmem:[#allocation5 + $0xeb8] sm:$0xff]
    %v563 = vld [vmem:[#allocation5 + $0xec0] sm:$0xff]
    %v564 = vld [vmem:[#allocation5 + $0xec8] sm:$0xff]
    %v565 = vld [vmem:[#allocation5 + $0xed0] sm:$0xff]
    %v566 = vld [vmem:[#allocation5 + $0xed8] sm:$0xff]
    %v567 = vld [vmem:[#allocation5 + $0xee0] sm:$0xff]
    %v568 = vld [vmem:[#allocation5 + $0xee8] sm:$0xff]
    %v569 = vld [vmem:[#allocation5 + $0xef0] sm:$0xff]
    %v570 = vld [vmem:[#allocation5 + $0xef8] sm:$0xff]
    %v571 = vld [vmem:[#allocation5 + $0xf00] sm:$0xff]
    %v572 = vld [vmem:[#allocation5 + $0xf08] sm:$0xff]
    %v573 = vld [vmem:[#allocation5 + $0xf10] sm:$0xff]
    %v574 = vld [vmem:[#allocation5 + $0xf18] sm:$0xff]
    %v575 = vld [vmem:[#allocation5 + $0xf20] sm:$0xff]
    %v576 = vld [vmem:[#allocation5 + $0xf28] sm:$0xff]
    %v577 = vld [vmem:[#allocation5 + $0xf30] sm:$0xff]
    %v578 = vld [vmem:[#allocation5 + $0xf38] sm:$0xff]
    %v579 = vld [vmem:[#allocation5 + $0xf40] sm:$0xff]
    %v580 = vld [vmem:[#allocation5 + $0xf48] sm:$0xff]
    %v581 = vld [vmem:[#allocation5 + $0xf50] sm:$0xff]
    %v582 = vld [vmem:[#allocation5 + $0xf58] sm:$0xff]
    %v583 = vld [vmem:[#allocation5 + $0xf60] sm:$0xff]
    %v584 = vld [vmem:[#allocation5 + $0xf68] sm:$0xff]
    %v585 = vld [vmem:[#allocation5 + $0xf70] sm:$0xff]
    %v586 = vld [vmem:[#allocation5 + $0xf78] sm:$0xff]
    %v587 = vld [vmem:[#allocation5 + $0xf80] sm:$0xff]
    %v588 = vld [vmem:[#allocation5 + $0xf88] sm:$0xff]
    %v589 = vld [vmem:[#allocation5 + $0xf90] sm:$0xff]
    %v590 = vld [vmem:[#allocation5 + $0xf98] sm:$0xff]
    %v591 = vld [vmem:[#allocation5 + $0xfa0] sm:$0xff]
    %v592 = vld [vmem:[#allocation5 + $0xfa8] sm:$0xff]
    %v593 = vld [vmem:[#allocation5 + $0xfb0] sm:$0xff]
    %v594 = vld [vmem:[#allocation5 + $0xfb8] sm:$0xff]
    %v595 = vld [vmem:[#allocation5 + $0xfc0] sm:$0xff]
    %v596 = vld [vmem:[#allocation5 + $0xfc8] sm:$0xff]
    %v597 = vld [vmem:[#allocation5 + $0xfd0] sm:$0xff]
    %v598 = vld [vmem:[#allocation5 + $0xfd8] sm:$0xff]
    %v599 = vld [vmem:[#allocation5 + $0xfe0] sm:$0xff]
    %v600 = vld [vmem:[#allocation5 + $0xfe8] sm:$0xff]
    %v601 = vld [vmem:[#allocation5 + $0xff0] sm:$0xff]
    %v602 = vld [vmem:[#allocation5 + $0xff8] sm:$0xff]
    %v603 = vld [vmem:[#allocation7] sm:$0xf]
    %v605 = vlaneseq
    %v606 = vshrl.u32 %v605, 7
    %v607 = vsub.s32 0, %v606
    %v608 = vrot.slane %v603, %v607
    %v609 = vlaneseq
    %v610 = vshrl.u32 %v609, 7
    %v611 = vsub.s32 1, %v610
    %v612 = vrot.slane %v603, %v611
    %v613 = vlaneseq
    %v614 = vshrl.u32 %v613, 7
    %v615 = vsub.s32 2, %v614
    %v616 = vrot.slane %v603, %v615
    %v617 = vlaneseq
    %v618 = vshrl.u32 %v617, 7
    %v619 = vsub.s32 3, %v618
    %v620 = vrot.slane %v603, %v619
    %v633 = vunpack.c.l.b16 %v83
    %v634 = vunpack.c.h.b16 %v83
    %v635 = vunpack.c.l.b16 %v84
    %v636 = vunpack.c.h.b16 %v84
    %v637 = vunpack.c.l.b16 %v85
    %v638 = vunpack.c.h.b16 %v85
    %v639 = vunpack.c.l.b16 %v86
    %v640 = vunpack.c.h.b16 %v86
    %v641 = vunpack.c.l.b16 %v87
    %v642 = vunpack.c.h.b16 %v87
    %v643 = vunpack.c.l.b16 %v88
    %v644 = vunpack.c.h.b16 %v88
    %v645 = vunpack.c.l.b16 %v89
    %v646 = vunpack.c.h.b16 %v89
    %v647 = vunpack.c.l.b16 %v90
    %v648 = vunpack.c.h.b16 %v90
    %v649 = vpack.c.b16 %v633, %v633
    %v650 = vpack.c.b16 %v634, %v634
    %v651 = vpack.c.b16 %v635, %v635
    %v652 = vpack.c.b16 %v636, %v636
    %v653 = vpack.c.b16 %v637, %v637
    %v654 = vpack.c.b16 %v638, %v638
    %v655 = vpack.c.b16 %v639, %v639
    %v656 = vpack.c.b16 %v640, %v640
    %v657 = vpack.c.b16 %v641, %v641
    %v658 = vpack.c.b16 %v642, %v642
    %v659 = vpack.c.b16 %v643, %v643
    %v660 = vpack.c.b16 %v644, %v644
    %v661 = vpack.c.b16 %v645, %v645
    %v662 = vpack.c.b16 %v646, %v646
    %v663 = vpack.c.b16 %v647, %v647
    %v664 = vpack.c.b16 %v648, %v648
    %v1193 = vunpack.c.l.b16 %v91
    %v1194 = vunpack.c.h.b16 %v91
    %v1195 = vunpack.c.l.b16 %v92
    %v1196 = vunpack.c.h.b16 %v92
    %v1197 = vunpack.c.l.b16 %v93
    %v1198 = vunpack.c.h.b16 %v93
    %v1199 = vunpack.c.l.b16 %v94
    %v1200 = vunpack.c.h.b16 %v94
    %v1201 = vunpack.c.l.b16 %v95
    %v1202 = vunpack.c.h.b16 %v95
    %v1203 = vunpack.c.l.b16 %v96
    %v1204 = vunpack.c.h.b16 %v96
    %v1205 = vunpack.c.l.b16 %v97
    %v1206 = vunpack.c.h.b16 %v97
    %v1207 = vunpack.c.l.b16 %v98
    %v1208 = vunpack.c.h.b16 %v98
    %v1209 = vunpack.c.l.b16 %v99
    %v1210 = vunpack.c.h.b16 %v99
    %v1211 = vunpack.c.l.b16 %v100
    %v1212 = vunpack.c.h.b16 %v100
    %v1213 = vunpack.c.l.b16 %v101
    %v1214 = vunpack.c.h.b16 %v101
    %v1215 = vunpack.c.l.b16 %v102
    %v1216 = vunpack.c.h.b16 %v102
    %v1217 = vunpack.c.l.b16 %v103
    %v1218 = vunpack.c.h.b16 %v103
    %v1219 = vunpack.c.l.b16 %v104
    %v1220 = vunpack.c.h.b16 %v104
    %v1221 = vunpack.c.l.b16 %v105
    %v1222 = vunpack.c.h.b16 %v105
    %v1223 = vunpack.c.l.b16 %v106
    %v1224 = vunpack.c.h.b16 %v106
    %v1225 = vunpack.c.l.b16 %v107
    %v1226 = vunpack.c.h.b16 %v107
    %v1227 = vunpack.c.l.b16 %v108
    %v1228 = vunpack.c.h.b16 %v108
    %v1229 = vunpack.c.l.b16 %v109
    %v1230 = vunpack.c.h.b16 %v109
    %v1231 = vunpack.c.l.b16 %v110
    %v1232 = vunpack.c.h.b16 %v110
    %v1233 = vunpack.c.l.b16 %v111
    %v1234 = vunpack.c.h.b16 %v111
    %v1235 = vunpack.c.l.b16 %v112
    %v1236 = vunpack.c.h.b16 %v112
    %v1237 = vunpack.c.l.b16 %v113
    %v1238 = vunpack.c.h.b16 %v113
    %v1239 = vunpack.c.l.b16 %v114
    %v1240 = vunpack.c.h.b16 %v114
    %v1241 = vunpack.c.l.b16 %v115
    %v1242 = vunpack.c.h.b16 %v115
    %v1243 = vunpack.c.l.b16 %v116
    %v1244 = vunpack.c.h.b16 %v116
    %v1245 = vunpack.c.l.b16 %v117
    %v1246 = vunpack.c.h.b16 %v117
    %v1247 = vunpack.c.l.b16 %v118
    %v1248 = vunpack.c.h.b16 %v118
    %v1249 = vunpack.c.l.b16 %v119
    %v1250 = vunpack.c.h.b16 %v119
    %v1251 = vunpack.c.l.b16 %v120
    %v1252 = vunpack.c.h.b16 %v120
    %v1253 = vunpack.c.l.b16 %v121
    %v1254 = vunpack.c.h.b16 %v121
    %v1255 = vunpack.c.l.b16 %v122
    %v1256 = vunpack.c.h.b16 %v122
    %v1257 = vunpack.c.l.b16 %v123
    %v1258 = vunpack.c.h.b16 %v123
    %v1259 = vunpack.c.l.b16 %v124
    %v1260 = vunpack.c.h.b16 %v124
    %v1261 = vunpack.c.l.b16 %v125
    %v1262 = vunpack.c.h.b16 %v125
    %v1263 = vunpack.c.l.b16 %v126
    %v1264 = vunpack.c.h.b16 %v126
    %v1265 = vunpack.c.l.b16 %v127
    %v1266 = vunpack.c.h.b16 %v127
    %v1267 = vunpack.c.l.b16 %v128
    %v1268 = vunpack.c.h.b16 %v128
    %v1269 = vunpack.c.l.b16 %v129
    %v1270 = vunpack.c.h.b16 %v129
    %v1271 = vunpack.c.l.b16 %v130
    %v1272 = vunpack.c.h.b16 %v130
    %v1273 = vunpack.c.l.b16 %v131
    %v1274 = vunpack.c.h.b16 %v131
    %v1275 = vunpack.c.l.b16 %v132
    %v1276 = vunpack.c.h.b16 %v132
    %v1277 = vunpack.c.l.b16 %v133
    %v1278 = vunpack.c.h.b16 %v133
    %v1279 = vunpack.c.l.b16 %v134
    %v1280 = vunpack.c.h.b16 %v134
    %v1281 = vunpack.c.l.b16 %v135
    %v1282 = vunpack.c.h.b16 %v135
    %v1283 = vunpack.c.l.b16 %v136
    %v1284 = vunpack.c.h.b16 %v136
    %v1285 = vunpack.c.l.b16 %v137
    %v1286 = vunpack.c.h.b16 %v137
    %v1287 = vunpack.c.l.b16 %v138
    %v1288 = vunpack.c.h.b16 %v138
    %v1289 = vunpack.c.l.b16 %v139
    %v1290 = vunpack.c.h.b16 %v139
    %v1291 = vunpack.c.l.b16 %v140
    %v1292 = vunpack.c.h.b16 %v140
    %v1293 = vunpack.c.l.b16 %v141
    %v1294 = vunpack.c.h.b16 %v141
    %v1295 = vunpack.c.l.b16 %v142
    %v1296 = vunpack.c.h.b16 %v142
    %v1297 = vunpack.c.l.b16 %v143
    %v1298 = vunpack.c.h.b16 %v143
    %v1299 = vunpack.c.l.b16 %v144
    %v1300 = vunpack.c.h.b16 %v144
    %v1301 = vunpack.c.l.b16 %v145
    %v1302 = vunpack.c.h.b16 %v145
    %v1303 = vunpack.c.l.b16 %v146
    %v1304 = vunpack.c.h.b16 %v146
    %v1305 = vunpack.c.l.b16 %v147
    %v1306 = vunpack.c.h.b16 %v147
    %v1307 = vunpack.c.l.b16 %v148
    %v1308 = vunpack.c.h.b16 %v148
    %v1309 = vunpack.c.l.b16 %v149
    %v1310 = vunpack.c.h.b16 %v149
    %v1311 = vunpack.c.l.b16 %v150
    %v1312 = vunpack.c.h.b16 %v150
    %v1313 = vunpack.c.l.b16 %v151
    %v1314 = vunpack.c.h.b16 %v151
    %v1315 = vunpack.c.l.b16 %v152
    %v1316 = vunpack.c.h.b16 %v152
    %v1317 = vunpack.c.l.b16 %v153
    %v1318 = vunpack.c.h.b16 %v153
    %v1319 = vunpack.c.l.b16 %v154
    %v1320 = vunpack.c.h.b16 %v154
    %v1321 = vunpack.c.l.b16 %v155
    %v1322 = vunpack.c.h.b16 %v155
    %v1323 = vunpack.c.l.b16 %v156
    %v1324 = vunpack.c.h.b16 %v156
    %v1325 = vunpack.c.l.b16 %v157
    %v1326 = vunpack.c.h.b16 %v157
    %v1327 = vunpack.c.l.b16 %v158
    %v1328 = vunpack.c.h.b16 %v158
    %v1329 = vunpack.c.l.b16 %v159
    %v1330 = vunpack.c.h.b16 %v159
    %v1331 = vunpack.c.l.b16 %v160
    %v1332 = vunpack.c.h.b16 %v160
    %v1333 = vunpack.c.l.b16 %v161
    %v1334 = vunpack.c.h.b16 %v161
    %v1335 = vunpack.c.l.b16 %v162
    %v1336 = vunpack.c.h.b16 %v162
    %v1337 = vunpack.c.l.b16 %v163
    %v1338 = vunpack.c.h.b16 %v163
    %v1339 = vunpack.c.l.b16 %v164
    %v1340 = vunpack.c.h.b16 %v164
    %v1341 = vunpack.c.l.b16 %v165
    %v1342 = vunpack.c.h.b16 %v165
    %v1343 = vunpack.c.l.b16 %v166
    %v1344 = vunpack.c.h.b16 %v166
    %v1345 = vunpack.c.l.b16 %v167
    %v1346 = vunpack.c.h.b16 %v167
    %v1347 = vunpack.c.l.b16 %v168
    %v1348 = vunpack.c.h.b16 %v168
    %v1349 = vunpack.c.l.b16 %v169
    %v1350 = vunpack.c.h.b16 %v169
    %v1351 = vunpack.c.l.b16 %v170
    %v1352 = vunpack.c.h.b16 %v170
    %v1353 = vunpack.c.l.b16 %v171
    %v1354 = vunpack.c.h.b16 %v171
    %v1355 = vunpack.c.l.b16 %v172
    %v1356 = vunpack.c.h.b16 %v172
    %v1357 = vunpack.c.l.b16 %v173
    %v1358 = vunpack.c.h.b16 %v173
    %v1359 = vunpack.c.l.b16 %v174
    %v1360 = vunpack.c.h.b16 %v174
    %v1361 = vunpack.c.l.b16 %v175
    %v1362 = vunpack.c.h.b16 %v175
    %v1363 = vunpack.c.l.b16 %v176
    %v1364 = vunpack.c.h.b16 %v176
    %v1365 = vunpack.c.l.b16 %v177
    %v1366 = vunpack.c.h.b16 %v177
    %v1367 = vunpack.c.l.b16 %v178
    %v1368 = vunpack.c.h.b16 %v178
    %v1369 = vunpack.c.l.b16 %v179
    %v1370 = vunpack.c.h.b16 %v179
    %v1371 = vunpack.c.l.b16 %v180
    %v1372 = vunpack.c.h.b16 %v180
    %v1373 = vunpack.c.l.b16 %v181
    %v1374 = vunpack.c.h.b16 %v181
    %v1375 = vunpack.c.l.b16 %v182
    %v1376 = vunpack.c.h.b16 %v182
    %v1377 = vunpack.c.l.b16 %v183
    %v1378 = vunpack.c.h.b16 %v183
    %v1379 = vunpack.c.l.b16 %v184
    %v1380 = vunpack.c.h.b16 %v184
    %v1381 = vunpack.c.l.b16 %v185
    %v1382 = vunpack.c.h.b16 %v185
    %v1383 = vunpack.c.l.b16 %v186
    %v1384 = vunpack.c.h.b16 %v186
    %v1385 = vunpack.c.l.b16 %v187
    %v1386 = vunpack.c.h.b16 %v187
    %v1387 = vunpack.c.l.b16 %v188
    %v1388 = vunpack.c.h.b16 %v188
    %v1389 = vunpack.c.l.b16 %v189
    %v1390 = vunpack.c.h.b16 %v189
    %v1391 = vunpack.c.l.b16 %v190
    %v1392 = vunpack.c.h.b16 %v190
    %v1393 = vunpack.c.l.b16 %v191
    %v1394 = vunpack.c.h.b16 %v191
    %v1395 = vunpack.c.l.b16 %v192
    %v1396 = vunpack.c.h.b16 %v192
    %v1397 = vunpack.c.l.b16 %v193
    %v1398 = vunpack.c.h.b16 %v193
    %v1399 = vunpack.c.l.b16 %v194
    %v1400 = vunpack.c.h.b16 %v194
    %v1401 = vunpack.c.l.b16 %v195
    %v1402 = vunpack.c.h.b16 %v195
    %v1403 = vunpack.c.l.b16 %v196
    %v1404 = vunpack.c.h.b16 %v196
    %v1405 = vunpack.c.l.b16 %v197
    %v1406 = vunpack.c.h.b16 %v197
    %v1407 = vunpack.c.l.b16 %v198
    %v1408 = vunpack.c.h.b16 %v198
    %v1409 = vunpack.c.l.b16 %v199
    %v1410 = vunpack.c.h.b16 %v199
    %v1411 = vunpack.c.l.b16 %v200
    %v1412 = vunpack.c.h.b16 %v200
    %v1413 = vunpack.c.l.b16 %v201
    %v1414 = vunpack.c.h.b16 %v201
    %v1415 = vunpack.c.l.b16 %v202
    %v1416 = vunpack.c.h.b16 %v202
    %v1417 = vunpack.c.l.b16 %v203
    %v1418 = vunpack.c.h.b16 %v203
    %v1419 = vunpack.c.l.b16 %v204
    %v1420 = vunpack.c.h.b16 %v204
    %v1421 = vunpack.c.l.b16 %v205
    %v1422 = vunpack.c.h.b16 %v205
    %v1423 = vunpack.c.l.b16 %v206
    %v1424 = vunpack.c.h.b16 %v206
    %v1425 = vunpack.c.l.b16 %v207
    %v1426 = vunpack.c.h.b16 %v207
    %v1427 = vunpack.c.l.b16 %v208
    %v1428 = vunpack.c.h.b16 %v208
    %v1429 = vunpack.c.l.b16 %v209
    %v1430 = vunpack.c.h.b16 %v209
    %v1431 = vunpack.c.l.b16 %v210
    %v1432 = vunpack.c.h.b16 %v210
    %v1433 = vunpack.c.l.b16 %v211
    %v1434 = vunpack.c.h.b16 %v211
    %v1435 = vunpack.c.l.b16 %v212
    %v1436 = vunpack.c.h.b16 %v212
    %v1437 = vunpack.c.l.b16 %v213
    %v1438 = vunpack.c.h.b16 %v213
    %v1439 = vunpack.c.l.b16 %v214
    %v1440 = vunpack.c.h.b16 %v214
    %v1441 = vunpack.c.l.b16 %v215
    %v1442 = vunpack.c.h.b16 %v215
    %v1443 = vunpack.c.l.b16 %v216
    %v1444 = vunpack.c.h.b16 %v216
    %v1445 = vunpack.c.l.b16 %v217
    %v1446 = vunpack.c.h.b16 %v217
    %v1447 = vunpack.c.l.b16 %v218
    %v1448 = vunpack.c.h.b16 %v218
    %v1449 = vunpack.c.l.b16 %v219
    %v1450 = vunpack.c.h.b16 %v219
    %v1451 = vunpack.c.l.b16 %v220
    %v1452 = vunpack.c.h.b16 %v220
    %v1453 = vunpack.c.l.b16 %v221
    %v1454 = vunpack.c.h.b16 %v221
    %v1455 = vunpack.c.l.b16 %v222
    %v1456 = vunpack.c.h.b16 %v222
    %v1457 = vunpack.c.l.b16 %v223
    %v1458 = vunpack.c.h.b16 %v223
    %v1459 = vunpack.c.l.b16 %v224
    %v1460 = vunpack.c.h.b16 %v224
    %v1461 = vunpack.c.l.b16 %v225
    %v1462 = vunpack.c.h.b16 %v225
    %v1463 = vunpack.c.l.b16 %v226
    %v1464 = vunpack.c.h.b16 %v226
    %v1465 = vunpack.c.l.b16 %v227
    %v1466 = vunpack.c.h.b16 %v227
    %v1467 = vunpack.c.l.b16 %v228
    %v1468 = vunpack.c.h.b16 %v228
    %v1469 = vunpack.c.l.b16 %v229
    %v1470 = vunpack.c.h.b16 %v229
    %v1471 = vunpack.c.l.b16 %v230
    %v1472 = vunpack.c.h.b16 %v230
    %v1473 = vunpack.c.l.b16 %v231
    %v1474 = vunpack.c.h.b16 %v231
    %v1475 = vunpack.c.l.b16 %v232
    %v1476 = vunpack.c.h.b16 %v232
    %v1477 = vunpack.c.l.b16 %v233
    %v1478 = vunpack.c.h.b16 %v233
    %v1479 = vunpack.c.l.b16 %v234
    %v1480 = vunpack.c.h.b16 %v234
    %v1481 = vunpack.c.l.b16 %v235
    %v1482 = vunpack.c.h.b16 %v235
    %v1483 = vunpack.c.l.b16 %v236
    %v1484 = vunpack.c.h.b16 %v236
    %v1485 = vunpack.c.l.b16 %v237
    %v1486 = vunpack.c.h.b16 %v237
    %v1487 = vunpack.c.l.b16 %v238
    %v1488 = vunpack.c.h.b16 %v238
    %v1489 = vunpack.c.l.b16 %v239
    %v1490 = vunpack.c.h.b16 %v239
    %v1491 = vunpack.c.l.b16 %v240
    %v1492 = vunpack.c.h.b16 %v240
    %v1493 = vunpack.c.l.b16 %v241
    %v1494 = vunpack.c.h.b16 %v241
    %v1495 = vunpack.c.l.b16 %v242
    %v1496 = vunpack.c.h.b16 %v242
    %v1497 = vunpack.c.l.b16 %v243
    %v1498 = vunpack.c.h.b16 %v243
    %v1499 = vunpack.c.l.b16 %v244
    %v1500 = vunpack.c.h.b16 %v244
    %v1501 = vunpack.c.l.b16 %v245
    %v1502 = vunpack.c.h.b16 %v245
    %v1503 = vunpack.c.l.b16 %v246
    %v1504 = vunpack.c.h.b16 %v246
    %v1505 = vunpack.c.l.b16 %v247
    %v1506 = vunpack.c.h.b16 %v247
    %v1507 = vunpack.c.l.b16 %v248
    %v1508 = vunpack.c.h.b16 %v248
    %v1509 = vunpack.c.l.b16 %v249
    %v1510 = vunpack.c.h.b16 %v249
    %v1511 = vunpack.c.l.b16 %v250
    %v1512 = vunpack.c.h.b16 %v250
    %v1513 = vunpack.c.l.b16 %v251
    %v1514 = vunpack.c.h.b16 %v251
    %v1515 = vunpack.c.l.b16 %v252
    %v1516 = vunpack.c.h.b16 %v252
    %v1517 = vunpack.c.l.b16 %v253
    %v1518 = vunpack.c.h.b16 %v253
    %v1519 = vunpack.c.l.b16 %v254
    %v1520 = vunpack.c.h.b16 %v254
    %v1521 = vunpack.c.l.b16 %v255
    %v1522 = vunpack.c.h.b16 %v255
    %v1523 = vunpack.c.l.b16 %v256
    %v1524 = vunpack.c.h.b16 %v256
    %v1525 = vunpack.c.l.b16 %v257
    %v1526 = vunpack.c.h.b16 %v257
    %v1527 = vunpack.c.l.b16 %v258
    %v1528 = vunpack.c.h.b16 %v258
    %v1529 = vunpack.c.l.b16 %v259
    %v1530 = vunpack.c.h.b16 %v259
    %v1531 = vunpack.c.l.b16 %v260
    %v1532 = vunpack.c.h.b16 %v260
    %v1533 = vunpack.c.l.b16 %v261
    %v1534 = vunpack.c.h.b16 %v261
    %v1535 = vunpack.c.l.b16 %v262
    %v1536 = vunpack.c.h.b16 %v262
    %v1537 = vunpack.c.l.b16 %v263
    %v1538 = vunpack.c.h.b16 %v263
    %v1539 = vunpack.c.l.b16 %v264
    %v1540 = vunpack.c.h.b16 %v264
    %v1541 = vunpack.c.l.b16 %v265
    %v1542 = vunpack.c.h.b16 %v265
    %v1543 = vunpack.c.l.b16 %v266
    %v1544 = vunpack.c.h.b16 %v266
    %v1545 = vunpack.c.l.b16 %v267
    %v1546 = vunpack.c.h.b16 %v267
    %v1547 = vunpack.c.l.b16 %v268
    %v1548 = vunpack.c.h.b16 %v268
    %v1549 = vunpack.c.l.b16 %v269
    %v1550 = vunpack.c.h.b16 %v269
    %v1551 = vunpack.c.l.b16 %v270
    %v1552 = vunpack.c.h.b16 %v270
    %v1553 = vunpack.c.l.b16 %v271
    %v1554 = vunpack.c.h.b16 %v271
    %v1555 = vunpack.c.l.b16 %v272
    %v1556 = vunpack.c.h.b16 %v272
    %v1557 = vunpack.c.l.b16 %v273
    %v1558 = vunpack.c.h.b16 %v273
    %v1559 = vunpack.c.l.b16 %v274
    %v1560 = vunpack.c.h.b16 %v274
    %v1561 = vunpack.c.l.b16 %v275
    %v1562 = vunpack.c.h.b16 %v275
    %v1563 = vunpack.c.l.b16 %v276
    %v1564 = vunpack.c.h.b16 %v276
    %v1565 = vunpack.c.l.b16 %v277
    %v1566 = vunpack.c.h.b16 %v277
    %v1567 = vunpack.c.l.b16 %v278
    %v1568 = vunpack.c.h.b16 %v278
    %v1569 = vunpack.c.l.b16 %v279
    %v1570 = vunpack.c.h.b16 %v279
    %v1571 = vunpack.c.l.b16 %v280
    %v1572 = vunpack.c.h.b16 %v280
    %v1573 = vunpack.c.l.b16 %v281
    %v1574 = vunpack.c.h.b16 %v281
    %v1575 = vunpack.c.l.b16 %v282
    %v1576 = vunpack.c.h.b16 %v282
    %v1577 = vunpack.c.l.b16 %v283
    %v1578 = vunpack.c.h.b16 %v283
    %v1579 = vunpack.c.l.b16 %v284
    %v1580 = vunpack.c.h.b16 %v284
    %v1581 = vunpack.c.l.b16 %v285
    %v1582 = vunpack.c.h.b16 %v285
    %v1583 = vunpack.c.l.b16 %v286
    %v1584 = vunpack.c.h.b16 %v286
    %v1585 = vunpack.c.l.b16 %v287
    %v1586 = vunpack.c.h.b16 %v287
    %v1587 = vunpack.c.l.b16 %v288
    %v1588 = vunpack.c.h.b16 %v288
    %v1589 = vunpack.c.l.b16 %v289
    %v1590 = vunpack.c.h.b16 %v289
    %v1591 = vunpack.c.l.b16 %v290
    %v1592 = vunpack.c.h.b16 %v290
    %v1593 = vunpack.c.l.b16 %v291
    %v1594 = vunpack.c.h.b16 %v291
    %v1595 = vunpack.c.l.b16 %v292
    %v1596 = vunpack.c.h.b16 %v292
    %v1597 = vunpack.c.l.b16 %v293
    %v1598 = vunpack.c.h.b16 %v293
    %v1599 = vunpack.c.l.b16 %v294
    %v1600 = vunpack.c.h.b16 %v294
    %v1601 = vunpack.c.l.b16 %v295
    %v1602 = vunpack.c.h.b16 %v295
    %v1603 = vunpack.c.l.b16 %v296
    %v1604 = vunpack.c.h.b16 %v296
    %v1605 = vunpack.c.l.b16 %v297
    %v1606 = vunpack.c.h.b16 %v297
    %v1607 = vunpack.c.l.b16 %v298
    %v1608 = vunpack.c.h.b16 %v298
    %v1609 = vunpack.c.l.b16 %v299
    %v1610 = vunpack.c.h.b16 %v299
    %v1611 = vunpack.c.l.b16 %v300
    %v1612 = vunpack.c.h.b16 %v300
    %v1613 = vunpack.c.l.b16 %v301
    %v1614 = vunpack.c.h.b16 %v301
    %v1615 = vunpack.c.l.b16 %v302
    %v1616 = vunpack.c.h.b16 %v302
    %v1617 = vunpack.c.l.b16 %v303
    %v1618 = vunpack.c.h.b16 %v303
    %v1619 = vunpack.c.l.b16 %v304
    %v1620 = vunpack.c.h.b16 %v304
    %v1621 = vunpack.c.l.b16 %v305
    %v1622 = vunpack.c.h.b16 %v305
    %v1623 = vunpack.c.l.b16 %v306
    %v1624 = vunpack.c.h.b16 %v306
    %v1625 = vunpack.c.l.b16 %v307
    %v1626 = vunpack.c.h.b16 %v307
    %v1627 = vunpack.c.l.b16 %v308
    %v1628 = vunpack.c.h.b16 %v308
    %v1629 = vunpack.c.l.b16 %v309
    %v1630 = vunpack.c.h.b16 %v309
    %v1631 = vunpack.c.l.b16 %v310
    %v1632 = vunpack.c.h.b16 %v310
    %v1633 = vunpack.c.l.b16 %v311
    %v1634 = vunpack.c.h.b16 %v311
    %v1635 = vunpack.c.l.b16 %v312
    %v1636 = vunpack.c.h.b16 %v312
    %v1637 = vunpack.c.l.b16 %v313
    %v1638 = vunpack.c.h.b16 %v313
    %v1639 = vunpack.c.l.b16 %v314
    %v1640 = vunpack.c.h.b16 %v314
    %v1641 = vunpack.c.l.b16 %v315
    %v1642 = vunpack.c.h.b16 %v315
    %v1643 = vunpack.c.l.b16 %v316
    %v1644 = vunpack.c.h.b16 %v316
    %v1645 = vunpack.c.l.b16 %v317
    %v1646 = vunpack.c.h.b16 %v317
    %v1647 = vunpack.c.l.b16 %v318
    %v1648 = vunpack.c.h.b16 %v318
    %v1649 = vunpack.c.l.b16 %v319
    %v1650 = vunpack.c.h.b16 %v319
    %v1651 = vunpack.c.l.b16 %v320
    %v1652 = vunpack.c.h.b16 %v320
    %v1653 = vunpack.c.l.b16 %v321
    %v1654 = vunpack.c.h.b16 %v321
    %v1655 = vunpack.c.l.b16 %v322
    %v1656 = vunpack.c.h.b16 %v322
    %v1657 = vunpack.c.l.b16 %v323
    %v1658 = vunpack.c.h.b16 %v323
    %v1659 = vunpack.c.l.b16 %v324
    %v1660 = vunpack.c.h.b16 %v324
    %v1661 = vunpack.c.l.b16 %v325
    %v1662 = vunpack.c.h.b16 %v325
    %v1663 = vunpack.c.l.b16 %v326
    %v1664 = vunpack.c.h.b16 %v326
    %v1665 = vunpack.c.l.b16 %v327
    %v1666 = vunpack.c.h.b16 %v327
    %v1667 = vunpack.c.l.b16 %v328
    %v1668 = vunpack.c.h.b16 %v328
    %v1669 = vunpack.c.l.b16 %v329
    %v1670 = vunpack.c.h.b16 %v329
    %v1671 = vunpack.c.l.b16 %v330
    %v1672 = vunpack.c.h.b16 %v330
    %v1673 = vunpack.c.l.b16 %v331
    %v1674 = vunpack.c.h.b16 %v331
    %v1675 = vunpack.c.l.b16 %v332
    %v1676 = vunpack.c.h.b16 %v332
    %v1677 = vunpack.c.l.b16 %v333
    %v1678 = vunpack.c.h.b16 %v333
    %v1679 = vunpack.c.l.b16 %v334
    %v1680 = vunpack.c.h.b16 %v334
    %v1681 = vunpack.c.l.b16 %v335
    %v1682 = vunpack.c.h.b16 %v335
    %v1683 = vunpack.c.l.b16 %v336
    %v1684 = vunpack.c.h.b16 %v336
    %v1685 = vunpack.c.l.b16 %v337
    %v1686 = vunpack.c.h.b16 %v337
    %v1687 = vunpack.c.l.b16 %v338
    %v1688 = vunpack.c.h.b16 %v338
    %v1689 = vunpack.c.l.b16 %v339
    %v1690 = vunpack.c.h.b16 %v339
    %v1691 = vunpack.c.l.b16 %v340
    %v1692 = vunpack.c.h.b16 %v340
    %v1693 = vunpack.c.l.b16 %v341
    %v1694 = vunpack.c.h.b16 %v341
    %v1695 = vunpack.c.l.b16 %v342
    %v1696 = vunpack.c.h.b16 %v342
    %v1697 = vunpack.c.l.b16 %v343
    %v1698 = vunpack.c.h.b16 %v343
    %v1699 = vunpack.c.l.b16 %v344
    %v1700 = vunpack.c.h.b16 %v344
    %v1701 = vunpack.c.l.b16 %v345
    %v1702 = vunpack.c.h.b16 %v345
    %v1703 = vunpack.c.l.b16 %v346
    %v1704 = vunpack.c.h.b16 %v346
    %v1705 = vunpack.c.l.b16 %v347
    %v1706 = vunpack.c.h.b16 %v347
    %v1707 = vunpack.c.l.b16 %v348
    %v1708 = vunpack.c.h.b16 %v348
    %v1709 = vunpack.c.l.b16 %v349
    %v1710 = vunpack.c.h.b16 %v349
    %v1711 = vunpack.c.l.b16 %v350
    %v1712 = vunpack.c.h.b16 %v350
    %v1713 = vunpack.c.l.b16 %v351
    %v1714 = vunpack.c.h.b16 %v351
    %v1715 = vunpack.c.l.b16 %v352
    %v1716 = vunpack.c.h.b16 %v352
    %v1717 = vunpack.c.l.b16 %v353
    %v1718 = vunpack.c.h.b16 %v353
    %v1719 = vunpack.c.l.b16 %v354
    %v1720 = vunpack.c.h.b16 %v354
    %v1721 = vunpack.c.l.b16 %v355
    %v1722 = vunpack.c.h.b16 %v355
    %v1723 = vunpack.c.l.b16 %v356
    %v1724 = vunpack.c.h.b16 %v356
    %v1725 = vunpack.c.l.b16 %v357
    %v1726 = vunpack.c.h.b16 %v357
    %v1727 = vunpack.c.l.b16 %v358
    %v1728 = vunpack.c.h.b16 %v358
    %v1729 = vunpack.c.l.b16 %v359
    %v1730 = vunpack.c.h.b16 %v359
    %v1731 = vunpack.c.l.b16 %v360
    %v1732 = vunpack.c.h.b16 %v360
    %v1733 = vunpack.c.l.b16 %v361
    %v1734 = vunpack.c.h.b16 %v361
    %v1735 = vunpack.c.l.b16 %v362
    %v1736 = vunpack.c.h.b16 %v362
    %v1737 = vunpack.c.l.b16 %v363
    %v1738 = vunpack.c.h.b16 %v363
    %v1739 = vunpack.c.l.b16 %v364
    %v1740 = vunpack.c.h.b16 %v364
    %v1741 = vunpack.c.l.b16 %v365
    %v1742 = vunpack.c.h.b16 %v365
    %v1743 = vunpack.c.l.b16 %v366
    %v1744 = vunpack.c.h.b16 %v366
    %v1745 = vunpack.c.l.b16 %v367
    %v1746 = vunpack.c.h.b16 %v367
    %v1747 = vunpack.c.l.b16 %v368
    %v1748 = vunpack.c.h.b16 %v368
    %v1749 = vunpack.c.l.b16 %v369
    %v1750 = vunpack.c.h.b16 %v369
    %v1751 = vunpack.c.l.b16 %v370
    %v1752 = vunpack.c.h.b16 %v370
    %v1753 = vunpack.c.l.b16 %v371
    %v1754 = vunpack.c.h.b16 %v371
    %v1755 = vunpack.c.l.b16 %v372
    %v1756 = vunpack.c.h.b16 %v372
    %v1757 = vunpack.c.l.b16 %v373
    %v1758 = vunpack.c.h.b16 %v373
    %v1759 = vunpack.c.l.b16 %v374
    %v1760 = vunpack.c.h.b16 %v374
    %v1761 = vunpack.c.l.b16 %v375
    %v1762 = vunpack.c.h.b16 %v375
    %v1763 = vunpack.c.l.b16 %v376
    %v1764 = vunpack.c.h.b16 %v376
    %v1765 = vunpack.c.l.b16 %v377
    %v1766 = vunpack.c.h.b16 %v377
    %v1767 = vunpack.c.l.b16 %v378
    %v1768 = vunpack.c.h.b16 %v378
    %v1769 = vunpack.c.l.b16 %v379
    %v1770 = vunpack.c.h.b16 %v379
    %v1771 = vunpack.c.l.b16 %v380
    %v1772 = vunpack.c.h.b16 %v380
    %v1773 = vunpack.c.l.b16 %v381
    %v1774 = vunpack.c.h.b16 %v381
    %v1775 = vunpack.c.l.b16 %v382
    %v1776 = vunpack.c.h.b16 %v382
    %v1777 = vunpack.c.l.b16 %v383
    %v1778 = vunpack.c.h.b16 %v383
    %v1779 = vunpack.c.l.b16 %v384
    %v1780 = vunpack.c.h.b16 %v384
    %v1781 = vunpack.c.l.b16 %v385
    %v1782 = vunpack.c.h.b16 %v385
    %v1783 = vunpack.c.l.b16 %v386
    %v1784 = vunpack.c.h.b16 %v386
    %v1785 = vunpack.c.l.b16 %v387
    %v1786 = vunpack.c.h.b16 %v387
    %v1787 = vunpack.c.l.b16 %v388
    %v1788 = vunpack.c.h.b16 %v388
    %v1789 = vunpack.c.l.b16 %v389
    %v1790 = vunpack.c.h.b16 %v389
    %v1791 = vunpack.c.l.b16 %v390
    %v1792 = vunpack.c.h.b16 %v390
    %v1793 = vunpack.c.l.b16 %v391
    %v1794 = vunpack.c.h.b16 %v391
    %v1795 = vunpack.c.l.b16 %v392
    %v1796 = vunpack.c.h.b16 %v392
    %v1797 = vunpack.c.l.b16 %v393
    %v1798 = vunpack.c.h.b16 %v393
    %v1799 = vunpack.c.l.b16 %v394
    %v1800 = vunpack.c.h.b16 %v394
    %v1801 = vunpack.c.l.b16 %v395
    %v1802 = vunpack.c.h.b16 %v395
    %v1803 = vunpack.c.l.b16 %v396
    %v1804 = vunpack.c.h.b16 %v396
    %v1805 = vunpack.c.l.b16 %v397
    %v1806 = vunpack.c.h.b16 %v397
    %v1807 = vunpack.c.l.b16 %v398
    %v1808 = vunpack.c.h.b16 %v398
    %v1809 = vunpack.c.l.b16 %v399
    %v1810 = vunpack.c.h.b16 %v399
    %v1811 = vunpack.c.l.b16 %v400
    %v1812 = vunpack.c.h.b16 %v400
    %v1813 = vunpack.c.l.b16 %v401
    %v1814 = vunpack.c.h.b16 %v401
    %v1815 = vunpack.c.l.b16 %v402
    %v1816 = vunpack.c.h.b16 %v402
    %v1817 = vunpack.c.l.b16 %v403
    %v1818 = vunpack.c.h.b16 %v403
    %v1819 = vunpack.c.l.b16 %v404
    %v1820 = vunpack.c.h.b16 %v404
    %v1821 = vunpack.c.l.b16 %v405
    %v1822 = vunpack.c.h.b16 %v405
    %v1823 = vunpack.c.l.b16 %v406
    %v1824 = vunpack.c.h.b16 %v406
    %v1825 = vunpack.c.l.b16 %v407
    %v1826 = vunpack.c.h.b16 %v407
    %v1827 = vunpack.c.l.b16 %v408
    %v1828 = vunpack.c.h.b16 %v408
    %v1829 = vunpack.c.l.b16 %v409
    %v1830 = vunpack.c.h.b16 %v409
    %v1831 = vunpack.c.l.b16 %v410
    %v1832 = vunpack.c.h.b16 %v410
    %v1833 = vunpack.c.l.b16 %v411
    %v1834 = vunpack.c.h.b16 %v411
    %v1835 = vunpack.c.l.b16 %v412
    %v1836 = vunpack.c.h.b16 %v412
    %v1837 = vunpack.c.l.b16 %v413
    %v1838 = vunpack.c.h.b16 %v413
    %v1839 = vunpack.c.l.b16 %v414
    %v1840 = vunpack.c.h.b16 %v414
    %v1841 = vunpack.c.l.b16 %v415
    %v1842 = vunpack.c.h.b16 %v415
    %v1843 = vunpack.c.l.b16 %v416
    %v1844 = vunpack.c.h.b16 %v416
    %v1845 = vunpack.c.l.b16 %v417
    %v1846 = vunpack.c.h.b16 %v417
    %v1847 = vunpack.c.l.b16 %v418
    %v1848 = vunpack.c.h.b16 %v418
    %v1849 = vunpack.c.l.b16 %v419
    %v1850 = vunpack.c.h.b16 %v419
    %v1851 = vunpack.c.l.b16 %v420
    %v1852 = vunpack.c.h.b16 %v420
    %v1853 = vunpack.c.l.b16 %v421
    %v1854 = vunpack.c.h.b16 %v421
    %v1855 = vunpack.c.l.b16 %v422
    %v1856 = vunpack.c.h.b16 %v422
    %v1857 = vunpack.c.l.b16 %v423
    %v1858 = vunpack.c.h.b16 %v423
    %v1859 = vunpack.c.l.b16 %v424
    %v1860 = vunpack.c.h.b16 %v424
    %v1861 = vunpack.c.l.b16 %v425
    %v1862 = vunpack.c.h.b16 %v425
    %v1863 = vunpack.c.l.b16 %v426
    %v1864 = vunpack.c.h.b16 %v426
    %v1865 = vunpack.c.l.b16 %v427
    %v1866 = vunpack.c.h.b16 %v427
    %v1867 = vunpack.c.l.b16 %v428
    %v1868 = vunpack.c.h.b16 %v428
    %v1869 = vunpack.c.l.b16 %v429
    %v1870 = vunpack.c.h.b16 %v429
    %v1871 = vunpack.c.l.b16 %v430
    %v1872 = vunpack.c.h.b16 %v430
    %v1873 = vunpack.c.l.b16 %v431
    %v1874 = vunpack.c.h.b16 %v431
    %v1875 = vunpack.c.l.b16 %v432
    %v1876 = vunpack.c.h.b16 %v432
    %v1877 = vunpack.c.l.b16 %v433
    %v1878 = vunpack.c.h.b16 %v433
    %v1879 = vunpack.c.l.b16 %v434
    %v1880 = vunpack.c.h.b16 %v434
    %v1881 = vunpack.c.l.b16 %v435
    %v1882 = vunpack.c.h.b16 %v435
    %v1883 = vunpack.c.l.b16 %v436
    %v1884 = vunpack.c.h.b16 %v436
    %v1885 = vunpack.c.l.b16 %v437
    %v1886 = vunpack.c.h.b16 %v437
    %v1887 = vunpack.c.l.b16 %v438
    %v1888 = vunpack.c.h.b16 %v438
    %v1889 = vunpack.c.l.b16 %v439
    %v1890 = vunpack.c.h.b16 %v439
    %v1891 = vunpack.c.l.b16 %v440
    %v1892 = vunpack.c.h.b16 %v440
    %v1893 = vunpack.c.l.b16 %v441
    %v1894 = vunpack.c.h.b16 %v441
    %v1895 = vunpack.c.l.b16 %v442
    %v1896 = vunpack.c.h.b16 %v442
    %v1897 = vunpack.c.l.b16 %v443
    %v1898 = vunpack.c.h.b16 %v443
    %v1899 = vunpack.c.l.b16 %v444
    %v1900 = vunpack.c.h.b16 %v444
    %v1901 = vunpack.c.l.b16 %v445
    %v1902 = vunpack.c.h.b16 %v445
    %v1903 = vunpack.c.l.b16 %v446
    %v1904 = vunpack.c.h.b16 %v446
    %v1905 = vunpack.c.l.b16 %v447
    %v1906 = vunpack.c.h.b16 %v447
    %v1907 = vunpack.c.l.b16 %v448
    %v1908 = vunpack.c.h.b16 %v448
    %v1909 = vunpack.c.l.b16 %v449
    %v1910 = vunpack.c.h.b16 %v449
    %v1911 = vunpack.c.l.b16 %v450
    %v1912 = vunpack.c.h.b16 %v450
    %v1913 = vunpack.c.l.b16 %v451
    %v1914 = vunpack.c.h.b16 %v451
    %v1915 = vunpack.c.l.b16 %v452
    %v1916 = vunpack.c.h.b16 %v452
    %v1917 = vunpack.c.l.b16 %v453
    %v1918 = vunpack.c.h.b16 %v453
    %v1919 = vunpack.c.l.b16 %v454
    %v1920 = vunpack.c.h.b16 %v454
    %v1921 = vunpack.c.l.b16 %v455
    %v1922 = vunpack.c.h.b16 %v455
    %v1923 = vunpack.c.l.b16 %v456
    %v1924 = vunpack.c.h.b16 %v456
    %v1925 = vunpack.c.l.b16 %v457
    %v1926 = vunpack.c.h.b16 %v457
    %v1927 = vunpack.c.l.b16 %v458
    %v1928 = vunpack.c.h.b16 %v458
    %v1929 = vunpack.c.l.b16 %v459
    %v1930 = vunpack.c.h.b16 %v459
    %v1931 = vunpack.c.l.b16 %v460
    %v1932 = vunpack.c.h.b16 %v460
    %v1933 = vunpack.c.l.b16 %v461
    %v1934 = vunpack.c.h.b16 %v461
    %v1935 = vunpack.c.l.b16 %v462
    %v1936 = vunpack.c.h.b16 %v462
    %v1937 = vunpack.c.l.b16 %v463
    %v1938 = vunpack.c.h.b16 %v463
    %v1939 = vunpack.c.l.b16 %v464
    %v1940 = vunpack.c.h.b16 %v464
    %v1941 = vunpack.c.l.b16 %v465
    %v1942 = vunpack.c.h.b16 %v465
    %v1943 = vunpack.c.l.b16 %v466
    %v1944 = vunpack.c.h.b16 %v466
    %v1945 = vunpack.c.l.b16 %v467
    %v1946 = vunpack.c.h.b16 %v467
    %v1947 = vunpack.c.l.b16 %v468
    %v1948 = vunpack.c.h.b16 %v468
    %v1949 = vunpack.c.l.b16 %v469
    %v1950 = vunpack.c.h.b16 %v469
    %v1951 = vunpack.c.l.b16 %v470
    %v1952 = vunpack.c.h.b16 %v470
    %v1953 = vunpack.c.l.b16 %v471
    %v1954 = vunpack.c.h.b16 %v471
    %v1955 = vunpack.c.l.b16 %v472
    %v1956 = vunpack.c.h.b16 %v472
    %v1957 = vunpack.c.l.b16 %v473
    %v1958 = vunpack.c.h.b16 %v473
    %v1959 = vunpack.c.l.b16 %v474
    %v1960 = vunpack.c.h.b16 %v474
    %v1961 = vunpack.c.l.b16 %v475
    %v1962 = vunpack.c.h.b16 %v475
    %v1963 = vunpack.c.l.b16 %v476
    %v1964 = vunpack.c.h.b16 %v476
    %v1965 = vunpack.c.l.b16 %v477
    %v1966 = vunpack.c.h.b16 %v477
    %v1967 = vunpack.c.l.b16 %v478
    %v1968 = vunpack.c.h.b16 %v478
    %v1969 = vunpack.c.l.b16 %v479
    %v1970 = vunpack.c.h.b16 %v479
    %v1971 = vunpack.c.l.b16 %v480
    %v1972 = vunpack.c.h.b16 %v480
    %v1973 = vunpack.c.l.b16 %v481
    %v1974 = vunpack.c.h.b16 %v481
    %v1975 = vunpack.c.l.b16 %v482
    %v1976 = vunpack.c.h.b16 %v482
    %v1977 = vunpack.c.l.b16 %v483
    %v1978 = vunpack.c.h.b16 %v483
    %v1979 = vunpack.c.l.b16 %v484
    %v1980 = vunpack.c.h.b16 %v484
    %v1981 = vunpack.c.l.b16 %v485
    %v1982 = vunpack.c.h.b16 %v485
    %v1983 = vunpack.c.l.b16 %v486
    %v1984 = vunpack.c.h.b16 %v486
    %v1985 = vunpack.c.l.b16 %v487
    %v1986 = vunpack.c.h.b16 %v487
    %v1987 = vunpack.c.l.b16 %v488
    %v1988 = vunpack.c.h.b16 %v488
    %v1989 = vunpack.c.l.b16 %v489
    %v1990 = vunpack.c.h.b16 %v489
    %v1991 = vunpack.c.l.b16 %v490
    %v1992 = vunpack.c.h.b16 %v490
    %v1993 = vunpack.c.l.b16 %v491
    %v1994 = vunpack.c.h.b16 %v491
    %v1995 = vunpack.c.l.b16 %v492
    %v1996 = vunpack.c.h.b16 %v492
    %v1997 = vunpack.c.l.b16 %v493
    %v1998 = vunpack.c.h.b16 %v493
    %v1999 = vunpack.c.l.b16 %v494
    %v2000 = vunpack.c.h.b16 %v494
    %v2001 = vunpack.c.l.b16 %v495
    %v2002 = vunpack.c.h.b16 %v495
    %v2003 = vunpack.c.l.b16 %v496
    %v2004 = vunpack.c.h.b16 %v496
    %v2005 = vunpack.c.l.b16 %v497
    %v2006 = vunpack.c.h.b16 %v497
    %v2007 = vunpack.c.l.b16 %v498
    %v2008 = vunpack.c.h.b16 %v498
    %v2009 = vunpack.c.l.b16 %v499
    %v2010 = vunpack.c.h.b16 %v499
    %v2011 = vunpack.c.l.b16 %v500
    %v2012 = vunpack.c.h.b16 %v500
    %v2013 = vunpack.c.l.b16 %v501
    %v2014 = vunpack.c.h.b16 %v501
    %v2015 = vunpack.c.l.b16 %v502
    %v2016 = vunpack.c.h.b16 %v502
    %v2017 = vunpack.c.l.b16 %v503
    %v2018 = vunpack.c.h.b16 %v503
    %v2019 = vunpack.c.l.b16 %v504
    %v2020 = vunpack.c.h.b16 %v504
    %v2021 = vunpack.c.l.b16 %v505
    %v2022 = vunpack.c.h.b16 %v505
    %v2023 = vunpack.c.l.b16 %v506
    %v2024 = vunpack.c.h.b16 %v506
    %v2025 = vunpack.c.l.b16 %v507
    %v2026 = vunpack.c.h.b16 %v507
    %v2027 = vunpack.c.l.b16 %v508
    %v2028 = vunpack.c.h.b16 %v508
    %v2029 = vunpack.c.l.b16 %v509
    %v2030 = vunpack.c.h.b16 %v509
    %v2031 = vunpack.c.l.b16 %v510
    %v2032 = vunpack.c.h.b16 %v510
    %v2033 = vunpack.c.l.b16 %v511
    %v2034 = vunpack.c.h.b16 %v511
    %v2035 = vunpack.c.l.b16 %v512
    %v2036 = vunpack.c.h.b16 %v512
    %v2037 = vunpack.c.l.b16 %v513
    %v2038 = vunpack.c.h.b16 %v513
    %v2039 = vunpack.c.l.b16 %v514
    %v2040 = vunpack.c.h.b16 %v514
    %v2041 = vunpack.c.l.b16 %v515
    %v2042 = vunpack.c.h.b16 %v515
    %v2043 = vunpack.c.l.b16 %v516
    %v2044 = vunpack.c.h.b16 %v516
    %v2045 = vunpack.c.l.b16 %v517
    %v2046 = vunpack.c.h.b16 %v517
    %v2047 = vunpack.c.l.b16 %v518
    %v2048 = vunpack.c.h.b16 %v518
    %v2049 = vunpack.c.l.b16 %v519
    %v2050 = vunpack.c.h.b16 %v519
    %v2051 = vunpack.c.l.b16 %v520
    %v2052 = vunpack.c.h.b16 %v520
    %v2053 = vunpack.c.l.b16 %v521
    %v2054 = vunpack.c.h.b16 %v521
    %v2055 = vunpack.c.l.b16 %v522
    %v2056 = vunpack.c.h.b16 %v522
    %v2057 = vunpack.c.l.b16 %v523
    %v2058 = vunpack.c.h.b16 %v523
    %v2059 = vunpack.c.l.b16 %v524
    %v2060 = vunpack.c.h.b16 %v524
    %v2061 = vunpack.c.l.b16 %v525
    %v2062 = vunpack.c.h.b16 %v525
    %v2063 = vunpack.c.l.b16 %v526
    %v2064 = vunpack.c.h.b16 %v526
    %v2065 = vunpack.c.l.b16 %v527
    %v2066 = vunpack.c.h.b16 %v527
    %v2067 = vunpack.c.l.b16 %v528
    %v2068 = vunpack.c.h.b16 %v528
    %v2069 = vunpack.c.l.b16 %v529
    %v2070 = vunpack.c.h.b16 %v529
    %v2071 = vunpack.c.l.b16 %v530
    %v2072 = vunpack.c.h.b16 %v530
    %v2073 = vunpack.c.l.b16 %v531
    %v2074 = vunpack.c.h.b16 %v531
    %v2075 = vunpack.c.l.b16 %v532
    %v2076 = vunpack.c.h.b16 %v532
    %v2077 = vunpack.c.l.b16 %v533
    %v2078 = vunpack.c.h.b16 %v533
    %v2079 = vunpack.c.l.b16 %v534
    %v2080 = vunpack.c.h.b16 %v534
    %v2081 = vunpack.c.l.b16 %v535
    %v2082 = vunpack.c.h.b16 %v535
    %v2083 = vunpack.c.l.b16 %v536
    %v2084 = vunpack.c.h.b16 %v536
    %v2085 = vunpack.c.l.b16 %v537
    %v2086 = vunpack.c.h.b16 %v537
    %v2087 = vunpack.c.l.b16 %v538
    %v2088 = vunpack.c.h.b16 %v538
    %v2089 = vunpack.c.l.b16 %v539
    %v2090 = vunpack.c.h.b16 %v539
    %v2091 = vunpack.c.l.b16 %v540
    %v2092 = vunpack.c.h.b16 %v540
    %v2093 = vunpack.c.l.b16 %v541
    %v2094 = vunpack.c.h.b16 %v541
    %v2095 = vunpack.c.l.b16 %v542
    %v2096 = vunpack.c.h.b16 %v542
    %v2097 = vunpack.c.l.b16 %v543
    %v2098 = vunpack.c.h.b16 %v543
    %v2099 = vunpack.c.l.b16 %v544
    %v2100 = vunpack.c.h.b16 %v544
    %v2101 = vunpack.c.l.b16 %v545
    %v2102 = vunpack.c.h.b16 %v545
    %v2103 = vunpack.c.l.b16 %v546
    %v2104 = vunpack.c.h.b16 %v546
    %v2105 = vunpack.c.l.b16 %v547
    %v2106 = vunpack.c.h.b16 %v547
    %v2107 = vunpack.c.l.b16 %v548
    %v2108 = vunpack.c.h.b16 %v548
    %v2109 = vunpack.c.l.b16 %v549
    %v2110 = vunpack.c.h.b16 %v549
    %v2111 = vunpack.c.l.b16 %v550
    %v2112 = vunpack.c.h.b16 %v550
    %v2113 = vunpack.c.l.b16 %v551
    %v2114 = vunpack.c.h.b16 %v551
    %v2115 = vunpack.c.l.b16 %v552
    %v2116 = vunpack.c.h.b16 %v552
    %v2117 = vunpack.c.l.b16 %v553
    %v2118 = vunpack.c.h.b16 %v553
    %v2119 = vunpack.c.l.b16 %v554
    %v2120 = vunpack.c.h.b16 %v554
    %v2121 = vunpack.c.l.b16 %v555
    %v2122 = vunpack.c.h.b16 %v555
    %v2123 = vunpack.c.l.b16 %v556
    %v2124 = vunpack.c.h.b16 %v556
    %v2125 = vunpack.c.l.b16 %v557
    %v2126 = vunpack.c.h.b16 %v557
    %v2127 = vunpack.c.l.b16 %v558
    %v2128 = vunpack.c.h.b16 %v558
    %v2129 = vunpack.c.l.b16 %v559
    %v2130 = vunpack.c.h.b16 %v559
    %v2131 = vunpack.c.l.b16 %v560
    %v2132 = vunpack.c.h.b16 %v560
    %v2133 = vunpack.c.l.b16 %v561
    %v2134 = vunpack.c.h.b16 %v561
    %v2135 = vunpack.c.l.b16 %v562
    %v2136 = vunpack.c.h.b16 %v562
    %v2137 = vunpack.c.l.b16 %v563
    %v2138 = vunpack.c.h.b16 %v563
    %v2139 = vunpack.c.l.b16 %v564
    %v2140 = vunpack.c.h.b16 %v564
    %v2141 = vunpack.c.l.b16 %v565
    %v2142 = vunpack.c.h.b16 %v565
    %v2143 = vunpack.c.l.b16 %v566
    %v2144 = vunpack.c.h.b16 %v566
    %v2145 = vunpack.c.l.b16 %v567
    %v2146 = vunpack.c.h.b16 %v567
    %v2147 = vunpack.c.l.b16 %v568
    %v2148 = vunpack.c.h.b16 %v568
    %v2149 = vunpack.c.l.b16 %v569
    %v2150 = vunpack.c.h.b16 %v569
    %v2151 = vunpack.c.l.b16 %v570
    %v2152 = vunpack.c.h.b16 %v570
    %v2153 = vunpack.c.l.b16 %v571
    %v2154 = vunpack.c.h.b16 %v571
    %v2155 = vunpack.c.l.b16 %v572
    %v2156 = vunpack.c.h.b16 %v572
    %v2157 = vunpack.c.l.b16 %v573
    %v2158 = vunpack.c.h.b16 %v573
    %v2159 = vunpack.c.l.b16 %v574
    %v2160 = vunpack.c.h.b16 %v574
    %v2161 = vunpack.c.l.b16 %v575
    %v2162 = vunpack.c.h.b16 %v575
    %v2163 = vunpack.c.l.b16 %v576
    %v2164 = vunpack.c.h.b16 %v576
    %v2165 = vunpack.c.l.b16 %v577
    %v2166 = vunpack.c.h.b16 %v577
    %v2167 = vunpack.c.l.b16 %v578
    %v2168 = vunpack.c.h.b16 %v578
    %v2169 = vunpack.c.l.b16 %v579
    %v2170 = vunpack.c.h.b16 %v579
    %v2171 = vunpack.c.l.b16 %v580
    %v2172 = vunpack.c.h.b16 %v580
    %v2173 = vunpack.c.l.b16 %v581
    %v2174 = vunpack.c.h.b16 %v581
    %v2175 = vunpack.c.l.b16 %v582
    %v2176 = vunpack.c.h.b16 %v582
    %v2177 = vunpack.c.l.b16 %v583
    %v2178 = vunpack.c.h.b16 %v583
    %v2179 = vunpack.c.l.b16 %v584
    %v2180 = vunpack.c.h.b16 %v584
    %v2181 = vunpack.c.l.b16 %v585
    %v2182 = vunpack.c.h.b16 %v585
    %v2183 = vunpack.c.l.b16 %v586
    %v2184 = vunpack.c.h.b16 %v586
    %v2185 = vunpack.c.l.b16 %v587
    %v2186 = vunpack.c.h.b16 %v587
    %v2187 = vunpack.c.l.b16 %v588
    %v2188 = vunpack.c.h.b16 %v588
    %v2189 = vunpack.c.l.b16 %v589
    %v2190 = vunpack.c.h.b16 %v589
    %v2191 = vunpack.c.l.b16 %v590
    %v2192 = vunpack.c.h.b16 %v590
    %v2193 = vunpack.c.l.b16 %v591
    %v2194 = vunpack.c.h.b16 %v591
    %v2195 = vunpack.c.l.b16 %v592
    %v2196 = vunpack.c.h.b16 %v592
    %v2197 = vunpack.c.l.b16 %v593
    %v2198 = vunpack.c.h.b16 %v593
    %v2199 = vunpack.c.l.b16 %v594
    %v2200 = vunpack.c.h.b16 %v594
    %v2201 = vunpack.c.l.b16 %v595
    %v2202 = vunpack.c.h.b16 %v595
    %v2203 = vunpack.c.l.b16 %v596
    %v2204 = vunpack.c.h.b16 %v596
    %v2205 = vunpack.c.l.b16 %v597
    %v2206 = vunpack.c.h.b16 %v597
    %v2207 = vunpack.c.l.b16 %v598
    %v2208 = vunpack.c.h.b16 %v598
    %v2209 = vunpack.c.l.b16 %v599
    %v2210 = vunpack.c.h.b16 %v599
    %v2211 = vunpack.c.l.b16 %v600
    %v2212 = vunpack.c.h.b16 %v600
    %v2213 = vunpack.c.l.b16 %v601
    %v2214 = vunpack.c.h.b16 %v601
    %v2215 = vunpack.c.l.b16 %v602
    %v2216 = vunpack.c.h.b16 %v602
    %v2217 = vpack.c.b16 %v1197, %v1193
    %v2218 = vpack.c.b16 %v1198, %v1194
    %v2219 = vpack.c.b16 %v1199, %v1195
    %v2220 = vpack.c.b16 %v1200, %v1196
    %v2221 = vpack.c.b16 %v1205, %v1201
    %v2222 = vpack.c.b16 %v1206, %v1202
    %v2223 = vpack.c.b16 %v1207, %v1203
    %v2224 = vpack.c.b16 %v1208, %v1204
    %v2225 = vpack.c.b16 %v1213, %v1209
    %v2226 = vpack.c.b16 %v1214, %v1210
    %v2227 = vpack.c.b16 %v1215, %v1211
    %v2228 = vpack.c.b16 %v1216, %v1212
    %v2229 = vpack.c.b16 %v1221, %v1217
    %v2230 = vpack.c.b16 %v1222, %v1218
    %v2231 = vpack.c.b16 %v1223, %v1219
    %v2232 = vpack.c.b16 %v1224, %v1220
    %v2233 = vpack.c.b16 %v1229, %v1225
    %v2234 = vpack.c.b16 %v1230, %v1226
    %v2235 = vpack.c.b16 %v1231, %v1227
    %v2236 = vpack.c.b16 %v1232, %v1228
    %v2237 = vpack.c.b16 %v1237, %v1233
    %v2238 = vpack.c.b16 %v1238, %v1234
    %v2239 = vpack.c.b16 %v1239, %v1235
    %v2240 = vpack.c.b16 %v1240, %v1236
    %v2241 = vpack.c.b16 %v1245, %v1241
    %v2242 = vpack.c.b16 %v1246, %v1242
    %v2243 = vpack.c.b16 %v1247, %v1243
    %v2244 = vpack.c.b16 %v1248, %v1244
    %v2245 = vpack.c.b16 %v1253, %v1249
    %v2246 = vpack.c.b16 %v1254, %v1250
    %v2247 = vpack.c.b16 %v1255, %v1251
    %v2248 = vpack.c.b16 %v1256, %v1252
    %v2249 = vpack.c.b16 %v1261, %v1257
    %v2250 = vpack.c.b16 %v1262, %v1258
    %v2251 = vpack.c.b16 %v1263, %v1259
    %v2252 = vpack.c.b16 %v1264, %v1260
    %v2253 = vpack.c.b16 %v1269, %v1265
    %v2254 = vpack.c.b16 %v1270, %v1266
    %v2255 = vpack.c.b16 %v1271, %v1267
    %v2256 = vpack.c.b16 %v1272, %v1268
    %v2257 = vpack.c.b16 %v1277, %v1273
    %v2258 = vpack.c.b16 %v1278, %v1274
    %v2259 = vpack.c.b16 %v1279, %v1275
    %v2260 = vpack.c.b16 %v1280, %v1276
    %v2261 = vpack.c.b16 %v1285, %v1281
    %v2262 = vpack.c.b16 %v1286, %v1282
    %v2263 = vpack.c.b16 %v1287, %v1283
    %v2264 = vpack.c.b16 %v1288, %v1284
    %v2265 = vpack.c.b16 %v1293, %v1289
    %v2266 = vpack.c.b16 %v1294, %v1290
    %v2267 = vpack.c.b16 %v1295, %v1291
    %v2268 = vpack.c.b16 %v1296, %v1292
    %v2269 = vpack.c.b16 %v1301, %v1297
    %v2270 = vpack.c.b16 %v1302, %v1298
    %v2271 = vpack.c.b16 %v1303, %v1299
    %v2272 = vpack.c.b16 %v1304, %v1300
    %v2273 = vpack.c.b16 %v1309, %v1305
    %v2274 = vpack.c.b16 %v1310, %v1306
    %v2275 = vpack.c.b16 %v1311, %v1307
    %v2276 = vpack.c.b16 %v1312, %v1308
    %v2277 = vpack.c.b16 %v1317, %v1313
    %v2278 = vpack.c.b16 %v1318, %v1314
    %v2279 = vpack.c.b16 %v1319, %v1315
    %v2280 = vpack.c.b16 %v1320, %v1316
    %v2281 = vpack.c.b16 %v1325, %v1321
    %v2282 = vpack.c.b16 %v1326, %v1322
    %v2283 = vpack.c.b16 %v1327, %v1323
    %v2284 = vpack.c.b16 %v1328, %v1324
    %v2285 = vpack.c.b16 %v1333, %v1329
    %v2286 = vpack.c.b16 %v1334, %v1330
    %v2287 = vpack.c.b16 %v1335, %v1331
    %v2288 = vpack.c.b16 %v1336, %v1332
    %v2289 = vpack.c.b16 %v1341, %v1337
    %v2290 = vpack.c.b16 %v1342, %v1338
    %v2291 = vpack.c.b16 %v1343, %v1339
    %v2292 = vpack.c.b16 %v1344, %v1340
    %v2293 = vpack.c.b16 %v1349, %v1345
    %v2294 = vpack.c.b16 %v1350, %v1346
    %v2295 = vpack.c.b16 %v1351, %v1347
    %v2296 = vpack.c.b16 %v1352, %v1348
    %v2297 = vpack.c.b16 %v1357, %v1353
    %v2298 = vpack.c.b16 %v1358, %v1354
    %v2299 = vpack.c.b16 %v1359, %v1355
    %v2300 = vpack.c.b16 %v1360, %v1356
    %v2301 = vpack.c.b16 %v1365, %v1361
    %v2302 = vpack.c.b16 %v1366, %v1362
    %v2303 = vpack.c.b16 %v1367, %v1363
    %v2304 = vpack.c.b16 %v1368, %v1364
    %v2305 = vpack.c.b16 %v1373, %v1369
    %v2306 = vpack.c.b16 %v1374, %v1370
    %v2307 = vpack.c.b16 %v1375, %v1371
    %v2308 = vpack.c.b16 %v1376, %v1372
    %v2309 = vpack.c.b16 %v1381, %v1377
    %v2310 = vpack.c.b16 %v1382, %v1378
    %v2311 = vpack.c.b16 %v1383, %v1379
    %v2312 = vpack.c.b16 %v1384, %v1380
    %v2313 = vpack.c.b16 %v1389, %v1385
    %v2314 = vpack.c.b16 %v1390, %v1386
    %v2315 = vpack.c.b16 %v1391, %v1387
    %v2316 = vpack.c.b16 %v1392, %v1388
    %v2317 = vpack.c.b16 %v1397, %v1393
    %v2318 = vpack.c.b16 %v1398, %v1394
    %v2319 = vpack.c.b16 %v1399, %v1395
    %v2320 = vpack.c.b16 %v1400, %v1396
    %v2321 = vpack.c.b16 %v1405, %v1401
    %v2322 = vpack.c.b16 %v1406, %v1402
    %v2323 = vpack.c.b16 %v1407, %v1403
    %v2324 = vpack.c.b16 %v1408, %v1404
    %v2325 = vpack.c.b16 %v1413, %v1409
    %v2326 = vpack.c.b16 %v1414, %v1410
    %v2327 = vpack.c.b16 %v1415, %v1411
    %v2328 = vpack.c.b16 %v1416, %v1412
    %v2329 = vpack.c.b16 %v1421, %v1417
    %v2330 = vpack.c.b16 %v1422, %v1418
    %v2331 = vpack.c.b16 %v1423, %v1419
    %v2332 = vpack.c.b16 %v1424, %v1420
    %v2333 = vpack.c.b16 %v1429, %v1425
    %v2334 = vpack.c.b16 %v1430, %v1426
    %v2335 = vpack.c.b16 %v1431, %v1427
    %v2336 = vpack.c.b16 %v1432, %v1428
    %v2337 = vpack.c.b16 %v1437, %v1433
    %v2338 = vpack.c.b16 %v1438, %v1434
    %v2339 = vpack.c.b16 %v1439, %v1435
    %v2340 = vpack.c.b16 %v1440, %v1436
    %v2341 = vpack.c.b16 %v1445, %v1441
    %v2342 = vpack.c.b16 %v1446, %v1442
    %v2343 = vpack.c.b16 %v1447, %v1443
    %v2344 = vpack.c.b16 %v1448, %v1444
    %v2345 = vpack.c.b16 %v1453, %v1449
    %v2346 = vpack.c.b16 %v1454, %v1450
    %v2347 = vpack.c.b16 %v1455, %v1451
    %v2348 = vpack.c.b16 %v1456, %v1452
    %v2349 = vpack.c.b16 %v1461, %v1457
    %v2350 = vpack.c.b16 %v1462, %v1458
    %v2351 = vpack.c.b16 %v1463, %v1459
    %v2352 = vpack.c.b16 %v1464, %v1460
    %v2353 = vpack.c.b16 %v1469, %v1465
    %v2354 = vpack.c.b16 %v1470, %v1466
    %v2355 = vpack.c.b16 %v1471, %v1467
    %v2356 = vpack.c.b16 %v1472, %v1468
    %v2357 = vpack.c.b16 %v1477, %v1473
    %v2358 = vpack.c.b16 %v1478, %v1474
    %v2359 = vpack.c.b16 %v1479, %v1475
    %v2360 = vpack.c.b16 %v1480, %v1476
    %v2361 = vpack.c.b16 %v1485, %v1481
    %v2362 = vpack.c.b16 %v1486, %v1482
    %v2363 = vpack.c.b16 %v1487, %v1483
    %v2364 = vpack.c.b16 %v1488, %v1484
    %v2365 = vpack.c.b16 %v1493, %v1489
    %v2366 = vpack.c.b16 %v1494, %v1490
    %v2367 = vpack.c.b16 %v1495, %v1491
    %v2368 = vpack.c.b16 %v1496, %v1492
    %v2369 = vpack.c.b16 %v1501, %v1497
    %v2370 = vpack.c.b16 %v1502, %v1498
    %v2371 = vpack.c.b16 %v1503, %v1499
    %v2372 = vpack.c.b16 %v1504, %v1500
    %v2373 = vpack.c.b16 %v1509, %v1505
    %v2374 = vpack.c.b16 %v1510, %v1506
    %v2375 = vpack.c.b16 %v1511, %v1507
    %v2376 = vpack.c.b16 %v1512, %v1508
    %v2377 = vpack.c.b16 %v1517, %v1513
    %v2378 = vpack.c.b16 %v1518, %v1514
    %v2379 = vpack.c.b16 %v1519, %v1515
    %v2380 = vpack.c.b16 %v1520, %v1516
    %v2381 = vpack.c.b16 %v1525, %v1521
    %v2382 = vpack.c.b16 %v1526, %v1522
    %v2383 = vpack.c.b16 %v1527, %v1523
    %v2384 = vpack.c.b16 %v1528, %v1524
    %v2385 = vpack.c.b16 %v1533, %v1529
    %v2386 = vpack.c.b16 %v1534, %v1530
    %v2387 = vpack.c.b16 %v1535, %v1531
    %v2388 = vpack.c.b16 %v1536, %v1532
    %v2389 = vpack.c.b16 %v1541, %v1537
    %v2390 = vpack.c.b16 %v1542, %v1538
    %v2391 = vpack.c.b16 %v1543, %v1539
    %v2392 = vpack.c.b16 %v1544, %v1540
    %v2393 = vpack.c.b16 %v1549, %v1545
    %v2394 = vpack.c.b16 %v1550, %v1546
    %v2395 = vpack.c.b16 %v1551, %v1547
    %v2396 = vpack.c.b16 %v1552, %v1548
    %v2397 = vpack.c.b16 %v1557, %v1553
    %v2398 = vpack.c.b16 %v1558, %v1554
    %v2399 = vpack.c.b16 %v1559, %v1555
    %v2400 = vpack.c.b16 %v1560, %v1556
    %v2401 = vpack.c.b16 %v1565, %v1561
    %v2402 = vpack.c.b16 %v1566, %v1562
    %v2403 = vpack.c.b16 %v1567, %v1563
    %v2404 = vpack.c.b16 %v1568, %v1564
    %v2405 = vpack.c.b16 %v1573, %v1569
    %v2406 = vpack.c.b16 %v1574, %v1570
    %v2407 = vpack.c.b16 %v1575, %v1571
    %v2408 = vpack.c.b16 %v1576, %v1572
    %v2409 = vpack.c.b16 %v1581, %v1577
    %v2410 = vpack.c.b16 %v1582, %v1578
    %v2411 = vpack.c.b16 %v1583, %v1579
    %v2412 = vpack.c.b16 %v1584, %v1580
    %v2413 = vpack.c.b16 %v1589, %v1585
    %v2414 = vpack.c.b16 %v1590, %v1586
    %v2415 = vpack.c.b16 %v1591, %v1587
    %v2416 = vpack.c.b16 %v1592, %v1588
    %v2417 = vpack.c.b16 %v1597, %v1593
    %v2418 = vpack.c.b16 %v1598, %v1594
    %v2419 = vpack.c.b16 %v1599, %v1595
    %v2420 = vpack.c.b16 %v1600, %v1596
    %v2421 = vpack.c.b16 %v1605, %v1601
    %v2422 = vpack.c.b16 %v1606, %v1602
    %v2423 = vpack.c.b16 %v1607, %v1603
    %v2424 = vpack.c.b16 %v1608, %v1604
    %v2425 = vpack.c.b16 %v1613, %v1609
    %v2426 = vpack.c.b16 %v1614, %v1610
    %v2427 = vpack.c.b16 %v1615, %v1611
    %v2428 = vpack.c.b16 %v1616, %v1612
    %v2429 = vpack.c.b16 %v1621, %v1617
    %v2430 = vpack.c.b16 %v1622, %v1618
    %v2431 = vpack.c.b16 %v1623, %v1619
    %v2432 = vpack.c.b16 %v1624, %v1620
    %v2433 = vpack.c.b16 %v1629, %v1625
    %v2434 = vpack.c.b16 %v1630, %v1626
    %v2435 = vpack.c.b16 %v1631, %v1627
    %v2436 = vpack.c.b16 %v1632, %v1628
    %v2437 = vpack.c.b16 %v1637, %v1633
    %v2438 = vpack.c.b16 %v1638, %v1634
    %v2439 = vpack.c.b16 %v1639, %v1635
    %v2440 = vpack.c.b16 %v1640, %v1636
    %v2441 = vpack.c.b16 %v1645, %v1641
    %v2442 = vpack.c.b16 %v1646, %v1642
    %v2443 = vpack.c.b16 %v1647, %v1643
    %v2444 = vpack.c.b16 %v1648, %v1644
    %v2445 = vpack.c.b16 %v1653, %v1649
    %v2446 = vpack.c.b16 %v1654, %v1650
    %v2447 = vpack.c.b16 %v1655, %v1651
    %v2448 = vpack.c.b16 %v1656, %v1652
    %v2449 = vpack.c.b16 %v1661, %v1657
    %v2450 = vpack.c.b16 %v1662, %v1658
    %v2451 = vpack.c.b16 %v1663, %v1659
    %v2452 = vpack.c.b16 %v1664, %v1660
    %v2453 = vpack.c.b16 %v1669, %v1665
    %v2454 = vpack.c.b16 %v1670, %v1666
    %v2455 = vpack.c.b16 %v1671, %v1667
    %v2456 = vpack.c.b16 %v1672, %v1668
    %v2457 = vpack.c.b16 %v1677, %v1673
    %v2458 = vpack.c.b16 %v1678, %v1674
    %v2459 = vpack.c.b16 %v1679, %v1675
    %v2460 = vpack.c.b16 %v1680, %v1676
    %v2461 = vpack.c.b16 %v1685, %v1681
    %v2462 = vpack.c.b16 %v1686, %v1682
    %v2463 = vpack.c.b16 %v1687, %v1683
    %v2464 = vpack.c.b16 %v1688, %v1684
    %v2465 = vpack.c.b16 %v1693, %v1689
    %v2466 = vpack.c.b16 %v1694, %v1690
    %v2467 = vpack.c.b16 %v1695, %v1691
    %v2468 = vpack.c.b16 %v1696, %v1692
    %v2469 = vpack.c.b16 %v1701, %v1697
    %v2470 = vpack.c.b16 %v1702, %v1698
    %v2471 = vpack.c.b16 %v1703, %v1699
    %v2472 = vpack.c.b16 %v1704, %v1700
    %v2473 = vpack.c.b16 %v1709, %v1705
    %v2474 = vpack.c.b16 %v1710, %v1706
    %v2475 = vpack.c.b16 %v1711, %v1707
    %v2476 = vpack.c.b16 %v1712, %v1708
    %v2477 = vpack.c.b16 %v1717, %v1713
    %v2478 = vpack.c.b16 %v1718, %v1714
    %v2479 = vpack.c.b16 %v1719, %v1715
    %v2480 = vpack.c.b16 %v1720, %v1716
    %v2481 = vpack.c.b16 %v1725, %v1721
    %v2482 = vpack.c.b16 %v1726, %v1722
    %v2483 = vpack.c.b16 %v1727, %v1723
    %v2484 = vpack.c.b16 %v1728, %v1724
    %v2485 = vpack.c.b16 %v1733, %v1729
    %v2486 = vpack.c.b16 %v1734, %v1730
    %v2487 = vpack.c.b16 %v1735, %v1731
    %v2488 = vpack.c.b16 %v1736, %v1732
    %v2489 = vpack.c.b16 %v1741, %v1737
    %v2490 = vpack.c.b16 %v1742, %v1738
    %v2491 = vpack.c.b16 %v1743, %v1739
    %v2492 = vpack.c.b16 %v1744, %v1740
    %v2493 = vpack.c.b16 %v1749, %v1745
    %v2494 = vpack.c.b16 %v1750, %v1746
    %v2495 = vpack.c.b16 %v1751, %v1747
    %v2496 = vpack.c.b16 %v1752, %v1748
    %v2497 = vpack.c.b16 %v1757, %v1753
    %v2498 = vpack.c.b16 %v1758, %v1754
    %v2499 = vpack.c.b16 %v1759, %v1755
    %v2500 = vpack.c.b16 %v1760, %v1756
    %v2501 = vpack.c.b16 %v1765, %v1761
    %v2502 = vpack.c.b16 %v1766, %v1762
    %v2503 = vpack.c.b16 %v1767, %v1763
    %v2504 = vpack.c.b16 %v1768, %v1764
    %v2505 = vpack.c.b16 %v1773, %v1769
    %v2506 = vpack.c.b16 %v1774, %v1770
    %v2507 = vpack.c.b16 %v1775, %v1771
    %v2508 = vpack.c.b16 %v1776, %v1772
    %v2509 = vpack.c.b16 %v1781, %v1777
    %v2510 = vpack.c.b16 %v1782, %v1778
    %v2511 = vpack.c.b16 %v1783, %v1779
    %v2512 = vpack.c.b16 %v1784, %v1780
    %v2513 = vpack.c.b16 %v1789, %v1785
    %v2514 = vpack.c.b16 %v1790, %v1786
    %v2515 = vpack.c.b16 %v1791, %v1787
    %v2516 = vpack.c.b16 %v1792, %v1788
    %v2517 = vpack.c.b16 %v1797, %v1793
    %v2518 = vpack.c.b16 %v1798, %v1794
    %v2519 = vpack.c.b16 %v1799, %v1795
    %v2520 = vpack.c.b16 %v1800, %v1796
    %v2521 = vpack.c.b16 %v1805, %v1801
    %v2522 = vpack.c.b16 %v1806, %v1802
    %v2523 = vpack.c.b16 %v1807, %v1803
    %v2524 = vpack.c.b16 %v1808, %v1804
    %v2525 = vpack.c.b16 %v1813, %v1809
    %v2526 = vpack.c.b16 %v1814, %v1810
    %v2527 = vpack.c.b16 %v1815, %v1811
    %v2528 = vpack.c.b16 %v1816, %v1812
    %v2529 = vpack.c.b16 %v1821, %v1817
    %v2530 = vpack.c.b16 %v1822, %v1818
    %v2531 = vpack.c.b16 %v1823, %v1819
    %v2532 = vpack.c.b16 %v1824, %v1820
    %v2533 = vpack.c.b16 %v1829, %v1825
    %v2534 = vpack.c.b16 %v1830, %v1826
    %v2535 = vpack.c.b16 %v1831, %v1827
    %v2536 = vpack.c.b16 %v1832, %v1828
    %v2537 = vpack.c.b16 %v1837, %v1833
    %v2538 = vpack.c.b16 %v1838, %v1834
    %v2539 = vpack.c.b16 %v1839, %v1835
    %v2540 = vpack.c.b16 %v1840, %v1836
    %v2541 = vpack.c.b16 %v1845, %v1841
    %v2542 = vpack.c.b16 %v1846, %v1842
    %v2543 = vpack.c.b16 %v1847, %v1843
    %v2544 = vpack.c.b16 %v1848, %v1844
    %v2545 = vpack.c.b16 %v1853, %v1849
    %v2546 = vpack.c.b16 %v1854, %v1850
    %v2547 = vpack.c.b16 %v1855, %v1851
    %v2548 = vpack.c.b16 %v1856, %v1852
    %v2549 = vpack.c.b16 %v1861, %v1857
    %v2550 = vpack.c.b16 %v1862, %v1858
    %v2551 = vpack.c.b16 %v1863, %v1859
    %v2552 = vpack.c.b16 %v1864, %v1860
    %v2553 = vpack.c.b16 %v1869, %v1865
    %v2554 = vpack.c.b16 %v1870, %v1866
    %v2555 = vpack.c.b16 %v1871, %v1867
    %v2556 = vpack.c.b16 %v1872, %v1868
    %v2557 = vpack.c.b16 %v1877, %v1873
    %v2558 = vpack.c.b16 %v1878, %v1874
    %v2559 = vpack.c.b16 %v1879, %v1875
    %v2560 = vpack.c.b16 %v1880, %v1876
    %v2561 = vpack.c.b16 %v1885, %v1881
    %v2562 = vpack.c.b16 %v1886, %v1882
    %v2563 = vpack.c.b16 %v1887, %v1883
    %v2564 = vpack.c.b16 %v1888, %v1884
    %v2565 = vpack.c.b16 %v1893, %v1889
    %v2566 = vpack.c.b16 %v1894, %v1890
    %v2567 = vpack.c.b16 %v1895, %v1891
    %v2568 = vpack.c.b16 %v1896, %v1892
    %v2569 = vpack.c.b16 %v1901, %v1897
    %v2570 = vpack.c.b16 %v1902, %v1898
    %v2571 = vpack.c.b16 %v1903, %v1899
    %v2572 = vpack.c.b16 %v1904, %v1900
    %v2573 = vpack.c.b16 %v1909, %v1905
    %v2574 = vpack.c.b16 %v1910, %v1906
    %v2575 = vpack.c.b16 %v1911, %v1907
    %v2576 = vpack.c.b16 %v1912, %v1908
    %v2577 = vpack.c.b16 %v1917, %v1913
    %v2578 = vpack.c.b16 %v1918, %v1914
    %v2579 = vpack.c.b16 %v1919, %v1915
    %v2580 = vpack.c.b16 %v1920, %v1916
    %v2581 = vpack.c.b16 %v1925, %v1921
    %v2582 = vpack.c.b16 %v1926, %v1922
    %v2583 = vpack.c.b16 %v1927, %v1923
    %v2584 = vpack.c.b16 %v1928, %v1924
    %v2585 = vpack.c.b16 %v1933, %v1929
    %v2586 = vpack.c.b16 %v1934, %v1930
    %v2587 = vpack.c.b16 %v1935, %v1931
    %v2588 = vpack.c.b16 %v1936, %v1932
    %v2589 = vpack.c.b16 %v1941, %v1937
    %v2590 = vpack.c.b16 %v1942, %v1938
    %v2591 = vpack.c.b16 %v1943, %v1939
    %v2592 = vpack.c.b16 %v1944, %v1940
    %v2593 = vpack.c.b16 %v1949, %v1945
    %v2594 = vpack.c.b16 %v1950, %v1946
    %v2595 = vpack.c.b16 %v1951, %v1947
    %v2596 = vpack.c.b16 %v1952, %v1948
    %v2597 = vpack.c.b16 %v1957, %v1953
    %v2598 = vpack.c.b16 %v1958, %v1954
    %v2599 = vpack.c.b16 %v1959, %v1955
    %v2600 = vpack.c.b16 %v1960, %v1956
    %v2601 = vpack.c.b16 %v1965, %v1961
    %v2602 = vpack.c.b16 %v1966, %v1962
    %v2603 = vpack.c.b16 %v1967, %v1963
    %v2604 = vpack.c.b16 %v1968, %v1964
    %v2605 = vpack.c.b16 %v1973, %v1969
    %v2606 = vpack.c.b16 %v1974, %v1970
    %v2607 = vpack.c.b16 %v1975, %v1971
    %v2608 = vpack.c.b16 %v1976, %v1972
    %v2609 = vpack.c.b16 %v1981, %v1977
    %v2610 = vpack.c.b16 %v1982, %v1978
    %v2611 = vpack.c.b16 %v1983, %v1979
    %v2612 = vpack.c.b16 %v1984, %v1980
    %v2613 = vpack.c.b16 %v1989, %v1985
    %v2614 = vpack.c.b16 %v1990, %v1986
    %v2615 = vpack.c.b16 %v1991, %v1987
    %v2616 = vpack.c.b16 %v1992, %v1988
    %v2617 = vpack.c.b16 %v1997, %v1993
    %v2618 = vpack.c.b16 %v1998, %v1994
    %v2619 = vpack.c.b16 %v1999, %v1995
    %v2620 = vpack.c.b16 %v2000, %v1996
    %v2621 = vpack.c.b16 %v2005, %v2001
    %v2622 = vpack.c.b16 %v2006, %v2002
    %v2623 = vpack.c.b16 %v2007, %v2003
    %v2624 = vpack.c.b16 %v2008, %v2004
    %v2625 = vpack.c.b16 %v2013, %v2009
    %v2626 = vpack.c.b16 %v2014, %v2010
    %v2627 = vpack.c.b16 %v2015, %v2011
    %v2628 = vpack.c.b16 %v2016, %v2012
    %v2629 = vpack.c.b16 %v2021, %v2017
    %v2630 = vpack.c.b16 %v2022, %v2018
    %v2631 = vpack.c.b16 %v2023, %v2019
    %v2632 = vpack.c.b16 %v2024, %v2020
    %v2633 = vpack.c.b16 %v2029, %v2025
    %v2634 = vpack.c.b16 %v2030, %v2026
    %v2635 = vpack.c.b16 %v2031, %v2027
    %v2636 = vpack.c.b16 %v2032, %v2028
    %v2637 = vpack.c.b16 %v2037, %v2033
    %v2638 = vpack.c.b16 %v2038, %v2034
    %v2639 = vpack.c.b16 %v2039, %v2035
    %v2640 = vpack.c.b16 %v2040, %v2036
    %v2641 = vpack.c.b16 %v2045, %v2041
    %v2642 = vpack.c.b16 %v2046, %v2042
    %v2643 = vpack.c.b16 %v2047, %v2043
    %v2644 = vpack.c.b16 %v2048, %v2044
    %v2645 = vpack.c.b16 %v2053, %v2049
    %v2646 = vpack.c.b16 %v2054, %v2050
    %v2647 = vpack.c.b16 %v2055, %v2051
    %v2648 = vpack.c.b16 %v2056, %v2052
    %v2649 = vpack.c.b16 %v2061, %v2057
    %v2650 = vpack.c.b16 %v2062, %v2058
    %v2651 = vpack.c.b16 %v2063, %v2059
    %v2652 = vpack.c.b16 %v2064, %v2060
    %v2653 = vpack.c.b16 %v2069, %v2065
    %v2654 = vpack.c.b16 %v2070, %v2066
    %v2655 = vpack.c.b16 %v2071, %v2067
    %v2656 = vpack.c.b16 %v2072, %v2068
    %v2657 = vpack.c.b16 %v2077, %v2073
    %v2658 = vpack.c.b16 %v2078, %v2074
    %v2659 = vpack.c.b16 %v2079, %v2075
    %v2660 = vpack.c.b16 %v2080, %v2076
    %v2661 = vpack.c.b16 %v2085, %v2081
    %v2662 = vpack.c.b16 %v2086, %v2082
    %v2663 = vpack.c.b16 %v2087, %v2083
    %v2664 = vpack.c.b16 %v2088, %v2084
    %v2665 = vpack.c.b16 %v2093, %v2089
    %v2666 = vpack.c.b16 %v2094, %v2090
    %v2667 = vpack.c.b16 %v2095, %v2091
    %v2668 = vpack.c.b16 %v2096, %v2092
    %v2669 = vpack.c.b16 %v2101, %v2097
    %v2670 = vpack.c.b16 %v2102, %v2098
    %v2671 = vpack.c.b16 %v2103, %v2099
    %v2672 = vpack.c.b16 %v2104, %v2100
    %v2673 = vpack.c.b16 %v2109, %v2105
    %v2674 = vpack.c.b16 %v2110, %v2106
    %v2675 = vpack.c.b16 %v2111, %v2107
    %v2676 = vpack.c.b16 %v2112, %v2108
    %v2677 = vpack.c.b16 %v2117, %v2113
    %v2678 = vpack.c.b16 %v2118, %v2114
    %v2679 = vpack.c.b16 %v2119, %v2115
    %v2680 = vpack.c.b16 %v2120, %v2116
    %v2681 = vpack.c.b16 %v2125, %v2121
    %v2682 = vpack.c.b16 %v2126, %v2122
    %v2683 = vpack.c.b16 %v2127, %v2123
    %v2684 = vpack.c.b16 %v2128, %v2124
    %v2685 = vpack.c.b16 %v2133, %v2129
    %v2686 = vpack.c.b16 %v2134, %v2130
    %v2687 = vpack.c.b16 %v2135, %v2131
    %v2688 = vpack.c.b16 %v2136, %v2132
    %v2689 = vpack.c.b16 %v2141, %v2137
    %v2690 = vpack.c.b16 %v2142, %v2138
    %v2691 = vpack.c.b16 %v2143, %v2139
    %v2692 = vpack.c.b16 %v2144, %v2140
    %v2693 = vpack.c.b16 %v2149, %v2145
    %v2694 = vpack.c.b16 %v2150, %v2146
    %v2695 = vpack.c.b16 %v2151, %v2147
    %v2696 = vpack.c.b16 %v2152, %v2148
    %v2697 = vpack.c.b16 %v2157, %v2153
    %v2698 = vpack.c.b16 %v2158, %v2154
    %v2699 = vpack.c.b16 %v2159, %v2155
    %v2700 = vpack.c.b16 %v2160, %v2156
    %v2701 = vpack.c.b16 %v2165, %v2161
    %v2702 = vpack.c.b16 %v2166, %v2162
    %v2703 = vpack.c.b16 %v2167, %v2163
    %v2704 = vpack.c.b16 %v2168, %v2164
    %v2705 = vpack.c.b16 %v2173, %v2169
    %v2706 = vpack.c.b16 %v2174, %v2170
    %v2707 = vpack.c.b16 %v2175, %v2171
    %v2708 = vpack.c.b16 %v2176, %v2172
    %v2709 = vpack.c.b16 %v2181, %v2177
    %v2710 = vpack.c.b16 %v2182, %v2178
    %v2711 = vpack.c.b16 %v2183, %v2179
    %v2712 = vpack.c.b16 %v2184, %v2180
    %v2713 = vpack.c.b16 %v2189, %v2185
    %v2714 = vpack.c.b16 %v2190, %v2186
    %v2715 = vpack.c.b16 %v2191, %v2187
    %v2716 = vpack.c.b16 %v2192, %v2188
    %v2717 = vpack.c.b16 %v2197, %v2193
    %v2718 = vpack.c.b16 %v2198, %v2194
    %v2719 = vpack.c.b16 %v2199, %v2195
    %v2720 = vpack.c.b16 %v2200, %v2196
    %v2721 = vpack.c.b16 %v2205, %v2201
    %v2722 = vpack.c.b16 %v2206, %v2202
    %v2723 = vpack.c.b16 %v2207, %v2203
    %v2724 = vpack.c.b16 %v2208, %v2204
    %v2725 = vpack.c.b16 %v2213, %v2209
    %v2726 = vpack.c.b16 %v2214, %v2210
    %v2727 = vpack.c.b16 %v2215, %v2211
    %v2728 = vpack.c.b16 %v2216, %v2212
    %3241 = vmatprep.subr.bf16.mxu0 %v2246
    %3242 = vmatpush1.bf16.msra.mxu0 %v2245
    %3243 = vmatprep.subr.bf16.mxu0 %v2242
    %3244 = vmatpush1.bf16.msra.mxu0 %v2241
    %3245 = vmatprep.subr.bf16.mxu0 %v2238
    %3246 = vmatpush1.bf16.msra.mxu0 %v2237
    %3247 = vmatprep.subr.bf16.mxu0 %v2234
    %3248 = vmatpush1.bf16.msra.mxu0 %v2233
    %3249 = vmatprep.subr.bf16.mxu0 %v2230
    %3250 = vmatpush1.bf16.msra.mxu0 %v2229
    %3251 = vmatprep.subr.bf16.mxu0 %v2226
    %3252 = vmatpush1.bf16.msra.mxu0 %v2225
    %3253 = vmatprep.subr.bf16.mxu0 %v2222
    %3254 = vmatpush1.bf16.msra.mxu0 %v2221
    %3255 = vmatprep.subr.bf16.mxu0 %v2218
    %3256 = vmatpush1.bf16.msra.mxu0 %v2217
    %3257 = vmatprep.subr.bf16.mxu0 %v2278
    %3258 = vmatpush2.bf16.msra.mxu0 %v2277
    %3259 = vmatprep.subr.bf16.mxu0 %v2274
    %3260 = vmatpush2.bf16.msra.mxu0 %v2273
    %3261 = vmatprep.subr.bf16.mxu0 %v2270
    %3262 = vmatpush2.bf16.msra.mxu0 %v2269
    %3263 = vmatprep.subr.bf16.mxu0 %v2266
    %3264 = vmatpush2.bf16.msra.mxu0 %v2265
    %3265 = vmatprep.subr.bf16.mxu0 %v2262
    %3266 = vmatpush2.bf16.msra.mxu0 %v2261
    %3267 = vmatprep.subr.bf16.mxu0 %v2258
    %3268 = vmatpush2.bf16.msra.mxu0 %v2257
    %3269 = vmatprep.subr.bf16.mxu0 %v2254
    %3270 = vmatpush2.bf16.msra.mxu0 %v2253
    %3271 = vmatprep.subr.bf16.mxu0 %v2250
    %3272 = vmatpush2.bf16.msra.mxu0 %v2249
    %3273 = vmatprep.mubr.bf16.mxu0 %v650
    %3274 = vmatmul.mubr.bf16.gmra.mxu0 %v649
    %v3275 = vpop.f32.mrf.mxu0
    %v3276 = vadd.f32 %v608, %v3275
    %v3277 = vpop.f32.mrf.mxu0
    %v3278 = vadd.f32 %v612, %v3277
    %v3279 = vpop.f32.mrf.mxu0
    %v3280 = vpop.f32.mrf.mxu0
    %3281 = vdwg.mxu0
    %3282 = vmatprep.subr.bf16.mxu0 %v2310
    %3283 = vmatpush1.bf16.msra.mxu0 %v2309
    %3284 = vmatprep.subr.bf16.mxu0 %v2306
    %3285 = vmatpush1.bf16.msra.mxu0 %v2305
    %3286 = vmatprep.subr.bf16.mxu0 %v2302
    %3287 = vmatpush1.bf16.msra.mxu0 %v2301
    %3288 = vmatprep.subr.bf16.mxu0 %v2298
    %3289 = vmatpush1.bf16.msra.mxu0 %v2297
    %3290 = vmatprep.subr.bf16.mxu0 %v2294
    %3291 = vmatpush1.bf16.msra.mxu0 %v2293
    %3292 = vmatprep.subr.bf16.mxu0 %v2290
    %3293 = vmatpush1.bf16.msra.mxu0 %v2289
    %3294 = vmatprep.subr.bf16.mxu0 %v2286
    %3295 = vmatpush1.bf16.msra.mxu0 %v2285
    %3296 = vmatprep.subr.bf16.mxu0 %v2282
    %3297 = vmatpush1.bf16.msra.mxu0 %v2281
    %3298 = vmatprep.subr.bf16.mxu0 %v2342
    %3299 = vmatpush2.bf16.msra.mxu0 %v2341
    %3300 = vmatprep.subr.bf16.mxu0 %v2338
    %3301 = vmatpush2.bf16.msra.mxu0 %v2337
    %3302 = vmatprep.subr.bf16.mxu0 %v2334
    %3303 = vmatpush2.bf16.msra.mxu0 %v2333
    %3304 = vmatprep.subr.bf16.mxu0 %v2330
    %3305 = vmatpush2.bf16.msra.mxu0 %v2329
    %3306 = vmatprep.subr.bf16.mxu0 %v2326
    %3307 = vmatpush2.bf16.msra.mxu0 %v2325
    %3308 = vmatprep.subr.bf16.mxu0 %v2322
    %3309 = vmatpush2.bf16.msra.mxu0 %v2321
    %3310 = vmatprep.subr.bf16.mxu0 %v2318
    %3311 = vmatpush2.bf16.msra.mxu0 %v2317
    %3312 = vmatprep.subr.bf16.mxu0 %v2314
    %3313 = vmatpush2.bf16.msra.mxu0 %v2313
    %3314 = vmatprep.mubr.bf16.mxu0 %v652
    %3315 = vmatmul.mubr.bf16.gmra.mxu0 %v651
    %v3316 = vpop.f32.mrf.mxu0
    %v3317 = vadd.f32 %v3276, %v3316
    %v3318 = vpop.f32.mrf.mxu0
    %v3319 = vadd.f32 %v3278, %v3318
    %v3320 = vpop.f32.mrf.mxu0
    %v3321 = vpop.f32.mrf.mxu0
    %3322 = vdwg.mxu0
    %3323 = vmatprep.subr.bf16.mxu0 %v2374
    %3324 = vmatpush1.bf16.msra.mxu0 %v2373
    %3325 = vmatprep.subr.bf16.mxu0 %v2370
    %3326 = vmatpush1.bf16.msra.mxu0 %v2369
    %3327 = vmatprep.subr.bf16.mxu0 %v2366
    %3328 = vmatpush1.bf16.msra.mxu0 %v2365
    %3329 = vmatprep.subr.bf16.mxu0 %v2362
    %3330 = vmatpush1.bf16.msra.mxu0 %v2361
    %3331 = vmatprep.subr.bf16.mxu0 %v2358
    %3332 = vmatpush1.bf16.msra.mxu0 %v2357
    %3333 = vmatprep.subr.bf16.mxu0 %v2354
    %3334 = vmatpush1.bf16.msra.mxu0 %v2353
    %3335 = vmatprep.subr.bf16.mxu0 %v2350
    %3336 = vmatpush1.bf16.msra.mxu0 %v2349
    %3337 = vmatprep.subr.bf16.mxu0 %v2346
    %3338 = vmatpush1.bf16.msra.mxu0 %v2345
    %3339 = vmatprep.subr.bf16.mxu0 %v2406
    %3340 = vmatpush2.bf16.msra.mxu0 %v2405
    %3341 = vmatprep.subr.bf16.mxu0 %v2402
    %3342 = vmatpush2.bf16.msra.mxu0 %v2401
    %3343 = vmatprep.subr.bf16.mxu0 %v2398
    %3344 = vmatpush2.bf16.msra.mxu0 %v2397
    %3345 = vmatprep.subr.bf16.mxu0 %v2394
    %3346 = vmatpush2.bf16.msra.mxu0 %v2393
    %3347 = vmatprep.subr.bf16.mxu0 %v2390
    %3348 = vmatpush2.bf16.msra.mxu0 %v2389
    %3349 = vmatprep.subr.bf16.mxu0 %v2386
    %3350 = vmatpush2.bf16.msra.mxu0 %v2385
    %3351 = vmatprep.subr.bf16.mxu0 %v2382
    %3352 = vmatpush2.bf16.msra.mxu0 %v2381
    %3353 = vmatprep.subr.bf16.mxu0 %v2378
    %3354 = vmatpush2.bf16.msra.mxu0 %v2377
    %3355 = vmatprep.mubr.bf16.mxu0 %v654
    %3356 = vmatmul.mubr.bf16.gmra.mxu0 %v653
    %v3357 = vpop.f32.mrf.mxu0
    %v3358 = vadd.f32 %v3317, %v3357
    %v3359 = vpop.f32.mrf.mxu0
    %v3360 = vadd.f32 %v3319, %v3359
    %v3361 = vpop.f32.mrf.mxu0
    %v3362 = vpop.f32.mrf.mxu0
    %3363 = vdwg.mxu0
    %3364 = vmatprep.subr.bf16.mxu0 %v2438
    %3365 = vmatpush1.bf16.msra.mxu0 %v2437
    %3366 = vmatprep.subr.bf16.mxu0 %v2434
    %3367 = vmatpush1.bf16.msra.mxu0 %v2433
    %3368 = vmatprep.subr.bf16.mxu0 %v2430
    %3369 = vmatpush1.bf16.msra.mxu0 %v2429
    %3370 = vmatprep.subr.bf16.mxu0 %v2426
    %3371 = vmatpush1.bf16.msra.mxu0 %v2425
    %3372 = vmatprep.subr.bf16.mxu0 %v2422
    %3373 = vmatpush1.bf16.msra.mxu0 %v2421
    %3374 = vmatprep.subr.bf16.mxu0 %v2418
    %3375 = vmatpush1.bf16.msra.mxu0 %v2417
    %3376 = vmatprep.subr.bf16.mxu0 %v2414
    %3377 = vmatpush1.bf16.msra.mxu0 %v2413
    %3378 = vmatprep.subr.bf16.mxu0 %v2410
    %3379 = vmatpush1.bf16.msra.mxu0 %v2409
    %3380 = vmatprep.subr.bf16.mxu0 %v2470
    %3381 = vmatpush2.bf16.msra.mxu0 %v2469
    %3382 = vmatprep.subr.bf16.mxu0 %v2466
    %3383 = vmatpush2.bf16.msra.mxu0 %v2465
    %3384 = vmatprep.subr.bf16.mxu0 %v2462
    %3385 = vmatpush2.bf16.msra.mxu0 %v2461
    %3386 = vmatprep.subr.bf16.mxu0 %v2458
    %3387 = vmatpush2.bf16.msra.mxu0 %v2457
    %3388 = vmatprep.subr.bf16.mxu0 %v2454
    %3389 = vmatpush2.bf16.msra.mxu0 %v2453
    %3390 = vmatprep.subr.bf16.mxu0 %v2450
    %3391 = vmatpush2.bf16.msra.mxu0 %v2449
    %3392 = vmatprep.subr.bf16.mxu0 %v2446
    %3393 = vmatpush2.bf16.msra.mxu0 %v2445
    %3394 = vmatprep.subr.bf16.mxu0 %v2442
    %3395 = vmatpush2.bf16.msra.mxu0 %v2441
    %3396 = vmatprep.mubr.bf16.mxu0 %v656
    %3397 = vmatmul.mubr.bf16.gmra.mxu0 %v655
    %v3398 = vpop.f32.mrf.mxu0
    %v3399 = vadd.f32 %v3358, %v3398
    %v3400 = vpop.f32.mrf.mxu0
    %v3401 = vadd.f32 %v3360, %v3400
    %v3402 = vpop.f32.mrf.mxu0
    %v3403 = vpop.f32.mrf.mxu0
    %3404 = vdwg.mxu0
    %3405 = vmatprep.subr.bf16.mxu0 %v2502
    %3406 = vmatpush1.bf16.msra.mxu0 %v2501
    %3407 = vmatprep.subr.bf16.mxu0 %v2498
    %3408 = vmatpush1.bf16.msra.mxu0 %v2497
    %3409 = vmatprep.subr.bf16.mxu0 %v2494
    %3410 = vmatpush1.bf16.msra.mxu0 %v2493
    %3411 = vmatprep.subr.bf16.mxu0 %v2490
    %3412 = vmatpush1.bf16.msra.mxu0 %v2489
    %3413 = vmatprep.subr.bf16.mxu0 %v2486
    %3414 = vmatpush1.bf16.msra.mxu0 %v2485
    %3415 = vmatprep.subr.bf16.mxu0 %v2482
    %3416 = vmatpush1.bf16.msra.mxu0 %v2481
    %3417 = vmatprep.subr.bf16.mxu0 %v2478
    %3418 = vmatpush1.bf16.msra.mxu0 %v2477
    %3419 = vmatprep.subr.bf16.mxu0 %v2474
    %3420 = vmatpush1.bf16.msra.mxu0 %v2473
    %3421 = vmatprep.subr.bf16.mxu0 %v2534
    %3422 = vmatpush2.bf16.msra.mxu0 %v2533
    %3423 = vmatprep.subr.bf16.mxu0 %v2530
    %3424 = vmatpush2.bf16.msra.mxu0 %v2529
    %3425 = vmatprep.subr.bf16.mxu0 %v2526
    %3426 = vmatpush2.bf16.msra.mxu0 %v2525
    %3427 = vmatprep.subr.bf16.mxu0 %v2522
    %3428 = vmatpush2.bf16.msra.mxu0 %v2521
    %3429 = vmatprep.subr.bf16.mxu0 %v2518
    %3430 = vmatpush2.bf16.msra.mxu0 %v2517
    %3431 = vmatprep.subr.bf16.mxu0 %v2514
    %3432 = vmatpush2.bf16.msra.mxu0 %v2513
    %3433 = vmatprep.subr.bf16.mxu0 %v2510
    %3434 = vmatpush2.bf16.msra.mxu0 %v2509
    %3435 = vmatprep.subr.bf16.mxu0 %v2506
    %3436 = vmatpush2.bf16.msra.mxu0 %v2505
    %3437 = vmatprep.mubr.bf16.mxu0 %v658
    %3438 = vmatmul.mubr.bf16.gmra.mxu0 %v657
    %v3439 = vpop.f32.mrf.mxu0
    %v3440 = vadd.f32 %v3399, %v3439
    %v3441 = vpop.f32.mrf.mxu0
    %v3442 = vadd.f32 %v3401, %v3441
    %v3443 = vpop.f32.mrf.mxu0
    %v3444 = vpop.f32.mrf.mxu0
    %3445 = vdwg.mxu0
    %3446 = vmatprep.subr.bf16.mxu0 %v2566
    %3447 = vmatpush1.bf16.msra.mxu0 %v2565
    %3448 = vmatprep.subr.bf16.mxu0 %v2562
    %3449 = vmatpush1.bf16.msra.mxu0 %v2561
    %3450 = vmatprep.subr.bf16.mxu0 %v2558
    %3451 = vmatpush1.bf16.msra.mxu0 %v2557
    %3452 = vmatprep.subr.bf16.mxu0 %v2554
    %3453 = vmatpush1.bf16.msra.mxu0 %v2553
    %3454 = vmatprep.subr.bf16.mxu0 %v2550
    %3455 = vmatpush1.bf16.msra.mxu0 %v2549
    %3456 = vmatprep.subr.bf16.mxu0 %v2546
    %3457 = vmatpush1.bf16.msra.mxu0 %v2545
    %3458 = vmatprep.subr.bf16.mxu0 %v2542
    %3459 = vmatpush1.bf16.msra.mxu0 %v2541
    %3460 = vmatprep.subr.bf16.mxu0 %v2538
    %3461 = vmatpush1.bf16.msra.mxu0 %v2537
    %3462 = vmatprep.subr.bf16.mxu0 %v2598
    %3463 = vmatpush2.bf16.msra.mxu0 %v2597
    %3464 = vmatprep.subr.bf16.mxu0 %v2594
    %3465 = vmatpush2.bf16.msra.mxu0 %v2593
    %3466 = vmatprep.subr.bf16.mxu0 %v2590
    %3467 = vmatpush2.bf16.msra.mxu0 %v2589
    %3468 = vmatprep.subr.bf16.mxu0 %v2586
    %3469 = vmatpush2.bf16.msra.mxu0 %v2585
    %3470 = vmatprep.subr.bf16.mxu0 %v2582
    %3471 = vmatpush2.bf16.msra.mxu0 %v2581
    %3472 = vmatprep.subr.bf16.mxu0 %v2578
    %3473 = vmatpush2.bf16.msra.mxu0 %v2577
    %3474 = vmatprep.subr.bf16.mxu0 %v2574
    %3475 = vmatpush2.bf16.msra.mxu0 %v2573
    %3476 = vmatprep.subr.bf16.mxu0 %v2570
    %3477 = vmatpush2.bf16.msra.mxu0 %v2569
    %3478 = vmatprep.mubr.bf16.mxu0 %v660
    %3479 = vmatmul.mubr.bf16.gmra.mxu0 %v659
    %v3480 = vpop.f32.mrf.mxu0
    %v3481 = vadd.f32 %v3440, %v3480
    %v3482 = vpop.f32.mrf.mxu0
    %v3483 = vadd.f32 %v3442, %v3482
    %v3484 = vpop.f32.mrf.mxu0
    %v3485 = vpop.f32.mrf.mxu0
    %3486 = vdwg.mxu0
    %3487 = vmatprep.subr.bf16.mxu0 %v2630
    %3488 = vmatpush1.bf16.msra.mxu0 %v2629
    %3489 = vmatprep.subr.bf16.mxu0 %v2626
    %3490 = vmatpush1.bf16.msra.mxu0 %v2625
    %3491 = vmatprep.subr.bf16.mxu0 %v2622
    %3492 = vmatpush1.bf16.msra.mxu0 %v2621
    %3493 = vmatprep.subr.bf16.mxu0 %v2618
    %3494 = vmatpush1.bf16.msra.mxu0 %v2617
    %3495 = vmatprep.subr.bf16.mxu0 %v2614
    %3496 = vmatpush1.bf16.msra.mxu0 %v2613
    %3497 = vmatprep.subr.bf16.mxu0 %v2610
    %3498 = vmatpush1.bf16.msra.mxu0 %v2609
    %3499 = vmatprep.subr.bf16.mxu0 %v2606
    %3500 = vmatpush1.bf16.msra.mxu0 %v2605
    %3501 = vmatprep.subr.bf16.mxu0 %v2602
    %3502 = vmatpush1.bf16.msra.mxu0 %v2601
    %3503 = vmatprep.subr.bf16.mxu0 %v2662
    %3504 = vmatpush2.bf16.msra.mxu0 %v2661
    %3505 = vmatprep.subr.bf16.mxu0 %v2658
    %3506 = vmatpush2.bf16.msra.mxu0 %v2657
    %3507 = vmatprep.subr.bf16.mxu0 %v2654
    %3508 = vmatpush2.bf16.msra.mxu0 %v2653
    %3509 = vmatprep.subr.bf16.mxu0 %v2650
    %3510 = vmatpush2.bf16.msra.mxu0 %v2649
    %3511 = vmatprep.subr.bf16.mxu0 %v2646
    %3512 = vmatpush2.bf16.msra.mxu0 %v2645
    %3513 = vmatprep.subr.bf16.mxu0 %v2642
    %3514 = vmatpush2.bf16.msra.mxu0 %v2641
    %3515 = vmatprep.subr.bf16.mxu0 %v2638
    %3516 = vmatpush2.bf16.msra.mxu0 %v2637
    %3517 = vmatprep.subr.bf16.mxu0 %v2634
    %3518 = vmatpush2.bf16.msra.mxu0 %v2633
    %3519 = vmatprep.mubr.bf16.mxu0 %v662
    %3520 = vmatmul.mubr.bf16.gmra.mxu0 %v661
    %v3521 = vpop.f32.mrf.mxu0
    %v3522 = vadd.f32 %v3481, %v3521
    %v3523 = vpop.f32.mrf.mxu0
    %v3524 = vadd.f32 %v3483, %v3523
    %v3525 = vpop.f32.mrf.mxu0
    %v3526 = vpop.f32.mrf.mxu0
    %3527 = vdwg.mxu0
    %3528 = vmatprep.subr.bf16.mxu0 %v2694
    %3529 = vmatpush1.bf16.msra.mxu0 %v2693
    %3530 = vmatprep.subr.bf16.mxu0 %v2690
    %3531 = vmatpush1.bf16.msra.mxu0 %v2689
    %3532 = vmatprep.subr.bf16.mxu0 %v2686
    %3533 = vmatpush1.bf16.msra.mxu0 %v2685
    %3534 = vmatprep.subr.bf16.mxu0 %v2682
    %3535 = vmatpush1.bf16.msra.mxu0 %v2681
    %3536 = vmatprep.subr.bf16.mxu0 %v2678
    %3537 = vmatpush1.bf16.msra.mxu0 %v2677
    %3538 = vmatprep.subr.bf16.mxu0 %v2674
    %3539 = vmatpush1.bf16.msra.mxu0 %v2673
    %3540 = vmatprep.subr.bf16.mxu0 %v2670
    %3541 = vmatpush1.bf16.msra.mxu0 %v2669
    %3542 = vmatprep.subr.bf16.mxu0 %v2666
    %3543 = vmatpush1.bf16.msra.mxu0 %v2665
    %3544 = vmatprep.subr.bf16.mxu0 %v2726
    %3545 = vmatpush2.bf16.msra.mxu0 %v2725
    %3546 = vmatprep.subr.bf16.mxu0 %v2722
    %3547 = vmatpush2.bf16.msra.mxu0 %v2721
    %3548 = vmatprep.subr.bf16.mxu0 %v2718
    %3549 = vmatpush2.bf16.msra.mxu0 %v2717
    %3550 = vmatprep.subr.bf16.mxu0 %v2714
    %3551 = vmatpush2.bf16.msra.mxu0 %v2713
    %3552 = vmatprep.subr.bf16.mxu0 %v2710
    %3553 = vmatpush2.bf16.msra.mxu0 %v2709
    %3554 = vmatprep.subr.bf16.mxu0 %v2706
    %3555 = vmatpush2.bf16.msra.mxu0 %v2705
    %3556 = vmatprep.subr.bf16.mxu0 %v2702
    %3557 = vmatpush2.bf16.msra.mxu0 %v2701
    %3558 = vmatprep.subr.bf16.mxu0 %v2698
    %3559 = vmatpush2.bf16.msra.mxu0 %v2697
    %3560 = vmatprep.mubr.bf16.mxu0 %v664
    %3561 = vmatmul.mubr.bf16.gmra.mxu0 %v663
    %v3562 = vpop.f32.mrf.mxu0
    %v3563 = vadd.f32 %v3522, %v3562
    %v3564 = vpop.f32.mrf.mxu0
    %v3565 = vadd.f32 %v3524, %v3564
    %v3566 = vpop.f32.mrf.mxu0
    %v3567 = vpop.f32.mrf.mxu0
    %3568 = vdwg.mxu0
    %3569 = vmatprep.subr.bf16.mxu0 %v2248
    %3570 = vmatpush1.bf16.msra.mxu0 %v2247
    %3571 = vmatprep.subr.bf16.mxu0 %v2244
    %3572 = vmatpush1.bf16.msra.mxu0 %v2243
    %3573 = vmatprep.subr.bf16.mxu0 %v2240
    %3574 = vmatpush1.bf16.msra.mxu0 %v2239
    %3575 = vmatprep.subr.bf16.mxu0 %v2236
    %3576 = vmatpush1.bf16.msra.mxu0 %v2235
    %3577 = vmatprep.subr.bf16.mxu0 %v2232
    %3578 = vmatpush1.bf16.msra.mxu0 %v2231
    %3579 = vmatprep.subr.bf16.mxu0 %v2228
    %3580 = vmatpush1.bf16.msra.mxu0 %v2227
    %3581 = vmatprep.subr.bf16.mxu0 %v2224
    %3582 = vmatpush1.bf16.msra.mxu0 %v2223
    %3583 = vmatprep.subr.bf16.mxu0 %v2220
    %3584 = vmatpush1.bf16.msra.mxu0 %v2219
    %3585 = vmatprep.subr.bf16.mxu0 %v2280
    %3586 = vmatpush2.bf16.msra.mxu0 %v2279
    %3587 = vmatprep.subr.bf16.mxu0 %v2276
    %3588 = vmatpush2.bf16.msra.mxu0 %v2275
    %3589 = vmatprep.subr.bf16.mxu0 %v2272
    %3590 = vmatpush2.bf16.msra.mxu0 %v2271
    %3591 = vmatprep.subr.bf16.mxu0 %v2268
    %3592 = vmatpush2.bf16.msra.mxu0 %v2267
    %3593 = vmatprep.subr.bf16.mxu0 %v2264
    %3594 = vmatpush2.bf16.msra.mxu0 %v2263
    %3595 = vmatprep.subr.bf16.mxu0 %v2260
    %3596 = vmatpush2.bf16.msra.mxu0 %v2259
    %3597 = vmatprep.subr.bf16.mxu0 %v2256
    %3598 = vmatpush2.bf16.msra.mxu0 %v2255
    %3599 = vmatprep.subr.bf16.mxu0 %v2252
    %3600 = vmatpush2.bf16.msra.mxu0 %v2251
    %3601 = vmatprep.mubr.bf16.mxu0 %v650
    %3602 = vmatmul.mubr.bf16.gmra.mxu0 %v649
    %v3603 = vpop.f32.mrf.mxu0
    %v3604 = vadd.f32 %v616, %v3603
    %v3605 = vpop.f32.mrf.mxu0
    %v3606 = vadd.f32 %v620, %v3605
    %v3607 = vpop.f32.mrf.mxu0
    %v3608 = vpop.f32.mrf.mxu0
    %3609 = vdwg.mxu0
    %3610 = vmatprep.subr.bf16.mxu0 %v2312
    %3611 = vmatpush1.bf16.msra.mxu0 %v2311
    %3612 = vmatprep.subr.bf16.mxu0 %v2308
    %3613 = vmatpush1.bf16.msra.mxu0 %v2307
    %3614 = vmatprep.subr.bf16.mxu0 %v2304
    %3615 = vmatpush1.bf16.msra.mxu0 %v2303
    %3616 = vmatprep.subr.bf16.mxu0 %v2300
    %3617 = vmatpush1.bf16.msra.mxu0 %v2299
    %3618 = vmatprep.subr.bf16.mxu0 %v2296
    %3619 = vmatpush1.bf16.msra.mxu0 %v2295
    %3620 = vmatprep.subr.bf16.mxu0 %v2292
    %3621 = vmatpush1.bf16.msra.mxu0 %v2291
    %3622 = vmatprep.subr.bf16.mxu0 %v2288
    %3623 = vmatpush1.bf16.msra.mxu0 %v2287
    %3624 = vmatprep.subr.bf16.mxu0 %v2284
    %3625 = vmatpush1.bf16.msra.mxu0 %v2283
    %3626 = vmatprep.subr.bf16.mxu0 %v2344
    %3627 = vmatpush2.bf16.msra.mxu0 %v2343
    %3628 = vmatprep.subr.bf16.mxu0 %v2340
    %3629 = vmatpush2.bf16.msra.mxu0 %v2339
    %3630 = vmatprep.subr.bf16.mxu0 %v2336
    %3631 = vmatpush2.bf16.msra.mxu0 %v2335
    %3632 = vmatprep.subr.bf16.mxu0 %v2332
    %3633 = vmatpush2.bf16.msra.mxu0 %v2331
    %3634 = vmatprep.subr.bf16.mxu0 %v2328
    %3635 = vmatpush2.bf16.msra.mxu0 %v2327
    %3636 = vmatprep.subr.bf16.mxu0 %v2324
    %3637 = vmatpush2.bf16.msra.mxu0 %v2323
    %3638 = vmatprep.subr.bf16.mxu0 %v2320
    %3639 = vmatpush2.bf16.msra.mxu0 %v2319
    %3640 = vmatprep.subr.bf16.mxu0 %v2316
    %3641 = vmatpush2.bf16.msra.mxu0 %v2315
    %3642 = vmatprep.mubr.bf16.mxu0 %v652
    %3643 = vmatmul.mubr.bf16.gmra.mxu0 %v651
    %v3644 = vpop.f32.mrf.mxu0
    %v3645 = vadd.f32 %v3604, %v3644
    %v3646 = vpop.f32.mrf.mxu0
    %v3647 = vadd.f32 %v3606, %v3646
    %v3648 = vpop.f32.mrf.mxu0
    %v3649 = vpop.f32.mrf.mxu0
    %3650 = vdwg.mxu0
    %3651 = vmatprep.subr.bf16.mxu0 %v2376
    %3652 = vmatpush1.bf16.msra.mxu0 %v2375
    %3653 = vmatprep.subr.bf16.mxu0 %v2372
    %3654 = vmatpush1.bf16.msra.mxu0 %v2371
    %3655 = vmatprep.subr.bf16.mxu0 %v2368
    %3656 = vmatpush1.bf16.msra.mxu0 %v2367
    %3657 = vmatprep.subr.bf16.mxu0 %v2364
    %3658 = vmatpush1.bf16.msra.mxu0 %v2363
    %3659 = vmatprep.subr.bf16.mxu0 %v2360
    %3660 = vmatpush1.bf16.msra.mxu0 %v2359
    %3661 = vmatprep.subr.bf16.mxu0 %v2356
    %3662 = vmatpush1.bf16.msra.mxu0 %v2355
    %3663 = vmatprep.subr.bf16.mxu0 %v2352
    %3664 = vmatpush1.bf16.msra.mxu0 %v2351
    %3665 = vmatprep.subr.bf16.mxu0 %v2348
    %3666 = vmatpush1.bf16.msra.mxu0 %v2347
    %3667 = vmatprep.subr.bf16.mxu0 %v2408
    %3668 = vmatpush2.bf16.msra.mxu0 %v2407
    %3669 = vmatprep.subr.bf16.mxu0 %v2404
    %3670 = vmatpush2.bf16.msra.mxu0 %v2403
    %3671 = vmatprep.subr.bf16.mxu0 %v2400
    %3672 = vmatpush2.bf16.msra.mxu0 %v2399
    %3673 = vmatprep.subr.bf16.mxu0 %v2396
    %3674 = vmatpush2.bf16.msra.mxu0 %v2395
    %3675 = vmatprep.subr.bf16.mxu0 %v2392
    %3676 = vmatpush2.bf16.msra.mxu0 %v2391
    %3677 = vmatprep.subr.bf16.mxu0 %v2388
    %3678 = vmatpush2.bf16.msra.mxu0 %v2387
    %3679 = vmatprep.subr.bf16.mxu0 %v2384
    %3680 = vmatpush2.bf16.msra.mxu0 %v2383
    %3681 = vmatprep.subr.bf16.mxu0 %v2380
    %3682 = vmatpush2.bf16.msra.mxu0 %v2379
    %3683 = vmatprep.mubr.bf16.mxu0 %v654
    %3684 = vmatmul.mubr.bf16.gmra.mxu0 %v653
    %v3685 = vpop.f32.mrf.mxu0
    %v3686 = vadd.f32 %v3645, %v3685
    %v3687 = vpop.f32.mrf.mxu0
    %v3688 = vadd.f32 %v3647, %v3687
    %v3689 = vpop.f32.mrf.mxu0
    %v3690 = vpop.f32.mrf.mxu0
    %3691 = vdwg.mxu0
    %3692 = vmatprep.subr.bf16.mxu0 %v2440
    %3693 = vmatpush1.bf16.msra.mxu0 %v2439
    %3694 = vmatprep.subr.bf16.mxu0 %v2436
    %3695 = vmatpush1.bf16.msra.mxu0 %v2435
    %3696 = vmatprep.subr.bf16.mxu0 %v2432
    %3697 = vmatpush1.bf16.msra.mxu0 %v2431
    %3698 = vmatprep.subr.bf16.mxu0 %v2428
    %3699 = vmatpush1.bf16.msra.mxu0 %v2427
    %3700 = vmatprep.subr.bf16.mxu0 %v2424
    %3701 = vmatpush1.bf16.msra.mxu0 %v2423
    %3702 = vmatprep.subr.bf16.mxu0 %v2420
    %3703 = vmatpush1.bf16.msra.mxu0 %v2419
    %3704 = vmatprep.subr.bf16.mxu0 %v2416
    %3705 = vmatpush1.bf16.msra.mxu0 %v2415
    %3706 = vmatprep.subr.bf16.mxu0 %v2412
    %3707 = vmatpush1.bf16.msra.mxu0 %v2411
    %3708 = vmatprep.subr.bf16.mxu0 %v2472
    %3709 = vmatpush2.bf16.msra.mxu0 %v2471
    %3710 = vmatprep.subr.bf16.mxu0 %v2468
    %3711 = vmatpush2.bf16.msra.mxu0 %v2467
    %3712 = vmatprep.subr.bf16.mxu0 %v2464
    %3713 = vmatpush2.bf16.msra.mxu0 %v2463
    %3714 = vmatprep.subr.bf16.mxu0 %v2460
    %3715 = vmatpush2.bf16.msra.mxu0 %v2459
    %3716 = vmatprep.subr.bf16.mxu0 %v2456
    %3717 = vmatpush2.bf16.msra.mxu0 %v2455
    %3718 = vmatprep.subr.bf16.mxu0 %v2452
    %3719 = vmatpush2.bf16.msra.mxu0 %v2451
    %3720 = vmatprep.subr.bf16.mxu0 %v2448
    %3721 = vmatpush2.bf16.msra.mxu0 %v2447
    %3722 = vmatprep.subr.bf16.mxu0 %v2444
    %3723 = vmatpush2.bf16.msra.mxu0 %v2443
    %3724 = vmatprep.mubr.bf16.mxu0 %v656
    %3725 = vmatmul.mubr.bf16.gmra.mxu0 %v655
    %v3726 = vpop.f32.mrf.mxu0
    %v3727 = vadd.f32 %v3686, %v3726
    %v3728 = vpop.f32.mrf.mxu0
    %v3729 = vadd.f32 %v3688, %v3728
    %v3730 = vpop.f32.mrf.mxu0
    %v3731 = vpop.f32.mrf.mxu0
    %3732 = vdwg.mxu0
    %3733 = vmatprep.subr.bf16.mxu0 %v2504
    %3734 = vmatpush1.bf16.msra.mxu0 %v2503
    %3735 = vmatprep.subr.bf16.mxu0 %v2500
    %3736 = vmatpush1.bf16.msra.mxu0 %v2499
    %3737 = vmatprep.subr.bf16.mxu0 %v2496
    %3738 = vmatpush1.bf16.msra.mxu0 %v2495
    %3739 = vmatprep.subr.bf16.mxu0 %v2492
    %3740 = vmatpush1.bf16.msra.mxu0 %v2491
    %3741 = vmatprep.subr.bf16.mxu0 %v2488
    %3742 = vmatpush1.bf16.msra.mxu0 %v2487
    %3743 = vmatprep.subr.bf16.mxu0 %v2484
    %3744 = vmatpush1.bf16.msra.mxu0 %v2483
    %3745 = vmatprep.subr.bf16.mxu0 %v2480
    %3746 = vmatpush1.bf16.msra.mxu0 %v2479
    %3747 = vmatprep.subr.bf16.mxu0 %v2476
    %3748 = vmatpush1.bf16.msra.mxu0 %v2475
    %3749 = vmatprep.subr.bf16.mxu0 %v2536
    %3750 = vmatpush2.bf16.msra.mxu0 %v2535
    %3751 = vmatprep.subr.bf16.mxu0 %v2532
    %3752 = vmatpush2.bf16.msra.mxu0 %v2531
    %3753 = vmatprep.subr.bf16.mxu0 %v2528
    %3754 = vmatpush2.bf16.msra.mxu0 %v2527
    %3755 = vmatprep.subr.bf16.mxu0 %v2524
    %3756 = vmatpush2.bf16.msra.mxu0 %v2523
    %3757 = vmatprep.subr.bf16.mxu0 %v2520
    %3758 = vmatpush2.bf16.msra.mxu0 %v2519
    %3759 = vmatprep.subr.bf16.mxu0 %v2516
    %3760 = vmatpush2.bf16.msra.mxu0 %v2515
    %3761 = vmatprep.subr.bf16.mxu0 %v2512
    %3762 = vmatpush2.bf16.msra.mxu0 %v2511
    %3763 = vmatprep.subr.bf16.mxu0 %v2508
    %3764 = vmatpush2.bf16.msra.mxu0 %v2507
    %3765 = vmatprep.mubr.bf16.mxu0 %v658
    %3766 = vmatmul.mubr.bf16.gmra.mxu0 %v657
    %v3767 = vpop.f32.mrf.mxu0
    %v3768 = vadd.f32 %v3727, %v3767
    %v3769 = vpop.f32.mrf.mxu0
    %v3770 = vadd.f32 %v3729, %v3769
    %v3771 = vpop.f32.mrf.mxu0
    %v3772 = vpop.f32.mrf.mxu0
    %3773 = vdwg.mxu0
    %3774 = vmatprep.subr.bf16.mxu0 %v2568
    %3775 = vmatpush1.bf16.msra.mxu0 %v2567
    %3776 = vmatprep.subr.bf16.mxu0 %v2564
    %3777 = vmatpush1.bf16.msra.mxu0 %v2563
    %3778 = vmatprep.subr.bf16.mxu0 %v2560
    %3779 = vmatpush1.bf16.msra.mxu0 %v2559
    %3780 = vmatprep.subr.bf16.mxu0 %v2556
    %3781 = vmatpush1.bf16.msra.mxu0 %v2555
    %3782 = vmatprep.subr.bf16.mxu0 %v2552
    %3783 = vmatpush1.bf16.msra.mxu0 %v2551
    %3784 = vmatprep.subr.bf16.mxu0 %v2548
    %3785 = vmatpush1.bf16.msra.mxu0 %v2547
    %3786 = vmatprep.subr.bf16.mxu0 %v2544
    %3787 = vmatpush1.bf16.msra.mxu0 %v2543
    %3788 = vmatprep.subr.bf16.mxu0 %v2540
    %3789 = vmatpush1.bf16.msra.mxu0 %v2539
    %3790 = vmatprep.subr.bf16.mxu0 %v2600
    %3791 = vmatpush2.bf16.msra.mxu0 %v2599
    %3792 = vmatprep.subr.bf16.mxu0 %v2596
    %3793 = vmatpush2.bf16.msra.mxu0 %v2595
    %3794 = vmatprep.subr.bf16.mxu0 %v2592
    %3795 = vmatpush2.bf16.msra.mxu0 %v2591
    %3796 = vmatprep.subr.bf16.mxu0 %v2588
    %3797 = vmatpush2.bf16.msra.mxu0 %v2587
    %3798 = vmatprep.subr.bf16.mxu0 %v2584
    %3799 = vmatpush2.bf16.msra.mxu0 %v2583
    %3800 = vmatprep.subr.bf16.mxu0 %v2580
    %3801 = vmatpush2.bf16.msra.mxu0 %v2579
    %3802 = vmatprep.subr.bf16.mxu0 %v2576
    %3803 = vmatpush2.bf16.msra.mxu0 %v2575
    %3804 = vmatprep.subr.bf16.mxu0 %v2572
    %3805 = vmatpush2.bf16.msra.mxu0 %v2571
    %3806 = vmatprep.mubr.bf16.mxu0 %v660
    %3807 = vmatmul.mubr.bf16.gmra.mxu0 %v659
    %v3808 = vpop.f32.mrf.mxu0
    %v3809 = vadd.f32 %v3768, %v3808
    %v3810 = vpop.f32.mrf.mxu0
    %v3811 = vadd.f32 %v3770, %v3810
    %v3812 = vpop.f32.mrf.mxu0
    %v3813 = vpop.f32.mrf.mxu0
    %3814 = vdwg.mxu0
    %3815 = vmatprep.subr.bf16.mxu0 %v2632
    %3816 = vmatpush1.bf16.msra.mxu0 %v2631
    %3817 = vmatprep.subr.bf16.mxu0 %v2628
    %3818 = vmatpush1.bf16.msra.mxu0 %v2627
    %3819 = vmatprep.subr.bf16.mxu0 %v2624
    %3820 = vmatpush1.bf16.msra.mxu0 %v2623
    %3821 = vmatprep.subr.bf16.mxu0 %v2620
    %3822 = vmatpush1.bf16.msra.mxu0 %v2619
    %3823 = vmatprep.subr.bf16.mxu0 %v2616
    %3824 = vmatpush1.bf16.msra.mxu0 %v2615
    %3825 = vmatprep.subr.bf16.mxu0 %v2612
    %3826 = vmatpush1.bf16.msra.mxu0 %v2611
    %3827 = vmatprep.subr.bf16.mxu0 %v2608
    %3828 = vmatpush1.bf16.msra.mxu0 %v2607
    %3829 = vmatprep.subr.bf16.mxu0 %v2604
    %3830 = vmatpush1.bf16.msra.mxu0 %v2603
    %3831 = vmatprep.subr.bf16.mxu0 %v2664
    %3832 = vmatpush2.bf16.msra.mxu0 %v2663
    %3833 = vmatprep.subr.bf16.mxu0 %v2660
    %3834 = vmatpush2.bf16.msra.mxu0 %v2659
    %3835 = vmatprep.subr.bf16.mxu0 %v2656
    %3836 = vmatpush2.bf16.msra.mxu0 %v2655
    %3837 = vmatprep.subr.bf16.mxu0 %v2652
    %3838 = vmatpush2.bf16.msra.mxu0 %v2651
    %3839 = vmatprep.subr.bf16.mxu0 %v2648
    %3840 = vmatpush2.bf16.msra.mxu0 %v2647
    %3841 = vmatprep.subr.bf16.mxu0 %v2644
    %3842 = vmatpush2.bf16.msra.mxu0 %v2643
    %3843 = vmatprep.subr.bf16.mxu0 %v2640
    %3844 = vmatpush2.bf16.msra.mxu0 %v2639
    %3845 = vmatprep.subr.bf16.mxu0 %v2636
    %3846 = vmatpush2.bf16.msra.mxu0 %v2635
    %3847 = vmatprep.mubr.bf16.mxu0 %v662
    %3848 = vmatmul.mubr.bf16.gmra.mxu0 %v661
    %v3849 = vpop.f32.mrf.mxu0
    %v3850 = vadd.f32 %v3809, %v3849
    %v3851 = vpop.f32.mrf.mxu0
    %v3852 = vadd.f32 %v3811, %v3851
    %v3853 = vpop.f32.mrf.mxu0
    %v3854 = vpop.f32.mrf.mxu0
    %3855 = vdwg.mxu0
    %3856 = vmatprep.subr.bf16.mxu0 %v2696
    %3857 = vmatpush1.bf16.msra.mxu0 %v2695
    %3858 = vmatprep.subr.bf16.mxu0 %v2692
    %3859 = vmatpush1.bf16.msra.mxu0 %v2691
    %3860 = vmatprep.subr.bf16.mxu0 %v2688
    %3861 = vmatpush1.bf16.msra.mxu0 %v2687
    %3862 = vmatprep.subr.bf16.mxu0 %v2684
    %3863 = vmatpush1.bf16.msra.mxu0 %v2683
    %3864 = vmatprep.subr.bf16.mxu0 %v2680
    %3865 = vmatpush1.bf16.msra.mxu0 %v2679
    %3866 = vmatprep.subr.bf16.mxu0 %v2676
    %3867 = vmatpush1.bf16.msra.mxu0 %v2675
    %3868 = vmatprep.subr.bf16.mxu0 %v2672
    %3869 = vmatpush1.bf16.msra.mxu0 %v2671
    %3870 = vmatprep.subr.bf16.mxu0 %v2668
    %3871 = vmatpush1.bf16.msra.mxu0 %v2667
    %3872 = vmatprep.subr.bf16.mxu0 %v2728
    %3873 = vmatpush2.bf16.msra.mxu0 %v2727
    %3874 = vmatprep.subr.bf16.mxu0 %v2724
    %3875 = vmatpush2.bf16.msra.mxu0 %v2723
    %3876 = vmatprep.subr.bf16.mxu0 %v2720
    %3877 = vmatpush2.bf16.msra.mxu0 %v2719
    %3878 = vmatprep.subr.bf16.mxu0 %v2716
    %3879 = vmatpush2.bf16.msra.mxu0 %v2715
    %3880 = vmatprep.subr.bf16.mxu0 %v2712
    %3881 = vmatpush2.bf16.msra.mxu0 %v2711
    %3882 = vmatprep.subr.bf16.mxu0 %v2708
    %3883 = vmatpush2.bf16.msra.mxu0 %v2707
    %3884 = vmatprep.subr.bf16.mxu0 %v2704
    %3885 = vmatpush2.bf16.msra.mxu0 %v2703
    %3886 = vmatprep.subr.bf16.mxu0 %v2700
    %3887 = vmatpush2.bf16.msra.mxu0 %v2699
    %3888 = vmatprep.mubr.bf16.mxu0 %v664
    %3889 = vmatmul.mubr.bf16.gmra.mxu0 %v663
    %v3890 = vpop.f32.mrf.mxu0
    %v3891 = vadd.f32 %v3850, %v3890
    %v3892 = vpop.f32.mrf.mxu0
    %v3893 = vadd.f32 %v3852, %v3892
    %v3894 = vpop.f32.mrf.mxu0
    %v3895 = vpop.f32.mrf.mxu0
    %3896 = vdwg.mxu0
    %v3897 = vmax.f32 %v3563, 0.0
    %v3898 = vmax.f32 %v3565, 0.0
    %v3899 = vmax.f32 %v3891, 0.0
    %v3900 = vmax.f32 %v3893, 0.0
    %v3901 = vpack.c.bf16 %v3897, %v3897
    %v3902 = vpack.c.bf16 %v3898, %v3898
    %v3903 = vpack.c.bf16 %v3899, %v3899
    %v3904 = vpack.c.bf16 %v3900, %v3900
    %v3905 = vld [vmem:[#allocation8] sm:$0xff]
    %v3906 = vld [vmem:[#allocation8 + $0x8] sm:$0xff]
    %v3907 = vld [vmem:[#allocation8 + $0x10] sm:$0xff]
    %v3908 = vld [vmem:[#allocation8 + $0x18] sm:$0xff]
    %v3909 = vld [vmem:[#allocation8 + $0x20] sm:$0xff]
    %v3910 = vld [vmem:[#allocation8 + $0x28] sm:$0xff]
    %v3911 = vld [vmem:[#allocation8 + $0x30] sm:$0xff]
    %v3912 = vld [vmem:[#allocation8 + $0x38] sm:$0xff]
    %v3913 = vld [vmem:[#allocation8 + $0x40] sm:$0xff]
    %v3914 = vld [vmem:[#allocation8 + $0x48] sm:$0xff]
    %v3915 = vld [vmem:[#allocation8 + $0x50] sm:$0xff]
    %v3916 = vld [vmem:[#allocation8 + $0x58] sm:$0xff]
    %v3917 = vld [vmem:[#allocation8 + $0x60] sm:$0xff]
    %v3918 = vld [vmem:[#allocation8 + $0x68] sm:$0xff]
    %v3919 = vld [vmem:[#allocation8 + $0x70] sm:$0xff]
    %v3920 = vld [vmem:[#allocation8 + $0x78] sm:$0xff]
    %v3921 = vld [vmem:[#allocation8 + $0x80] sm:$0xff]
    %v3922 = vld [vmem:[#allocation8 + $0x88] sm:$0xff]
    %v3923 = vld [vmem:[#allocation8 + $0x90] sm:$0xff]
    %v3924 = vld [vmem:[#allocation8 + $0x98] sm:$0xff]
    %v3925 = vld [vmem:[#allocation8 + $0xa0] sm:$0xff]
    %v3926 = vld [vmem:[#allocation8 + $0xa8] sm:$0xff]
    %v3927 = vld [vmem:[#allocation8 + $0xb0] sm:$0xff]
    %v3928 = vld [vmem:[#allocation8 + $0xb8] sm:$0xff]
    %v3929 = vld [vmem:[#allocation8 + $0xc0] sm:$0xff]
    %v3930 = vld [vmem:[#allocation8 + $0xc8] sm:$0xff]
    %v3931 = vld [vmem:[#allocation8 + $0xd0] sm:$0xff]
    %v3932 = vld [vmem:[#allocation8 + $0xd8] sm:$0xff]
    %v3933 = vld [vmem:[#allocation8 + $0xe0] sm:$0xff]
    %v3934 = vld [vmem:[#allocation8 + $0xe8] sm:$0xff]
    %v3935 = vld [vmem:[#allocation8 + $0xf0] sm:$0xff]
    %v3936 = vld [vmem:[#allocation8 + $0xf8] sm:$0xff]
    %v3937 = vld [vmem:[#allocation8 + $0x100] sm:$0xff]
    %v3938 = vld [vmem:[#allocation8 + $0x108] sm:$0xff]
    %v3939 = vld [vmem:[#allocation8 + $0x110] sm:$0xff]
    %v3940 = vld [vmem:[#allocation8 + $0x118] sm:$0xff]
    %v3941 = vld [vmem:[#allocation8 + $0x120] sm:$0xff]
    %v3942 = vld [vmem:[#allocation8 + $0x128] sm:$0xff]
    %v3943 = vld [vmem:[#allocation8 + $0x130] sm:$0xff]
    %v3944 = vld [vmem:[#allocation8 + $0x138] sm:$0xff]
    %v3945 = vld [vmem:[#allocation8 + $0x140] sm:$0xff]
    %v3946 = vld [vmem:[#allocation8 + $0x148] sm:$0xff]
    %v3947 = vld [vmem:[#allocation8 + $0x150] sm:$0xff]
    %v3948 = vld [vmem:[#allocation8 + $0x158] sm:$0xff]
    %v3949 = vld [vmem:[#allocation8 + $0x160] sm:$0xff]
    %v3950 = vld [vmem:[#allocation8 + $0x168] sm:$0xff]
    %v3951 = vld [vmem:[#allocation8 + $0x170] sm:$0xff]
    %v3952 = vld [vmem:[#allocation8 + $0x178] sm:$0xff]
    %v3953 = vld [vmem:[#allocation8 + $0x180] sm:$0xff]
    %v3954 = vld [vmem:[#allocation8 + $0x188] sm:$0xff]
    %v3955 = vld [vmem:[#allocation8 + $0x190] sm:$0xff]
    %v3956 = vld [vmem:[#allocation8 + $0x198] sm:$0xff]
    %v3957 = vld [vmem:[#allocation8 + $0x1a0] sm:$0xff]
    %v3958 = vld [vmem:[#allocation8 + $0x1a8] sm:$0xff]
    %v3959 = vld [vmem:[#allocation8 + $0x1b0] sm:$0xff]
    %v3960 = vld [vmem:[#allocation8 + $0x1b8] sm:$0xff]
    %v3961 = vld [vmem:[#allocation8 + $0x1c0] sm:$0xff]
    %v3962 = vld [vmem:[#allocation8 + $0x1c8] sm:$0xff]
    %v3963 = vld [vmem:[#allocation8 + $0x1d0] sm:$0xff]
    %v3964 = vld [vmem:[#allocation8 + $0x1d8] sm:$0xff]
    %v3965 = vld [vmem:[#allocation8 + $0x1e0] sm:$0xff]
    %v3966 = vld [vmem:[#allocation8 + $0x1e8] sm:$0xff]
    %v3967 = vld [vmem:[#allocation8 + $0x1f0] sm:$0xff]
    %v3968 = vld [vmem:[#allocation8 + $0x1f8] sm:$0xff]
    %v3969 = vld [vmem:[#allocation10] sm:$0x3]
    %v3971 = vlaneseq
    %v3972 = vshrl.u32 %v3971, 7
    %v3973 = vsub.s32 0, %v3972
    %v3974 = vrot.slane %v3969, %v3973
    %v3975 = vlaneseq
    %v3976 = vshrl.u32 %v3975, 7
    %v3977 = vsub.s32 1, %v3976
    %v3978 = vrot.slane %v3969, %v3977
    %v4045 = vunpack.c.l.b16 %v3905
    %v4046 = vunpack.c.h.b16 %v3905
    %v4047 = vunpack.c.l.b16 %v3906
    %v4048 = vunpack.c.h.b16 %v3906
    %v4049 = vunpack.c.l.b16 %v3907
    %v4050 = vunpack.c.h.b16 %v3907
    %v4051 = vunpack.c.l.b16 %v3908
    %v4052 = vunpack.c.h.b16 %v3908
    %v4053 = vunpack.c.l.b16 %v3909
    %v4054 = vunpack.c.h.b16 %v3909
    %v4055 = vunpack.c.l.b16 %v3910
    %v4056 = vunpack.c.h.b16 %v3910
    %v4057 = vunpack.c.l.b16 %v3911
    %v4058 = vunpack.c.h.b16 %v3911
    %v4059 = vunpack.c.l.b16 %v3912
    %v4060 = vunpack.c.h.b16 %v3912
    %v4061 = vunpack.c.l.b16 %v3913
    %v4062 = vunpack.c.h.b16 %v3913
    %v4063 = vunpack.c.l.b16 %v3914
    %v4064 = vunpack.c.h.b16 %v3914
    %v4065 = vunpack.c.l.b16 %v3915
    %v4066 = vunpack.c.h.b16 %v3915
    %v4067 = vunpack.c.l.b16 %v3916
    %v4068 = vunpack.c.h.b16 %v3916
    %v4069 = vunpack.c.l.b16 %v3917
    %v4070 = vunpack.c.h.b16 %v3917
    %v4071 = vunpack.c.l.b16 %v3918
    %v4072 = vunpack.c.h.b16 %v3918
    %v4073 = vunpack.c.l.b16 %v3919
    %v4074 = vunpack.c.h.b16 %v3919
    %v4075 = vunpack.c.l.b16 %v3920
    %v4076 = vunpack.c.h.b16 %v3920
    %v4077 = vunpack.c.l.b16 %v3921
    %v4078 = vunpack.c.h.b16 %v3921
    %v4079 = vunpack.c.l.b16 %v3922
    %v4080 = vunpack.c.h.b16 %v3922
    %v4081 = vunpack.c.l.b16 %v3923
    %v4082 = vunpack.c.h.b16 %v3923
    %v4083 = vunpack.c.l.b16 %v3924
    %v4084 = vunpack.c.h.b16 %v3924
    %v4085 = vunpack.c.l.b16 %v3925
    %v4086 = vunpack.c.h.b16 %v3925
    %v4087 = vunpack.c.l.b16 %v3926
    %v4088 = vunpack.c.h.b16 %v3926
    %v4089 = vunpack.c.l.b16 %v3927
    %v4090 = vunpack.c.h.b16 %v3927
    %v4091 = vunpack.c.l.b16 %v3928
    %v4092 = vunpack.c.h.b16 %v3928
    %v4093 = vunpack.c.l.b16 %v3929
    %v4094 = vunpack.c.h.b16 %v3929
    %v4095 = vunpack.c.l.b16 %v3930
    %v4096 = vunpack.c.h.b16 %v3930
    %v4097 = vunpack.c.l.b16 %v3931
    %v4098 = vunpack.c.h.b16 %v3931
    %v4099 = vunpack.c.l.b16 %v3932
    %v4100 = vunpack.c.h.b16 %v3932
    %v4101 = vunpack.c.l.b16 %v3933
    %v4102 = vunpack.c.h.b16 %v3933
    %v4103 = vunpack.c.l.b16 %v3934
    %v4104 = vunpack.c.h.b16 %v3934
    %v4105 = vunpack.c.l.b16 %v3935
    %v4106 = vunpack.c.h.b16 %v3935
    %v4107 = vunpack.c.l.b16 %v3936
    %v4108 = vunpack.c.h.b16 %v3936
    %v4109 = vunpack.c.l.b16 %v3937
    %v4110 = vunpack.c.h.b16 %v3937
    %v4111 = vunpack.c.l.b16 %v3938
    %v4112 = vunpack.c.h.b16 %v3938
    %v4113 = vunpack.c.l.b16 %v3939
    %v4114 = vunpack.c.h.b16 %v3939
    %v4115 = vunpack.c.l.b16 %v3940
    %v4116 = vunpack.c.h.b16 %v3940
    %v4117 = vunpack.c.l.b16 %v3941
    %v4118 = vunpack.c.h.b16 %v3941
    %v4119 = vunpack.c.l.b16 %v3942
    %v4120 = vunpack.c.h.b16 %v3942
    %v4121 = vunpack.c.l.b16 %v3943
    %v4122 = vunpack.c.h.b16 %v3943
    %v4123 = vunpack.c.l.b16 %v3944
    %v4124 = vunpack.c.h.b16 %v3944
    %v4125 = vunpack.c.l.b16 %v3945
    %v4126 = vunpack.c.h.b16 %v3945
    %v4127 = vunpack.c.l.b16 %v3946
    %v4128 = vunpack.c.h.b16 %v3946
    %v4129 = vunpack.c.l.b16 %v3947
    %v4130 = vunpack.c.h.b16 %v3947
    %v4131 = vunpack.c.l.b16 %v3948
    %v4132 = vunpack.c.h.b16 %v3948
    %v4133 = vunpack.c.l.b16 %v3949
    %v4134 = vunpack.c.h.b16 %v3949
    %v4135 = vunpack.c.l.b16 %v3950
    %v4136 = vunpack.c.h.b16 %v3950
    %v4137 = vunpack.c.l.b16 %v3951
    %v4138 = vunpack.c.h.b16 %v3951
    %v4139 = vunpack.c.l.b16 %v3952
    %v4140 = vunpack.c.h.b16 %v3952
    %v4141 = vunpack.c.l.b16 %v3953
    %v4142 = vunpack.c.h.b16 %v3953
    %v4143 = vunpack.c.l.b16 %v3954
    %v4144 = vunpack.c.h.b16 %v3954
    %v4145 = vunpack.c.l.b16 %v3955
    %v4146 = vunpack.c.h.b16 %v3955
    %v4147 = vunpack.c.l.b16 %v3956
    %v4148 = vunpack.c.h.b16 %v3956
    %v4149 = vunpack.c.l.b16 %v3957
    %v4150 = vunpack.c.h.b16 %v3957
    %v4151 = vunpack.c.l.b16 %v3958
    %v4152 = vunpack.c.h.b16 %v3958
    %v4153 = vunpack.c.l.b16 %v3959
    %v4154 = vunpack.c.h.b16 %v3959
    %v4155 = vunpack.c.l.b16 %v3960
    %v4156 = vunpack.c.h.b16 %v3960
    %v4157 = vunpack.c.l.b16 %v3961
    %v4158 = vunpack.c.h.b16 %v3961
    %v4159 = vunpack.c.l.b16 %v3962
    %v4160 = vunpack.c.h.b16 %v3962
    %v4161 = vunpack.c.l.b16 %v3963
    %v4162 = vunpack.c.h.b16 %v3963
    %v4163 = vunpack.c.l.b16 %v3964
    %v4164 = vunpack.c.h.b16 %v3964
    %v4165 = vunpack.c.l.b16 %v3965
    %v4166 = vunpack.c.h.b16 %v3965
    %v4167 = vunpack.c.l.b16 %v3966
    %v4168 = vunpack.c.h.b16 %v3966
    %v4169 = vunpack.c.l.b16 %v3967
    %v4170 = vunpack.c.h.b16 %v3967
    %v4171 = vunpack.c.l.b16 %v3968
    %v4172 = vunpack.c.h.b16 %v3968
    %v4173 = vpack.c.b16 %v4047, %v4045
    %v4174 = vpack.c.b16 %v4048, %v4046
    %v4175 = vpack.c.b16 %v4051, %v4049
    %v4176 = vpack.c.b16 %v4052, %v4050
    %v4177 = vpack.c.b16 %v4055, %v4053
    %v4178 = vpack.c.b16 %v4056, %v4054
    %v4179 = vpack.c.b16 %v4059, %v4057
    %v4180 = vpack.c.b16 %v4060, %v4058
    %v4181 = vpack.c.b16 %v4063, %v4061
    %v4182 = vpack.c.b16 %v4064, %v4062
    %v4183 = vpack.c.b16 %v4067, %v4065
    %v4184 = vpack.c.b16 %v4068, %v4066
    %v4185 = vpack.c.b16 %v4071, %v4069
    %v4186 = vpack.c.b16 %v4072, %v4070
    %v4187 = vpack.c.b16 %v4075, %v4073
    %v4188 = vpack.c.b16 %v4076, %v4074
    %v4189 = vpack.c.b16 %v4079, %v4077
    %v4190 = vpack.c.b16 %v4080, %v4078
    %v4191 = vpack.c.b16 %v4083, %v4081
    %v4192 = vpack.c.b16 %v4084, %v4082
    %v4193 = vpack.c.b16 %v4087, %v4085
    %v4194 = vpack.c.b16 %v4088, %v4086
    %v4195 = vpack.c.b16 %v4091, %v4089
    %v4196 = vpack.c.b16 %v4092, %v4090
    %v4197 = vpack.c.b16 %v4095, %v4093
    %v4198 = vpack.c.b16 %v4096, %v4094
    %v4199 = vpack.c.b16 %v4099, %v4097
    %v4200 = vpack.c.b16 %v4100, %v4098
    %v4201 = vpack.c.b16 %v4103, %v4101
    %v4202 = vpack.c.b16 %v4104, %v4102
    %v4203 = vpack.c.b16 %v4107, %v4105
    %v4204 = vpack.c.b16 %v4108, %v4106
    %v4205 = vpack.c.b16 %v4111, %v4109
    %v4206 = vpack.c.b16 %v4112, %v4110
    %v4207 = vpack.c.b16 %v4115, %v4113
    %v4208 = vpack.c.b16 %v4116, %v4114
    %v4209 = vpack.c.b16 %v4119, %v4117
    %v4210 = vpack.c.b16 %v4120, %v4118
    %v4211 = vpack.c.b16 %v4123, %v4121
    %v4212 = vpack.c.b16 %v4124, %v4122
    %v4213 = vpack.c.b16 %v4127, %v4125
    %v4214 = vpack.c.b16 %v4128, %v4126
    %v4215 = vpack.c.b16 %v4131, %v4129
    %v4216 = vpack.c.b16 %v4132, %v4130
    %v4217 = vpack.c.b16 %v4135, %v4133
    %v4218 = vpack.c.b16 %v4136, %v4134
    %v4219 = vpack.c.b16 %v4139, %v4137
    %v4220 = vpack.c.b16 %v4140, %v4138
    %v4221 = vpack.c.b16 %v4143, %v4141
    %v4222 = vpack.c.b16 %v4144, %v4142
    %v4223 = vpack.c.b16 %v4147, %v4145
    %v4224 = vpack.c.b16 %v4148, %v4146
    %v4225 = vpack.c.b16 %v4151, %v4149
    %v4226 = vpack.c.b16 %v4152, %v4150
    %v4227 = vpack.c.b16 %v4155, %v4153
    %v4228 = vpack.c.b16 %v4156, %v4154
    %v4229 = vpack.c.b16 %v4159, %v4157
    %v4230 = vpack.c.b16 %v4160, %v4158
    %v4231 = vpack.c.b16 %v4163, %v4161
    %v4232 = vpack.c.b16 %v4164, %v4162
    %v4233 = vpack.c.b16 %v4167, %v4165
    %v4234 = vpack.c.b16 %v4168, %v4166
    %v4235 = vpack.c.b16 %v4171, %v4169
    %v4236 = vpack.c.b16 %v4172, %v4170
    %4301 = vmatprep.subr.bf16.mxu0 %v4188
    %4302 = vmatpush1.bf16.msra.mxu0 %v4187
    %4303 = vmatprep.subr.bf16.mxu0 %v4186
    %4304 = vmatpush1.bf16.msra.mxu0 %v4185
    %4305 = vmatprep.subr.bf16.mxu0 %v4184
    %4306 = vmatpush1.bf16.msra.mxu0 %v4183
    %4307 = vmatprep.subr.bf16.mxu0 %v4182
    %4308 = vmatpush1.bf16.msra.mxu0 %v4181
    %4309 = vmatprep.subr.bf16.mxu0 %v4180
    %4310 = vmatpush1.bf16.msra.mxu0 %v4179
    %4311 = vmatprep.subr.bf16.mxu0 %v4178
    %4312 = vmatpush1.bf16.msra.mxu0 %v4177
    %4313 = vmatprep.subr.bf16.mxu0 %v4176
    %4314 = vmatpush1.bf16.msra.mxu0 %v4175
    %4315 = vmatprep.subr.bf16.mxu0 %v4174
    %4316 = vmatpush1.bf16.msra.mxu0 %v4173
    %4317 = vmatprep.subr.bf16.mxu0 %v4204
    %4318 = vmatpush2.bf16.msra.mxu0 %v4203
    %4319 = vmatprep.subr.bf16.mxu0 %v4202
    %4320 = vmatpush2.bf16.msra.mxu0 %v4201
    %4321 = vmatprep.subr.bf16.mxu0 %v4200
    %4322 = vmatpush2.bf16.msra.mxu0 %v4199
    %4323 = vmatprep.subr.bf16.mxu0 %v4198
    %4324 = vmatpush2.bf16.msra.mxu0 %v4197
    %4325 = vmatprep.subr.bf16.mxu0 %v4196
    %4326 = vmatpush2.bf16.msra.mxu0 %v4195
    %4327 = vmatprep.subr.bf16.mxu0 %v4194
    %4328 = vmatpush2.bf16.msra.mxu0 %v4193
    %4329 = vmatprep.subr.bf16.mxu0 %v4192
    %4330 = vmatpush2.bf16.msra.mxu0 %v4191
    %4331 = vmatprep.subr.bf16.mxu0 %v4190
    %4332 = vmatpush2.bf16.msra.mxu0 %v4189
    %4333 = vmatprep.mubr.bf16.mxu0 %v3902
    %4334 = vmatmul.mubr.bf16.gmra.mxu0 %v3901
    %v4335 = vpop.f32.mrf.mxu0
    %v4336 = vadd.f32 %v3974, %v4335
    %v4337 = vpop.f32.mrf.mxu0
    %v4338 = vadd.f32 %v3978, %v4337
    %v4339 = vpop.f32.mrf.mxu0
    %v4340 = vpop.f32.mrf.mxu0
    %4341 = vdwg.mxu0
    %4342 = vmatprep.subr.bf16.mxu0 %v4220
    %4343 = vmatpush1.bf16.msra.mxu0 %v4219
    %4344 = vmatprep.subr.bf16.mxu0 %v4218
    %4345 = vmatpush1.bf16.msra.mxu0 %v4217
    %4346 = vmatprep.subr.bf16.mxu0 %v4216
    %4347 = vmatpush1.bf16.msra.mxu0 %v4215
    %4348 = vmatprep.subr.bf16.mxu0 %v4214
    %4349 = vmatpush1.bf16.msra.mxu0 %v4213
    %4350 = vmatprep.subr.bf16.mxu0 %v4212
    %4351 = vmatpush1.bf16.msra.mxu0 %v4211
    %4352 = vmatprep.subr.bf16.mxu0 %v4210
    %4353 = vmatpush1.bf16.msra.mxu0 %v4209
    %4354 = vmatprep.subr.bf16.mxu0 %v4208
    %4355 = vmatpush1.bf16.msra.mxu0 %v4207
    %4356 = vmatprep.subr.bf16.mxu0 %v4206
    %4357 = vmatpush1.bf16.msra.mxu0 %v4205
    %4358 = vmatprep.subr.bf16.mxu0 %v4236
    %4359 = vmatpush2.bf16.msra.mxu0 %v4235
    %4360 = vmatprep.subr.bf16.mxu0 %v4234
    %4361 = vmatpush2.bf16.msra.mxu0 %v4233
    %4362 = vmatprep.subr.bf16.mxu0 %v4232
    %4363 = vmatpush2.bf16.msra.mxu0 %v4231
    %4364 = vmatprep.subr.bf16.mxu0 %v4230
    %4365 = vmatpush2.bf16.msra.mxu0 %v4229
    %4366 = vmatprep.subr.bf16.mxu0 %v4228
    %4367 = vmatpush2.bf16.msra.mxu0 %v4227
    %4368 = vmatprep.subr.bf16.mxu0 %v4226
    %4369 = vmatpush2.bf16.msra.mxu0 %v4225
    %4370 = vmatprep.subr.bf16.mxu0 %v4224
    %4371 = vmatpush2.bf16.msra.mxu0 %v4223
    %4372 = vmatprep.subr.bf16.mxu0 %v4222
    %4373 = vmatpush2.bf16.msra.mxu0 %v4221
    %4374 = vmatprep.mubr.bf16.mxu0 %v3904
    %4375 = vmatmul.mubr.bf16.gmra.mxu0 %v3903
    %v4376 = vpop.f32.mrf.mxu0
    %v4377 = vadd.f32 %v4336, %v4376
    %v4378 = vpop.f32.mrf.mxu0
    %v4379 = vadd.f32 %v4338, %v4378
    %v4380 = vpop.f32.mrf.mxu0
    %v4381 = vpop.f32.mrf.mxu0
    %4382 = vdwg.mxu0
    %4383 = vst [vmem:[#allocation11] sm:$0xff] %v4377
    %4384 = vst [vmem:[#allocation11 + $0x8] sm:$0xff] %v4379
    // Predicated region
    $region42: #{tpu_custom_call.1} parent=1 // pred_check
      _
    $region43: #{tpu_custom_call.1} parent=1 // pred_check_branch
      %4386 = sbr.rel (0) target = $region45
    $region44: #{tpu_custom_call.1} parent=1 // pred_region
      %s4388 = ssub.s32 256, 256
      %4389 = vsyncadd [#allocation4], %s4388
      %s4391 = sshll.u32 [#allocation11], 4
      %s4392 = int_to_ptr.vmem [resolvable:$true] %s4391
      %4394 = dma.vmem_to_hbm [thread:$0]  %s4392, 256, %s5, [#allocation4]
    $region45: #{tpu_custom_call.1} parent=1 // pred_fallthru
      _
    // Predicated region
    $region46: #{tpu_custom_call.1} parent=1 // pred_check
      _
    $region47: #{tpu_custom_call.1} parent=1 // pred_check_branch
      %4396 = sbr.rel (0) target = $region49
    $region48: #{tpu_custom_call.1} parent=1 // pred_region
      %4397 = dma.done [#allocation4], 256
    $region49: #{tpu_custom_call.1} parent=1 // pred_fallthru
      _
    %4398 = vsyncpa [#allocation3], 1
    %4399 = vsyncpa [#allocation6], 1
    %4400 = vsyncpa [#allocation9], 1
    %4401 = vsyncpa [#allocation4], 1

</llo_original>
